<compile_context>
chip_gen: v6e
topology: v6e:2x2x1
jax: 0.10.0
libtpu: 0.0.40
codegen_flags: <defaults>
</compile_context>

<pallas_src>
import functools

import jax
import jax.numpy as jnp
from jax.experimental import pallas as pl
from jax.experimental.pallas import tpu as pltpu

BN_EPS = 1e-5
HEADS = ("hmap", "regs", "w_h_")
COUTS = (1, 2, 2)          # output channels of the three heads
CROP = 7                   # center_crop_size of the template branch


# ----------------------------------------------------------------------------
# Fused Pallas kernel (one grid step == one batch element, all three heads)
# ----------------------------------------------------------------------------

def _afpn_fused_kernel(
    z_ref, x_ref,
    wa_k_ref, sa_k_ref, ba_k_ref, wd_k_ref, sd_k_ref, bd_k_ref,
    wa_s_ref, sa_s_ref, ba_s_ref, wd_s_ref, sd_s_ref, bd_s_ref,
    w1_ref, s1_ref, b1_ref, w2_ref, b2_ref,
    o0_ref, o1_ref, o2_ref,
    *, hidden, couts, wz, wx, crop, lz, nx,
):
    c_tot = hidden * len(couts)        # stacked channels (3 * hidden)
    kk = crop - 2                      # xcorr kernel spatial size (5)

    def mac(w, x):
        # (Co, Ci) @ (Ci, N) as an unrolled VPU multiply-accumulate.
        # Ci is 4..8 -> far too small for the MXU; keep it off the systolic array.
        acc = w[:, 0:1] * x[0:1, :]
        for c in range(1, w.shape[1]):
            acc = acc + w[:, c:c + 1] * x[c:c + 1, :]
        return acc

    def pad_lanes(x, n):
        # Append n zero lanes (n is a multiple of 128 -> lane-aligned concat)
        # so that every shifted tap slice below stays in bounds.
        return jnp.concatenate([x, jnp.zeros((x.shape[0], n), x.dtype)], axis=1)

    # ------------------ template ("kernel") branch --------------------------
    # 1x1 conv + BN + ReLU on the flattened wz*wz map (zero padded to lz lanes).
    z = z_ref[0]                                                    # (Cin, lz)
    ka = jnp.maximum(mac(wa_k_ref[...], z) * sa_k_ref[...] + ba_k_ref[...], 0.0)
    ka = pad_lanes(ka, lz)                                          # (C, 2*lz)
    # Center crop (offset l0) is folded into the depthwise-3x3 tap offsets.
    l0 = (wz - crop) // 2
    wd_k = wd_k_ref[...]
    kacc = jnp.zeros((c_tot, lz), jnp.float32)
    for di in range(3):
        for dj in range(3):
            s = (l0 + di) * wz + (l0 + dj)
            kacc = kacc + ka[:, s:s + lz] * wd_k[:, 3 * di + dj:3 * di + dj + 1]
    kf = jnp.maximum(kacc * sd_k_ref[...] + bd_k_ref[...], 0.0)     # (C, lz)
    # Valid template taps live at lane index di*wz + dj, di, dj < kk.

    # ------------------ search branch ----------------------------------------
    xs = pad_lanes(x_ref[0], 128)                                   # (Cin, nx+128)
    sa = jnp.maximum(mac(wa_s_ref[...], xs) * sa_s_ref[...] + ba_s_ref[...], 0.0)
    wd_s = wd_s_ref[...]
    sacc = jnp.zeros((c_tot, nx), jnp.float32)
    for di in range(3):
        for dj in range(3):
            s = di * wx + dj
            sacc = sacc + sa[:, s:s + nx] * wd_s[:, 3 * di + dj:3 * di + dj + 1]
    sf = jnp.maximum(sacc * sd_s_ref[...] + bd_s_ref[...], 0.0)
    sf = pad_lanes(sf, 128)                                         # (C, nx+128)

    # ------------------ depthwise cross-correlation --------------------------
    # Template tap values are (C, 1) columns of the VMEM-resident kf; each tap
    # is one column slice + lane broadcast + fused multiply-add on the VPU.
    feat = jnp.zeros((c_tot, nx), jnp.float32)
    for di in range(kk):
        for dj in range(kk):
            s = di * wx + dj
            kcol = kf[:, di * wz + dj:di * wz + dj + 1]             # (C, 1)
            feat = feat + sf[:, s:s + nx] * kcol

    # ------------------ heads (1x1 + BN + ReLU -> 1x1 + bias) ----------------
    o_refs = (o0_ref, o1_ref, o2_ref)
    w1 = w1_ref[...]
    s1 = s1_ref[...]
    b1 = b1_ref[...]
    for h, cout in enumerate(couts):
        lo, hi = h * hidden, (h + 1) * hidden
        hh = mac(w1[lo:hi, :], feat[lo:hi, :])
        hh = jnp.maximum(hh * s1[lo:hi, :] + b1[lo:hi, :], 0.0)     # (hidden, nx)
        out = mac(w2_ref[h], hh) + b2_ref[h]                        # (cmax, nx)
        o_refs[h][0] = out[:cout]                                   # lane-dense store


# ----------------------------------------------------------------------------
# Host-side wrapper
# ----------------------------------------------------------------------------

_PARAM_ORDER = ("wa_k", "sa_k", "ba_k", "wd_k", "sd_k", "bd_k",
                "wa_s", "sa_s", "ba_s", "wd_s", "sd_s", "bd_s",
                "w1", "s1", "b1", "w2", "b2")


@jax.jit
def depthwise_afpn_forward(z_f, x_f, packed):
    """z_f: (B, Cin, Hz, Wz) template, x_f: (B, Cin, Hx, Wx) search (NCHW).

    Returns (hmap, regs, w_h_) in NCHW, shapes (B, 1|2|2, Ho, Ho)."""
    B, cin, hz, wz = z_f.shape
    _, _, hx, wx = x_f.shape
    assert hz == wz and hx == wx, "AFPN assumes square feature maps"
    assert (hx * wx) % 128 == 0, "search map must flatten to whole lanes"
    hidden = packed["w1"].shape[1]
    nz, nx = hz * wz, hx * wx
    lz = pl.cdiv(nz, 128) * 128
    ho = hx - CROP + 1                       # xcorr output spatial size (10)

    # NCHW -> (B, C, H*W): a reshape, not a transpose (channels land on
    # sublanes, flattened spatial on lanes). The tiny template map is zero
    # extended to a whole number of lanes (a few KB, done once).
    z2 = z_f.reshape(B, cin, nz)
    if lz != nz:
        z2 = jnp.pad(z2, ((0, 0), (0, 0), (0, lz - nz)))
    x2 = x_f.reshape(B, cin, nx)

    plist = [packed[k] for k in _PARAM_ORDER]
    kernel = functools.partial(
        _afpn_fused_kernel, hidden=hidden, couts=COUTS,
        wz=wz, wx=wx, crop=CROP, lz=lz, nx=nx)

    def batch_spec(shape):
        return pl.BlockSpec(shape, lambda b: (b, 0, 0))

    outs = pl.pallas_call(
        kernel,
        out_shape=tuple(jax.ShapeDtypeStruct((B, c, nx), jnp.float32)
                        for c in COUTS),
        grid=(B,),
        in_specs=[batch_spec((1, cin, lz)), batch_spec((1, cin, nx))]
        + [pl.BlockSpec(p.shape, lambda b, nd=p.ndim: (0,) * nd) for p in plist],
        out_specs=tuple(batch_spec((1, c, nx)) for c in COUTS),
        compiler_params=pltpu.CompilerParams(dimension_semantics=("parallel",)),
    )(z2, x2, *plist)

    # Valid xcorr outputs live at flattened lanes i*wx + j with i, j < ho.
    return tuple(o.reshape(B, c, hx, wx)[:, :, :ho, :ho]
                 for o, c in zip(outs, COUTS))


# ----------------------------------------------------------------------------
# Deterministic parameter initialization (eval-mode BN folded to scale/bias)
# ----------------------------------------------------------------------------

def _fold_bn(gamma, beta, mean, var):
    scale = gamma / jnp.sqrt(var + BN_EPS)
    return scale, beta - mean * scale


def _init_bn(key, c):
    k1, k2, k3, k4 = jax.random.split(key, 4)
    gamma = 1.0 + 0.1 * jax.random.normal(k1, (c,), jnp.float32)
    beta = 0.05 * jax.random.normal(k2, (c,), jnp.float32)
    mean = 0.05 * jax.random.normal(k3, (c,), jnp.float32)
    var = 1.0 + 0.1 * jax.random.uniform(k4, (c,), jnp.float32)
    return _fold_bn(gamma, beta, mean, var)


def _init_adapt(key, cin, hidden):
    k1, k2, k3, k4 = jax.random.split(key, 4)
    s1, b1 = _init_bn(k2, hidden)
    s2, b2 = _init_bn(k4, hidden)
    return dict(
        adapt_w=0.1 * jax.random.normal(k1, (hidden, cin), jnp.float32),
        adapt_s=s1, adapt_b=b1,
        dw_w=0.1 * jax.random.normal(k3, (hidden, 3, 3), jnp.float32),
        dw_s=s2, dw_b=b2,
    )


def _init_head(key, hidden, cout):
    k1, k2, k3, k4 = jax.random.split(key, 4)
    s1, b1 = _init_bn(k2, hidden)
    return dict(
        w1=0.1 * jax.random.normal(k1, (hidden, hidden), jnp.float32),
        s1=s1, b1=b1,
        w2=0.1 * jax.random.normal(k3, (cout, hidden), jnp.float32),
        b2=0.05 * jax.random.normal(k4, (cout,), jnp.float32),
    )


def init_afpn_params(key, cin, hidden):
    params = {}
    for name, cout in zip(HEADS, COUTS):
        key, kk, ks, kh = jax.random.split(key, 4)
        params[name] = dict(kernel=_init_adapt(kk, cin, hidden),
                            search=_init_adapt(ks, cin, hidden),
                            head=_init_head(kh, hidden, cout))
    return params


def pack_params(params, hidden):
    """Stack the per-head parameters for the fused 3-head kernel."""
    col = lambda x: x.reshape(-1, 1)

    def cat(get):
        return jnp.concatenate([get(params[h]) for h in HEADS], axis=0)

    cmax = max(COUTS)
    w2p, b2p = [], []
    for name, cout in zip(HEADS, COUTS):
        hp = params[name]["head"]
        w2p.append(jnp.pad(hp["w2"], ((0, cmax - cout), (0, 0))))
        b2p.append(jnp.pad(hp["b2"].reshape(-1, 1), ((0, cmax - cout), (0, 0))))

    return dict(
        wa_k=cat(lambda p: p["kernel"]["adapt_w"]),
        sa_k=col(cat(lambda p: p["kernel"]["adapt_s"])),
        ba_k=col(cat(lambda p: p["kernel"]["adapt_b"])),
        wd_k=cat(lambda p: p["kernel"]["dw_w"].reshape(hidden, 9)),
        sd_k=col(cat(lambda p: p["kernel"]["dw_s"])),
        bd_k=col(cat(lambda p: p["kernel"]["dw_b"])),
        wa_s=cat(lambda p: p["search"]["adapt_w"]),
        sa_s=col(cat(lambda p: p["search"]["adapt_s"])),
        ba_s=col(cat(lambda p: p["search"]["adapt_b"])),
        wd_s=cat(lambda p: p["search"]["dw_w"].reshape(hidden, 9)),
        sd_s=col(cat(lambda p: p["search"]["dw_s"])),
        bd_s=col(cat(lambda p: p["search"]["dw_b"])),
        w1=cat(lambda p: p["head"]["w1"]),
        s1=col(cat(lambda p: p["head"]["s1"])),
        b1=col(cat(lambda p: p["head"]["b1"])),
        w2=jnp.stack(w2p),            # (3, cmax, hidden), zero padded rows
        b2=jnp.stack(b2p),            # (3, cmax, 1)
    )


# ----------------------------------------------------------------------------
# Plain-JAX reference of the PyTorch module (for the numerical check)
# ----------------------------------------------------------------------------

def _ref_conv1x1(x, w):
    out = jnp.zeros((x.shape[0], w.shape[0], x.shape[2], x.shape[3]), jnp.float32)
    for c in range(w.shape[1]):
        out = out + x[:, c:c + 1] * w[None, :, c, None, None]
    return out


def _ref_affine_relu(x, s, b):
    return jnp.maximum(x * s[None, :, None, None] + b[None, :, None, None], 0.0)


def _ref_adapt(x, p, crop):
    y = _ref_affine_relu(_ref_conv1x1(x, p["adapt_w"]), p["adapt_s"], p["adapt_b"])
    if crop:
        l = (y.shape[3] - crop) // 2     # PyTorch uses size(3) for both dims
        y = y[:, :, l:l + crop, l:l + crop]
    h, w = y.shape[2] - 2, y.shape[3] - 2
    acc = jnp.zeros((y.shape[0], y.shape[1], h, w), jnp.float32)
    for di in range(3):
        for dj in range(3):
            acc = acc + y[:, :, di:di + h, dj:dj + w] * p["dw_w"][None, :, di, dj, None, None]
    return _ref_affine_relu(acc, p["dw_s"], p["dw_b"])


def _ref_xcorr(sf, kf):
    ho, wo = sf.shape[2] - kf.shape[2] + 1, sf.shape[3] - kf.shape[3] + 1
    acc = jnp.zeros(sf.shape[:2] + (ho, wo), jnp.float32)
    for di in range(kf.shape[2]):
        for dj in range(kf.shape[3]):
            acc = acc + sf[:, :, di:di + ho, dj:dj + wo] * kf[:, :, di:di + 1, dj:dj + 1]
    return acc


def reference_forward(z_f, x_f, params):
    outs = []
    for name in HEADS:
        p = params[name]
        kf = _ref_adapt(z_f, p["kernel"], crop=CROP)
        sf = _ref_adapt(x_f, p["search"], crop=0)
        feat = _ref_xcorr(sf, kf)
        h = _ref_affine_relu(_ref_conv1x1(feat, p["head"]["w1"]),
                             p["head"]["s1"], p["head"]["b1"])
        outs.append(_ref_conv1x1(h, p["head"]["w2"])
                    + p["head"]["b2"][None, :, None, None])
    return tuple(outs)


# ----------------------------------------------------------------------------

if __name__ == "__main__":
    B, Cin, hidden = 2, 4, 8
    key = jax.random.PRNGKey(0)
    kz, kx, kp = jax.random.split(key, 3)
    z_f = jax.random.normal(kz, (B, Cin, 11, 11), jnp.float32)   # template feature
    x_f = jax.random.normal(kx, (B, Cin, 16, 16), jnp.float32)   # search feature
    params = init_afpn_params(kp, Cin, hidden)
    packed = pack_params(params, hidden)

    hmap, regs, w_h_ = depthwise_afpn_forward(z_f, x_f, packed)
    jax.block_until_ready((hmap, regs, w_h_))

    # template: 11 -> (1x1) 11 -> crop 7 -> (dw3x3) 5 ; search: 16 -> 16 -> 14
    # xcorr: 14 - 5 + 1 = 10
    assert hmap.shape == (B, 1, 10, 10), hmap.shape
    assert regs.shape == (B, 2, 10, 10), regs.shape
    assert w_h_.shape == (B, 2, 10, 10), w_h_.shape

    # Numerical check against a plain-JAX reference of the PyTorch module.
    ref = reference_forward(z_f, x_f, params)
    for got, want in zip((hmap, regs, w_h_), ref):
        err = float(jnp.max(jnp.abs(got - want)))
        assert jnp.allclose(got, want, atol=1e-4, rtol=1e-4), err

    print("KERNEL_OK")
</pallas_src>

<mosaic_0001>
module attributes {stable_mosaic.version = 11 : i64} {
  func.func @_afpn_fused_kernel(%arg0: i32, %arg1: memref<1x4x128xf32, #tpu.memory_space<vmem>>, %arg2: memref<1x4x256xf32, #tpu.memory_space<vmem>>, %arg3: memref<24x4xf32, #tpu.memory_space<vmem>>, %arg4: memref<24x1xf32, #tpu.memory_space<vmem>>, %arg5: memref<24x1xf32, #tpu.memory_space<vmem>>, %arg6: memref<24x9xf32, #tpu.memory_space<vmem>>, %arg7: memref<24x1xf32, #tpu.memory_space<vmem>>, %arg8: memref<24x1xf32, #tpu.memory_space<vmem>>, %arg9: memref<24x4xf32, #tpu.memory_space<vmem>>, %arg10: memref<24x1xf32, #tpu.memory_space<vmem>>, %arg11: memref<24x1xf32, #tpu.memory_space<vmem>>, %arg12: memref<24x9xf32, #tpu.memory_space<vmem>>, %arg13: memref<24x1xf32, #tpu.memory_space<vmem>>, %arg14: memref<24x1xf32, #tpu.memory_space<vmem>>, %arg15: memref<24x8xf32, #tpu.memory_space<vmem>>, %arg16: memref<24x1xf32, #tpu.memory_space<vmem>>, %arg17: memref<24x1xf32, #tpu.memory_space<vmem>>, %arg18: memref<3x2x8xf32, #tpu.memory_space<vmem>>, %arg19: memref<3x2x1xf32, #tpu.memory_space<vmem>>, %arg20: memref<1x1x256xf32, #tpu.memory_space<vmem>>, %arg21: memref<1x2x256xf32, #tpu.memory_space<vmem>>, %arg22: memref<1x2x256xf32, #tpu.memory_space<vmem>>) attributes {dimension_semantics = [#tpu.dimension_semantics<parallel>], iteration_bounds = array<i64: 2>, scalar_prefetch = 0 : i64, scratch_operands = 0 : i64, tpu.core_type = #tpu.core_type<tc>, window_params = [{transform_indices = @transform_0, window_bounds = array<i64: 1, 4, 128>}, {transform_indices = @transform_1, window_bounds = array<i64: 1, 4, 256>}, {pipeline_mode = #tpu.pipeline_mode<synchronous>, transform_indices = @transform_2, window_bounds = array<i64: 24, 4>}, {pipeline_mode = #tpu.pipeline_mode<synchronous>, transform_indices = @transform_3, window_bounds = array<i64: 24, 1>}, {pipeline_mode = #tpu.pipeline_mode<synchronous>, transform_indices = @transform_4, window_bounds = array<i64: 24, 1>}, {pipeline_mode = #tpu.pipeline_mode<synchronous>, transform_indices = @transform_5, window_bounds = array<i64: 24, 9>}, {pipeline_mode = #tpu.pipeline_mode<synchronous>, transform_indices = @transform_6, window_bounds = array<i64: 24, 1>}, {pipeline_mode = #tpu.pipeline_mode<synchronous>, transform_indices = @transform_7, window_bounds = array<i64: 24, 1>}, {pipeline_mode = #tpu.pipeline_mode<synchronous>, transform_indices = @transform_8, window_bounds = array<i64: 24, 4>}, {pipeline_mode = #tpu.pipeline_mode<synchronous>, transform_indices = @transform_9, window_bounds = array<i64: 24, 1>}, {pipeline_mode = #tpu.pipeline_mode<synchronous>, transform_indices = @transform_10, window_bounds = array<i64: 24, 1>}, {pipeline_mode = #tpu.pipeline_mode<synchronous>, transform_indices = @transform_11, window_bounds = array<i64: 24, 9>}, {pipeline_mode = #tpu.pipeline_mode<synchronous>, transform_indices = @transform_12, window_bounds = array<i64: 24, 1>}, {pipeline_mode = #tpu.pipeline_mode<synchronous>, transform_indices = @transform_13, window_bounds = array<i64: 24, 1>}, {pipeline_mode = #tpu.pipeline_mode<synchronous>, transform_indices = @transform_14, window_bounds = array<i64: 24, 8>}, {pipeline_mode = #tpu.pipeline_mode<synchronous>, transform_indices = @transform_15, window_bounds = array<i64: 24, 1>}, {pipeline_mode = #tpu.pipeline_mode<synchronous>, transform_indices = @transform_16, window_bounds = array<i64: 24, 1>}, {pipeline_mode = #tpu.pipeline_mode<synchronous>, transform_indices = @transform_17, window_bounds = array<i64: 3, 2, 8>}, {pipeline_mode = #tpu.pipeline_mode<synchronous>, transform_indices = @transform_18, window_bounds = array<i64: 3, 2, 1>}, {transform_indices = @transform_19, window_bounds = array<i64: 1, 1, 256>}, {transform_indices = @transform_20, window_bounds = array<i64: 1, 2, 256>}, {transform_indices = @transform_21, window_bounds = array<i64: 1, 2, 256>}]} {
    %c0 = arith.constant 0 : index
    %c0_0 = arith.constant 0 : index
    %c0_1 = arith.constant 0 : index
    %0 = vector.load %arg1[%c0, %c0_0, %c0_1] : memref<1x4x128xf32, #tpu.memory_space<vmem>>, vector<1x4x128xf32>
    %1 = vector.shape_cast %0 : vector<1x4x128xf32> to vector<4x128xf32>
    %c0_2 = arith.constant 0 : index
    %c0_3 = arith.constant 0 : index
    %2 = vector.load %arg3[%c0_2, %c0_3] : memref<24x4xf32, #tpu.memory_space<vmem>>, vector<24x4xf32>
    %3 = vector.extract_strided_slice %2 {offsets = [0, 0], sizes = [24, 1], strides = [1, 1]} : vector<24x4xf32> to vector<24x1xf32>
    %4 = vector.extract_strided_slice %1 {offsets = [0, 0], sizes = [1, 128], strides = [1, 1]} : vector<4x128xf32> to vector<1x128xf32>
    %5 = vector.broadcast %3 : vector<24x1xf32> to vector<24x128xf32>
    %6 = vector.broadcast %4 : vector<1x128xf32> to vector<24x128xf32>
    %7 = arith.mulf %5, %6 : vector<24x128xf32>
    %8 = vector.extract_strided_slice %2 {offsets = [0, 1], sizes = [24, 1], strides = [1, 1]} : vector<24x4xf32> to vector<24x1xf32>
    %9 = vector.extract_strided_slice %1 {offsets = [1, 0], sizes = [1, 128], strides = [1, 1]} : vector<4x128xf32> to vector<1x128xf32>
    %10 = vector.broadcast %8 : vector<24x1xf32> to vector<24x128xf32>
    %11 = vector.broadcast %9 : vector<1x128xf32> to vector<24x128xf32>
    %12 = arith.mulf %10, %11 : vector<24x128xf32>
    %13 = arith.addf %7, %12 : vector<24x128xf32>
    %14 = vector.extract_strided_slice %2 {offsets = [0, 2], sizes = [24, 1], strides = [1, 1]} : vector<24x4xf32> to vector<24x1xf32>
    %15 = vector.extract_strided_slice %1 {offsets = [2, 0], sizes = [1, 128], strides = [1, 1]} : vector<4x128xf32> to vector<1x128xf32>
    %16 = vector.broadcast %14 : vector<24x1xf32> to vector<24x128xf32>
    %17 = vector.broadcast %15 : vector<1x128xf32> to vector<24x128xf32>
    %18 = arith.mulf %16, %17 : vector<24x128xf32>
    %19 = arith.addf %13, %18 : vector<24x128xf32>
    %20 = vector.extract_strided_slice %2 {offsets = [0, 3], sizes = [24, 1], strides = [1, 1]} : vector<24x4xf32> to vector<24x1xf32>
    %21 = vector.extract_strided_slice %1 {offsets = [3, 0], sizes = [1, 128], strides = [1, 1]} : vector<4x128xf32> to vector<1x128xf32>
    %22 = vector.broadcast %20 : vector<24x1xf32> to vector<24x128xf32>
    %23 = vector.broadcast %21 : vector<1x128xf32> to vector<24x128xf32>
    %24 = arith.mulf %22, %23 : vector<24x128xf32>
    %25 = arith.addf %19, %24 : vector<24x128xf32>
    %c0_4 = arith.constant 0 : index
    %c0_5 = arith.constant 0 : index
    %26 = vector.load %arg4[%c0_4, %c0_5] : memref<24x1xf32, #tpu.memory_space<vmem>>, vector<24x1xf32>
    %27 = vector.broadcast %26 : vector<24x1xf32> to vector<24x128xf32>
    %28 = arith.mulf %25, %27 : vector<24x128xf32>
    %c0_6 = arith.constant 0 : index
    %c0_7 = arith.constant 0 : index
    %29 = vector.load %arg5[%c0_6, %c0_7] : memref<24x1xf32, #tpu.memory_space<vmem>>, vector<24x1xf32>
    %30 = vector.broadcast %29 : vector<24x1xf32> to vector<24x128xf32>
    %31 = arith.addf %28, %30 : vector<24x128xf32>
    %cst = arith.constant 0.000000e+00 : f32
    %32 = vector.broadcast %cst : f32 to vector<24x128xf32>
    %33 = arith.maximumf %31, %32 : vector<24x128xf32>
    %cst_8 = arith.constant 0.000000e+00 : f32
    %34 = vector.broadcast %cst_8 : f32 to vector<24x128xf32>
    %35 = tpu.concatenate %33, %34 in 1 : vector<24x128xf32>, vector<24x128xf32> -> vector<24x256xf32>
    %c0_9 = arith.constant 0 : index
    %c0_10 = arith.constant 0 : index
    %36 = vector.load %arg6[%c0_9, %c0_10] : memref<24x9xf32, #tpu.memory_space<vmem>>, vector<24x9xf32>
    %cst_11 = arith.constant 0.000000e+00 : f32
    %37 = vector.broadcast %cst_11 : f32 to vector<24x128xf32>
    %38 = vector.extract_strided_slice %35 {offsets = [0, 24], sizes = [24, 128], strides = [1, 1]} : vector<24x256xf32> to vector<24x128xf32>
    %39 = vector.extract_strided_slice %36 {offsets = [0, 0], sizes = [24, 1], strides = [1, 1]} : vector<24x9xf32> to vector<24x1xf32>
    %40 = vector.broadcast %39 : vector<24x1xf32> to vector<24x128xf32>
    %41 = arith.mulf %38, %40 : vector<24x128xf32>
    %42 = arith.addf %37, %41 : vector<24x128xf32>
    %43 = vector.extract_strided_slice %35 {offsets = [0, 25], sizes = [24, 128], strides = [1, 1]} : vector<24x256xf32> to vector<24x128xf32>
    %44 = vector.extract_strided_slice %36 {offsets = [0, 1], sizes = [24, 1], strides = [1, 1]} : vector<24x9xf32> to vector<24x1xf32>
    %45 = vector.broadcast %44 : vector<24x1xf32> to vector<24x128xf32>
    %46 = arith.mulf %43, %45 : vector<24x128xf32>
    %47 = arith.addf %42, %46 : vector<24x128xf32>
    %48 = vector.extract_strided_slice %35 {offsets = [0, 26], sizes = [24, 128], strides = [1, 1]} : vector<24x256xf32> to vector<24x128xf32>
    %49 = vector.extract_strided_slice %36 {offsets = [0, 2], sizes = [24, 1], strides = [1, 1]} : vector<24x9xf32> to vector<24x1xf32>
    %50 = vector.broadcast %49 : vector<24x1xf32> to vector<24x128xf32>
    %51 = arith.mulf %48, %50 : vector<24x128xf32>
    %52 = arith.addf %47, %51 : vector<24x128xf32>
    %53 = vector.extract_strided_slice %35 {offsets = [0, 35], sizes = [24, 128], strides = [1, 1]} : vector<24x256xf32> to vector<24x128xf32>
    %54 = vector.extract_strided_slice %36 {offsets = [0, 3], sizes = [24, 1], strides = [1, 1]} : vector<24x9xf32> to vector<24x1xf32>
    %55 = vector.broadcast %54 : vector<24x1xf32> to vector<24x128xf32>
    %56 = arith.mulf %53, %55 : vector<24x128xf32>
    %57 = arith.addf %52, %56 : vector<24x128xf32>
    %58 = vector.extract_strided_slice %35 {offsets = [0, 36], sizes = [24, 128], strides = [1, 1]} : vector<24x256xf32> to vector<24x128xf32>
    %59 = vector.extract_strided_slice %36 {offsets = [0, 4], sizes = [24, 1], strides = [1, 1]} : vector<24x9xf32> to vector<24x1xf32>
    %60 = vector.broadcast %59 : vector<24x1xf32> to vector<24x128xf32>
    %61 = arith.mulf %58, %60 : vector<24x128xf32>
    %62 = arith.addf %57, %61 : vector<24x128xf32>
    %63 = vector.extract_strided_slice %35 {offsets = [0, 37], sizes = [24, 128], strides = [1, 1]} : vector<24x256xf32> to vector<24x128xf32>
    %64 = vector.extract_strided_slice %36 {offsets = [0, 5], sizes = [24, 1], strides = [1, 1]} : vector<24x9xf32> to vector<24x1xf32>
    %65 = vector.broadcast %64 : vector<24x1xf32> to vector<24x128xf32>
    %66 = arith.mulf %63, %65 : vector<24x128xf32>
    %67 = arith.addf %62, %66 : vector<24x128xf32>
    %68 = vector.extract_strided_slice %35 {offsets = [0, 46], sizes = [24, 128], strides = [1, 1]} : vector<24x256xf32> to vector<24x128xf32>
    %69 = vector.extract_strided_slice %36 {offsets = [0, 6], sizes = [24, 1], strides = [1, 1]} : vector<24x9xf32> to vector<24x1xf32>
    %70 = vector.broadcast %69 : vector<24x1xf32> to vector<24x128xf32>
    %71 = arith.mulf %68, %70 : vector<24x128xf32>
    %72 = arith.addf %67, %71 : vector<24x128xf32>
    %73 = vector.extract_strided_slice %35 {offsets = [0, 47], sizes = [24, 128], strides = [1, 1]} : vector<24x256xf32> to vector<24x128xf32>
    %74 = vector.extract_strided_slice %36 {offsets = [0, 7], sizes = [24, 1], strides = [1, 1]} : vector<24x9xf32> to vector<24x1xf32>
    %75 = vector.broadcast %74 : vector<24x1xf32> to vector<24x128xf32>
    %76 = arith.mulf %73, %75 : vector<24x128xf32>
    %77 = arith.addf %72, %76 : vector<24x128xf32>
    %78 = vector.extract_strided_slice %35 {offsets = [0, 48], sizes = [24, 128], strides = [1, 1]} : vector<24x256xf32> to vector<24x128xf32>
    %79 = vector.extract_strided_slice %36 {offsets = [0, 8], sizes = [24, 1], strides = [1, 1]} : vector<24x9xf32> to vector<24x1xf32>
    %80 = vector.broadcast %79 : vector<24x1xf32> to vector<24x128xf32>
    %81 = arith.mulf %78, %80 : vector<24x128xf32>
    %82 = arith.addf %77, %81 : vector<24x128xf32>
    %c0_12 = arith.constant 0 : index
    %c0_13 = arith.constant 0 : index
    %83 = vector.load %arg7[%c0_12, %c0_13] : memref<24x1xf32, #tpu.memory_space<vmem>>, vector<24x1xf32>
    %84 = vector.broadcast %83 : vector<24x1xf32> to vector<24x128xf32>
    %85 = arith.mulf %82, %84 : vector<24x128xf32>
    %c0_14 = arith.constant 0 : index
    %c0_15 = arith.constant 0 : index
    %86 = vector.load %arg8[%c0_14, %c0_15] : memref<24x1xf32, #tpu.memory_space<vmem>>, vector<24x1xf32>
    %87 = vector.broadcast %86 : vector<24x1xf32> to vector<24x128xf32>
    %88 = arith.addf %85, %87 : vector<24x128xf32>
    %cst_16 = arith.constant 0.000000e+00 : f32
    %89 = vector.broadcast %cst_16 : f32 to vector<24x128xf32>
    %90 = arith.maximumf %88, %89 : vector<24x128xf32>
    %c0_17 = arith.constant 0 : index
    %c0_18 = arith.constant 0 : index
    %c0_19 = arith.constant 0 : index
    %91 = vector.load %arg2[%c0_17, %c0_18, %c0_19] : memref<1x4x256xf32, #tpu.memory_space<vmem>>, vector<1x4x256xf32>
    %92 = vector.shape_cast %91 : vector<1x4x256xf32> to vector<4x256xf32>
    %cst_20 = arith.constant 0.000000e+00 : f32
    %93 = vector.broadcast %cst_20 : f32 to vector<4x128xf32>
    %94 = tpu.concatenate %92, %93 in 1 : vector<4x256xf32>, vector<4x128xf32> -> vector<4x384xf32>
    %c0_21 = arith.constant 0 : index
    %c0_22 = arith.constant 0 : index
    %95 = vector.load %arg9[%c0_21, %c0_22] : memref<24x4xf32, #tpu.memory_space<vmem>>, vector<24x4xf32>
    %96 = vector.extract_strided_slice %95 {offsets = [0, 0], sizes = [24, 1], strides = [1, 1]} : vector<24x4xf32> to vector<24x1xf32>
    %97 = vector.extract_strided_slice %94 {offsets = [0, 0], sizes = [1, 384], strides = [1, 1]} : vector<4x384xf32> to vector<1x384xf32>
    %98 = vector.broadcast %96 : vector<24x1xf32> to vector<24x384xf32>
    %99 = vector.broadcast %97 : vector<1x384xf32> to vector<24x384xf32>
    %100 = arith.mulf %98, %99 : vector<24x384xf32>
    %101 = vector.extract_strided_slice %95 {offsets = [0, 1], sizes = [24, 1], strides = [1, 1]} : vector<24x4xf32> to vector<24x1xf32>
    %102 = vector.extract_strided_slice %94 {offsets = [1, 0], sizes = [1, 384], strides = [1, 1]} : vector<4x384xf32> to vector<1x384xf32>
    %103 = vector.broadcast %101 : vector<24x1xf32> to vector<24x384xf32>
    %104 = vector.broadcast %102 : vector<1x384xf32> to vector<24x384xf32>
    %105 = arith.mulf %103, %104 : vector<24x384xf32>
    %106 = arith.addf %100, %105 : vector<24x384xf32>
    %107 = vector.extract_strided_slice %95 {offsets = [0, 2], sizes = [24, 1], strides = [1, 1]} : vector<24x4xf32> to vector<24x1xf32>
    %108 = vector.extract_strided_slice %94 {offsets = [2, 0], sizes = [1, 384], strides = [1, 1]} : vector<4x384xf32> to vector<1x384xf32>
    %109 = vector.broadcast %107 : vector<24x1xf32> to vector<24x384xf32>
    %110 = vector.broadcast %108 : vector<1x384xf32> to vector<24x384xf32>
    %111 = arith.mulf %109, %110 : vector<24x384xf32>
    %112 = arith.addf %106, %111 : vector<24x384xf32>
    %113 = vector.extract_strided_slice %95 {offsets = [0, 3], sizes = [24, 1], strides = [1, 1]} : vector<24x4xf32> to vector<24x1xf32>
    %114 = vector.extract_strided_slice %94 {offsets = [3, 0], sizes = [1, 384], strides = [1, 1]} : vector<4x384xf32> to vector<1x384xf32>
    %115 = vector.broadcast %113 : vector<24x1xf32> to vector<24x384xf32>
    %116 = vector.broadcast %114 : vector<1x384xf32> to vector<24x384xf32>
    %117 = arith.mulf %115, %116 : vector<24x384xf32>
    %118 = arith.addf %112, %117 : vector<24x384xf32>
    %c0_23 = arith.constant 0 : index
    %c0_24 = arith.constant 0 : index
    %119 = vector.load %arg10[%c0_23, %c0_24] : memref<24x1xf32, #tpu.memory_space<vmem>>, vector<24x1xf32>
    %120 = vector.broadcast %119 : vector<24x1xf32> to vector<24x384xf32>
    %121 = arith.mulf %118, %120 : vector<24x384xf32>
    %c0_25 = arith.constant 0 : index
    %c0_26 = arith.constant 0 : index
    %122 = vector.load %arg11[%c0_25, %c0_26] : memref<24x1xf32, #tpu.memory_space<vmem>>, vector<24x1xf32>
    %123 = vector.broadcast %122 : vector<24x1xf32> to vector<24x384xf32>
    %124 = arith.addf %121, %123 : vector<24x384xf32>
    %cst_27 = arith.constant 0.000000e+00 : f32
    %125 = vector.broadcast %cst_27 : f32 to vector<24x384xf32>
    %126 = arith.maximumf %124, %125 : vector<24x384xf32>
    %c0_28 = arith.constant 0 : index
    %c0_29 = arith.constant 0 : index
    %127 = vector.load %arg12[%c0_28, %c0_29] : memref<24x9xf32, #tpu.memory_space<vmem>>, vector<24x9xf32>
    %cst_30 = arith.constant 0.000000e+00 : f32
    %128 = vector.broadcast %cst_30 : f32 to vector<24x256xf32>
    %129 = vector.extract_strided_slice %126 {offsets = [0, 0], sizes = [24, 256], strides = [1, 1]} : vector<24x384xf32> to vector<24x256xf32>
    %130 = vector.extract_strided_slice %127 {offsets = [0, 0], sizes = [24, 1], strides = [1, 1]} : vector<24x9xf32> to vector<24x1xf32>
    %131 = vector.broadcast %130 : vector<24x1xf32> to vector<24x256xf32>
    %132 = arith.mulf %129, %131 : vector<24x256xf32>
    %133 = arith.addf %128, %132 : vector<24x256xf32>
    %134 = vector.extract_strided_slice %126 {offsets = [0, 1], sizes = [24, 256], strides = [1, 1]} : vector<24x384xf32> to vector<24x256xf32>
    %135 = vector.extract_strided_slice %127 {offsets = [0, 1], sizes = [24, 1], strides = [1, 1]} : vector<24x9xf32> to vector<24x1xf32>
    %136 = vector.broadcast %135 : vector<24x1xf32> to vector<24x256xf32>
    %137 = arith.mulf %134, %136 : vector<24x256xf32>
    %138 = arith.addf %133, %137 : vector<24x256xf32>
    %139 = vector.extract_strided_slice %126 {offsets = [0, 2], sizes = [24, 256], strides = [1, 1]} : vector<24x384xf32> to vector<24x256xf32>
    %140 = vector.extract_strided_slice %127 {offsets = [0, 2], sizes = [24, 1], strides = [1, 1]} : vector<24x9xf32> to vector<24x1xf32>
    %141 = vector.broadcast %140 : vector<24x1xf32> to vector<24x256xf32>
    %142 = arith.mulf %139, %141 : vector<24x256xf32>
    %143 = arith.addf %138, %142 : vector<24x256xf32>
    %144 = vector.extract_strided_slice %126 {offsets = [0, 16], sizes = [24, 256], strides = [1, 1]} : vector<24x384xf32> to vector<24x256xf32>
    %145 = vector.extract_strided_slice %127 {offsets = [0, 3], sizes = [24, 1], strides = [1, 1]} : vector<24x9xf32> to vector<24x1xf32>
    %146 = vector.broadcast %145 : vector<24x1xf32> to vector<24x256xf32>
    %147 = arith.mulf %144, %146 : vector<24x256xf32>
    %148 = arith.addf %143, %147 : vector<24x256xf32>
    %149 = vector.extract_strided_slice %126 {offsets = [0, 17], sizes = [24, 256], strides = [1, 1]} : vector<24x384xf32> to vector<24x256xf32>
    %150 = vector.extract_strided_slice %127 {offsets = [0, 4], sizes = [24, 1], strides = [1, 1]} : vector<24x9xf32> to vector<24x1xf32>
    %151 = vector.broadcast %150 : vector<24x1xf32> to vector<24x256xf32>
    %152 = arith.mulf %149, %151 : vector<24x256xf32>
    %153 = arith.addf %148, %152 : vector<24x256xf32>
    %154 = vector.extract_strided_slice %126 {offsets = [0, 18], sizes = [24, 256], strides = [1, 1]} : vector<24x384xf32> to vector<24x256xf32>
    %155 = vector.extract_strided_slice %127 {offsets = [0, 5], sizes = [24, 1], strides = [1, 1]} : vector<24x9xf32> to vector<24x1xf32>
    %156 = vector.broadcast %155 : vector<24x1xf32> to vector<24x256xf32>
    %157 = arith.mulf %154, %156 : vector<24x256xf32>
    %158 = arith.addf %153, %157 : vector<24x256xf32>
    %159 = vector.extract_strided_slice %126 {offsets = [0, 32], sizes = [24, 256], strides = [1, 1]} : vector<24x384xf32> to vector<24x256xf32>
    %160 = vector.extract_strided_slice %127 {offsets = [0, 6], sizes = [24, 1], strides = [1, 1]} : vector<24x9xf32> to vector<24x1xf32>
    %161 = vector.broadcast %160 : vector<24x1xf32> to vector<24x256xf32>
    %162 = arith.mulf %159, %161 : vector<24x256xf32>
    %163 = arith.addf %158, %162 : vector<24x256xf32>
    %164 = vector.extract_strided_slice %126 {offsets = [0, 33], sizes = [24, 256], strides = [1, 1]} : vector<24x384xf32> to vector<24x256xf32>
    %165 = vector.extract_strided_slice %127 {offsets = [0, 7], sizes = [24, 1], strides = [1, 1]} : vector<24x9xf32> to vector<24x1xf32>
    %166 = vector.broadcast %165 : vector<24x1xf32> to vector<24x256xf32>
    %167 = arith.mulf %164, %166 : vector<24x256xf32>
    %168 = arith.addf %163, %167 : vector<24x256xf32>
    %169 = vector.extract_strided_slice %126 {offsets = [0, 34], sizes = [24, 256], strides = [1, 1]} : vector<24x384xf32> to vector<24x256xf32>
    %170 = vector.extract_strided_slice %127 {offsets = [0, 8], sizes = [24, 1], strides = [1, 1]} : vector<24x9xf32> to vector<24x1xf32>
    %171 = vector.broadcast %170 : vector<24x1xf32> to vector<24x256xf32>
    %172 = arith.mulf %169, %171 : vector<24x256xf32>
    %173 = arith.addf %168, %172 : vector<24x256xf32>
    %c0_31 = arith.constant 0 : index
    %c0_32 = arith.constant 0 : index
    %174 = vector.load %arg13[%c0_31, %c0_32] : memref<24x1xf32, #tpu.memory_space<vmem>>, vector<24x1xf32>
    %175 = vector.broadcast %174 : vector<24x1xf32> to vector<24x256xf32>
    %176 = arith.mulf %173, %175 : vector<24x256xf32>
    %c0_33 = arith.constant 0 : index
    %c0_34 = arith.constant 0 : index
    %177 = vector.load %arg14[%c0_33, %c0_34] : memref<24x1xf32, #tpu.memory_space<vmem>>, vector<24x1xf32>
    %178 = vector.broadcast %177 : vector<24x1xf32> to vector<24x256xf32>
    %179 = arith.addf %176, %178 : vector<24x256xf32>
    %cst_35 = arith.constant 0.000000e+00 : f32
    %180 = vector.broadcast %cst_35 : f32 to vector<24x256xf32>
    %181 = arith.maximumf %179, %180 : vector<24x256xf32>
    %cst_36 = arith.constant 0.000000e+00 : f32
    %182 = vector.broadcast %cst_36 : f32 to vector<24x128xf32>
    %183 = tpu.concatenate %181, %182 in 1 : vector<24x256xf32>, vector<24x128xf32> -> vector<24x384xf32>
    %cst_37 = arith.constant 0.000000e+00 : f32
    %184 = vector.broadcast %cst_37 : f32 to vector<24x256xf32>
    %185 = vector.extract_strided_slice %90 {offsets = [0, 0], sizes = [24, 1], strides = [1, 1]} : vector<24x128xf32> to vector<24x1xf32>
    %186 = vector.extract_strided_slice %183 {offsets = [0, 0], sizes = [24, 256], strides = [1, 1]} : vector<24x384xf32> to vector<24x256xf32>
    %187 = vector.broadcast %185 : vector<24x1xf32> to vector<24x256xf32>
    %188 = arith.mulf %186, %187 : vector<24x256xf32>
    %189 = arith.addf %184, %188 : vector<24x256xf32>
    %190 = vector.extract_strided_slice %90 {offsets = [0, 1], sizes = [24, 1], strides = [1, 1]} : vector<24x128xf32> to vector<24x1xf32>
    %191 = vector.extract_strided_slice %183 {offsets = [0, 1], sizes = [24, 256], strides = [1, 1]} : vector<24x384xf32> to vector<24x256xf32>
    %192 = vector.broadcast %190 : vector<24x1xf32> to vector<24x256xf32>
    %193 = arith.mulf %191, %192 : vector<24x256xf32>
    %194 = arith.addf %189, %193 : vector<24x256xf32>
    %195 = vector.extract_strided_slice %90 {offsets = [0, 2], sizes = [24, 1], strides = [1, 1]} : vector<24x128xf32> to vector<24x1xf32>
    %196 = vector.extract_strided_slice %183 {offsets = [0, 2], sizes = [24, 256], strides = [1, 1]} : vector<24x384xf32> to vector<24x256xf32>
    %197 = vector.broadcast %195 : vector<24x1xf32> to vector<24x256xf32>
    %198 = arith.mulf %196, %197 : vector<24x256xf32>
    %199 = arith.addf %194, %198 : vector<24x256xf32>
    %200 = vector.extract_strided_slice %90 {offsets = [0, 3], sizes = [24, 1], strides = [1, 1]} : vector<24x128xf32> to vector<24x1xf32>
    %201 = vector.extract_strided_slice %183 {offsets = [0, 3], sizes = [24, 256], strides = [1, 1]} : vector<24x384xf32> to vector<24x256xf32>
    %202 = vector.broadcast %200 : vector<24x1xf32> to vector<24x256xf32>
    %203 = arith.mulf %201, %202 : vector<24x256xf32>
    %204 = arith.addf %199, %203 : vector<24x256xf32>
    %205 = vector.extract_strided_slice %90 {offsets = [0, 4], sizes = [24, 1], strides = [1, 1]} : vector<24x128xf32> to vector<24x1xf32>
    %206 = vector.extract_strided_slice %183 {offsets = [0, 4], sizes = [24, 256], strides = [1, 1]} : vector<24x384xf32> to vector<24x256xf32>
    %207 = vector.broadcast %205 : vector<24x1xf32> to vector<24x256xf32>
    %208 = arith.mulf %206, %207 : vector<24x256xf32>
    %209 = arith.addf %204, %208 : vector<24x256xf32>
    %210 = vector.extract_strided_slice %90 {offsets = [0, 11], sizes = [24, 1], strides = [1, 1]} : vector<24x128xf32> to vector<24x1xf32>
    %211 = vector.extract_strided_slice %183 {offsets = [0, 16], sizes = [24, 256], strides = [1, 1]} : vector<24x384xf32> to vector<24x256xf32>
    %212 = vector.broadcast %210 : vector<24x1xf32> to vector<24x256xf32>
    %213 = arith.mulf %211, %212 : vector<24x256xf32>
    %214 = arith.addf %209, %213 : vector<24x256xf32>
    %215 = vector.extract_strided_slice %90 {offsets = [0, 12], sizes = [24, 1], strides = [1, 1]} : vector<24x128xf32> to vector<24x1xf32>
    %216 = vector.extract_strided_slice %183 {offsets = [0, 17], sizes = [24, 256], strides = [1, 1]} : vector<24x384xf32> to vector<24x256xf32>
    %217 = vector.broadcast %215 : vector<24x1xf32> to vector<24x256xf32>
    %218 = arith.mulf %216, %217 : vector<24x256xf32>
    %219 = arith.addf %214, %218 : vector<24x256xf32>
    %220 = vector.extract_strided_slice %90 {offsets = [0, 13], sizes = [24, 1], strides = [1, 1]} : vector<24x128xf32> to vector<24x1xf32>
    %221 = vector.extract_strided_slice %183 {offsets = [0, 18], sizes = [24, 256], strides = [1, 1]} : vector<24x384xf32> to vector<24x256xf32>
    %222 = vector.broadcast %220 : vector<24x1xf32> to vector<24x256xf32>
    %223 = arith.mulf %221, %222 : vector<24x256xf32>
    %224 = arith.addf %219, %223 : vector<24x256xf32>
    %225 = vector.extract_strided_slice %90 {offsets = [0, 14], sizes = [24, 1], strides = [1, 1]} : vector<24x128xf32> to vector<24x1xf32>
    %226 = vector.extract_strided_slice %183 {offsets = [0, 19], sizes = [24, 256], strides = [1, 1]} : vector<24x384xf32> to vector<24x256xf32>
    %227 = vector.broadcast %225 : vector<24x1xf32> to vector<24x256xf32>
    %228 = arith.mulf %226, %227 : vector<24x256xf32>
    %229 = arith.addf %224, %228 : vector<24x256xf32>
    %230 = vector.extract_strided_slice %90 {offsets = [0, 15], sizes = [24, 1], strides = [1, 1]} : vector<24x128xf32> to vector<24x1xf32>
    %231 = vector.extract_strided_slice %183 {offsets = [0, 20], sizes = [24, 256], strides = [1, 1]} : vector<24x384xf32> to vector<24x256xf32>
    %232 = vector.broadcast %230 : vector<24x1xf32> to vector<24x256xf32>
    %233 = arith.mulf %231, %232 : vector<24x256xf32>
    %234 = arith.addf %229, %233 : vector<24x256xf32>
    %235 = vector.extract_strided_slice %90 {offsets = [0, 22], sizes = [24, 1], strides = [1, 1]} : vector<24x128xf32> to vector<24x1xf32>
    %236 = vector.extract_strided_slice %183 {offsets = [0, 32], sizes = [24, 256], strides = [1, 1]} : vector<24x384xf32> to vector<24x256xf32>
    %237 = vector.broadcast %235 : vector<24x1xf32> to vector<24x256xf32>
    %238 = arith.mulf %236, %237 : vector<24x256xf32>
    %239 = arith.addf %234, %238 : vector<24x256xf32>
    %240 = vector.extract_strided_slice %90 {offsets = [0, 23], sizes = [24, 1], strides = [1, 1]} : vector<24x128xf32> to vector<24x1xf32>
    %241 = vector.extract_strided_slice %183 {offsets = [0, 33], sizes = [24, 256], strides = [1, 1]} : vector<24x384xf32> to vector<24x256xf32>
    %242 = vector.broadcast %240 : vector<24x1xf32> to vector<24x256xf32>
    %243 = arith.mulf %241, %242 : vector<24x256xf32>
    %244 = arith.addf %239, %243 : vector<24x256xf32>
    %245 = vector.extract_strided_slice %90 {offsets = [0, 24], sizes = [24, 1], strides = [1, 1]} : vector<24x128xf32> to vector<24x1xf32>
    %246 = vector.extract_strided_slice %183 {offsets = [0, 34], sizes = [24, 256], strides = [1, 1]} : vector<24x384xf32> to vector<24x256xf32>
    %247 = vector.broadcast %245 : vector<24x1xf32> to vector<24x256xf32>
    %248 = arith.mulf %246, %247 : vector<24x256xf32>
    %249 = arith.addf %244, %248 : vector<24x256xf32>
    %250 = vector.extract_strided_slice %90 {offsets = [0, 25], sizes = [24, 1], strides = [1, 1]} : vector<24x128xf32> to vector<24x1xf32>
    %251 = vector.extract_strided_slice %183 {offsets = [0, 35], sizes = [24, 256], strides = [1, 1]} : vector<24x384xf32> to vector<24x256xf32>
    %252 = vector.broadcast %250 : vector<24x1xf32> to vector<24x256xf32>
    %253 = arith.mulf %251, %252 : vector<24x256xf32>
    %254 = arith.addf %249, %253 : vector<24x256xf32>
    %255 = vector.extract_strided_slice %90 {offsets = [0, 26], sizes = [24, 1], strides = [1, 1]} : vector<24x128xf32> to vector<24x1xf32>
    %256 = vector.extract_strided_slice %183 {offsets = [0, 36], sizes = [24, 256], strides = [1, 1]} : vector<24x384xf32> to vector<24x256xf32>
    %257 = vector.broadcast %255 : vector<24x1xf32> to vector<24x256xf32>
    %258 = arith.mulf %256, %257 : vector<24x256xf32>
    %259 = arith.addf %254, %258 : vector<24x256xf32>
    %260 = vector.extract_strided_slice %90 {offsets = [0, 33], sizes = [24, 1], strides = [1, 1]} : vector<24x128xf32> to vector<24x1xf32>
    %261 = vector.extract_strided_slice %183 {offsets = [0, 48], sizes = [24, 256], strides = [1, 1]} : vector<24x384xf32> to vector<24x256xf32>
    %262 = vector.broadcast %260 : vector<24x1xf32> to vector<24x256xf32>
    %263 = arith.mulf %261, %262 : vector<24x256xf32>
    %264 = arith.addf %259, %263 : vector<24x256xf32>
    %265 = vector.extract_strided_slice %90 {offsets = [0, 34], sizes = [24, 1], strides = [1, 1]} : vector<24x128xf32> to vector<24x1xf32>
    %266 = vector.extract_strided_slice %183 {offsets = [0, 49], sizes = [24, 256], strides = [1, 1]} : vector<24x384xf32> to vector<24x256xf32>
    %267 = vector.broadcast %265 : vector<24x1xf32> to vector<24x256xf32>
    %268 = arith.mulf %266, %267 : vector<24x256xf32>
    %269 = arith.addf %264, %268 : vector<24x256xf32>
    %270 = vector.extract_strided_slice %90 {offsets = [0, 35], sizes = [24, 1], strides = [1, 1]} : vector<24x128xf32> to vector<24x1xf32>
    %271 = vector.extract_strided_slice %183 {offsets = [0, 50], sizes = [24, 256], strides = [1, 1]} : vector<24x384xf32> to vector<24x256xf32>
    %272 = vector.broadcast %270 : vector<24x1xf32> to vector<24x256xf32>
    %273 = arith.mulf %271, %272 : vector<24x256xf32>
    %274 = arith.addf %269, %273 : vector<24x256xf32>
    %275 = vector.extract_strided_slice %90 {offsets = [0, 36], sizes = [24, 1], strides = [1, 1]} : vector<24x128xf32> to vector<24x1xf32>
    %276 = vector.extract_strided_slice %183 {offsets = [0, 51], sizes = [24, 256], strides = [1, 1]} : vector<24x384xf32> to vector<24x256xf32>
    %277 = vector.broadcast %275 : vector<24x1xf32> to vector<24x256xf32>
    %278 = arith.mulf %276, %277 : vector<24x256xf32>
    %279 = arith.addf %274, %278 : vector<24x256xf32>
    %280 = vector.extract_strided_slice %90 {offsets = [0, 37], sizes = [24, 1], strides = [1, 1]} : vector<24x128xf32> to vector<24x1xf32>
    %281 = vector.extract_strided_slice %183 {offsets = [0, 52], sizes = [24, 256], strides = [1, 1]} : vector<24x384xf32> to vector<24x256xf32>
    %282 = vector.broadcast %280 : vector<24x1xf32> to vector<24x256xf32>
    %283 = arith.mulf %281, %282 : vector<24x256xf32>
    %284 = arith.addf %279, %283 : vector<24x256xf32>
    %285 = vector.extract_strided_slice %90 {offsets = [0, 44], sizes = [24, 1], strides = [1, 1]} : vector<24x128xf32> to vector<24x1xf32>
    %286 = vector.extract_strided_slice %183 {offsets = [0, 64], sizes = [24, 256], strides = [1, 1]} : vector<24x384xf32> to vector<24x256xf32>
    %287 = vector.broadcast %285 : vector<24x1xf32> to vector<24x256xf32>
    %288 = arith.mulf %286, %287 : vector<24x256xf32>
    %289 = arith.addf %284, %288 : vector<24x256xf32>
    %290 = vector.extract_strided_slice %90 {offsets = [0, 45], sizes = [24, 1], strides = [1, 1]} : vector<24x128xf32> to vector<24x1xf32>
    %291 = vector.extract_strided_slice %183 {offsets = [0, 65], sizes = [24, 256], strides = [1, 1]} : vector<24x384xf32> to vector<24x256xf32>
    %292 = vector.broadcast %290 : vector<24x1xf32> to vector<24x256xf32>
    %293 = arith.mulf %291, %292 : vector<24x256xf32>
    %294 = arith.addf %289, %293 : vector<24x256xf32>
    %295 = vector.extract_strided_slice %90 {offsets = [0, 46], sizes = [24, 1], strides = [1, 1]} : vector<24x128xf32> to vector<24x1xf32>
    %296 = vector.extract_strided_slice %183 {offsets = [0, 66], sizes = [24, 256], strides = [1, 1]} : vector<24x384xf32> to vector<24x256xf32>
    %297 = vector.broadcast %295 : vector<24x1xf32> to vector<24x256xf32>
    %298 = arith.mulf %296, %297 : vector<24x256xf32>
    %299 = arith.addf %294, %298 : vector<24x256xf32>
    %300 = vector.extract_strided_slice %90 {offsets = [0, 47], sizes = [24, 1], strides = [1, 1]} : vector<24x128xf32> to vector<24x1xf32>
    %301 = vector.extract_strided_slice %183 {offsets = [0, 67], sizes = [24, 256], strides = [1, 1]} : vector<24x384xf32> to vector<24x256xf32>
    %302 = vector.broadcast %300 : vector<24x1xf32> to vector<24x256xf32>
    %303 = arith.mulf %301, %302 : vector<24x256xf32>
    %304 = arith.addf %299, %303 : vector<24x256xf32>
    %305 = vector.extract_strided_slice %90 {offsets = [0, 48], sizes = [24, 1], strides = [1, 1]} : vector<24x128xf32> to vector<24x1xf32>
    %306 = vector.extract_strided_slice %183 {offsets = [0, 68], sizes = [24, 256], strides = [1, 1]} : vector<24x384xf32> to vector<24x256xf32>
    %307 = vector.broadcast %305 : vector<24x1xf32> to vector<24x256xf32>
    %308 = arith.mulf %306, %307 : vector<24x256xf32>
    %309 = arith.addf %304, %308 : vector<24x256xf32>
    %c0_38 = arith.constant 0 : index
    %c0_39 = arith.constant 0 : index
    %310 = vector.load %arg15[%c0_38, %c0_39] : memref<24x8xf32, #tpu.memory_space<vmem>>, vector<24x8xf32>
    %c0_40 = arith.constant 0 : index
    %c0_41 = arith.constant 0 : index
    %311 = vector.load %arg16[%c0_40, %c0_41] : memref<24x1xf32, #tpu.memory_space<vmem>>, vector<24x1xf32>
    %c0_42 = arith.constant 0 : index
    %c0_43 = arith.constant 0 : index
    %312 = vector.load %arg17[%c0_42, %c0_43] : memref<24x1xf32, #tpu.memory_space<vmem>>, vector<24x1xf32>
    %313 = vector.extract_strided_slice %310 {offsets = [0, 0], sizes = [8, 8], strides = [1, 1]} : vector<24x8xf32> to vector<8x8xf32>
    %314 = vector.extract_strided_slice %309 {offsets = [0, 0], sizes = [8, 256], strides = [1, 1]} : vector<24x256xf32> to vector<8x256xf32>
    %315 = vector.extract_strided_slice %313 {offsets = [0, 0], sizes = [8, 1], strides = [1, 1]} : vector<8x8xf32> to vector<8x1xf32>
    %316 = vector.extract_strided_slice %314 {offsets = [0, 0], sizes = [1, 256], strides = [1, 1]} : vector<8x256xf32> to vector<1x256xf32>
    %317 = vector.broadcast %315 : vector<8x1xf32> to vector<8x256xf32>
    %318 = vector.broadcast %316 : vector<1x256xf32> to vector<8x256xf32>
    %319 = arith.mulf %317, %318 : vector<8x256xf32>
    %320 = vector.extract_strided_slice %313 {offsets = [0, 1], sizes = [8, 1], strides = [1, 1]} : vector<8x8xf32> to vector<8x1xf32>
    %321 = vector.extract_strided_slice %314 {offsets = [1, 0], sizes = [1, 256], strides = [1, 1]} : vector<8x256xf32> to vector<1x256xf32>
    %322 = vector.broadcast %320 : vector<8x1xf32> to vector<8x256xf32>
    %323 = vector.broadcast %321 : vector<1x256xf32> to vector<8x256xf32>
    %324 = arith.mulf %322, %323 : vector<8x256xf32>
    %325 = arith.addf %319, %324 : vector<8x256xf32>
    %326 = vector.extract_strided_slice %313 {offsets = [0, 2], sizes = [8, 1], strides = [1, 1]} : vector<8x8xf32> to vector<8x1xf32>
    %327 = vector.extract_strided_slice %314 {offsets = [2, 0], sizes = [1, 256], strides = [1, 1]} : vector<8x256xf32> to vector<1x256xf32>
    %328 = vector.broadcast %326 : vector<8x1xf32> to vector<8x256xf32>
    %329 = vector.broadcast %327 : vector<1x256xf32> to vector<8x256xf32>
    %330 = arith.mulf %328, %329 : vector<8x256xf32>
    %331 = arith.addf %325, %330 : vector<8x256xf32>
    %332 = vector.extract_strided_slice %313 {offsets = [0, 3], sizes = [8, 1], strides = [1, 1]} : vector<8x8xf32> to vector<8x1xf32>
    %333 = vector.extract_strided_slice %314 {offsets = [3, 0], sizes = [1, 256], strides = [1, 1]} : vector<8x256xf32> to vector<1x256xf32>
    %334 = vector.broadcast %332 : vector<8x1xf32> to vector<8x256xf32>
    %335 = vector.broadcast %333 : vector<1x256xf32> to vector<8x256xf32>
    %336 = arith.mulf %334, %335 : vector<8x256xf32>
    %337 = arith.addf %331, %336 : vector<8x256xf32>
    %338 = vector.extract_strided_slice %313 {offsets = [0, 4], sizes = [8, 1], strides = [1, 1]} : vector<8x8xf32> to vector<8x1xf32>
    %339 = vector.extract_strided_slice %314 {offsets = [4, 0], sizes = [1, 256], strides = [1, 1]} : vector<8x256xf32> to vector<1x256xf32>
    %340 = vector.broadcast %338 : vector<8x1xf32> to vector<8x256xf32>
    %341 = vector.broadcast %339 : vector<1x256xf32> to vector<8x256xf32>
    %342 = arith.mulf %340, %341 : vector<8x256xf32>
    %343 = arith.addf %337, %342 : vector<8x256xf32>
    %344 = vector.extract_strided_slice %313 {offsets = [0, 5], sizes = [8, 1], strides = [1, 1]} : vector<8x8xf32> to vector<8x1xf32>
    %345 = vector.extract_strided_slice %314 {offsets = [5, 0], sizes = [1, 256], strides = [1, 1]} : vector<8x256xf32> to vector<1x256xf32>
    %346 = vector.broadcast %344 : vector<8x1xf32> to vector<8x256xf32>
    %347 = vector.broadcast %345 : vector<1x256xf32> to vector<8x256xf32>
    %348 = arith.mulf %346, %347 : vector<8x256xf32>
    %349 = arith.addf %343, %348 : vector<8x256xf32>
    %350 = vector.extract_strided_slice %313 {offsets = [0, 6], sizes = [8, 1], strides = [1, 1]} : vector<8x8xf32> to vector<8x1xf32>
    %351 = vector.extract_strided_slice %314 {offsets = [6, 0], sizes = [1, 256], strides = [1, 1]} : vector<8x256xf32> to vector<1x256xf32>
    %352 = vector.broadcast %350 : vector<8x1xf32> to vector<8x256xf32>
    %353 = vector.broadcast %351 : vector<1x256xf32> to vector<8x256xf32>
    %354 = arith.mulf %352, %353 : vector<8x256xf32>
    %355 = arith.addf %349, %354 : vector<8x256xf32>
    %356 = vector.extract_strided_slice %313 {offsets = [0, 7], sizes = [8, 1], strides = [1, 1]} : vector<8x8xf32> to vector<8x1xf32>
    %357 = vector.extract_strided_slice %314 {offsets = [7, 0], sizes = [1, 256], strides = [1, 1]} : vector<8x256xf32> to vector<1x256xf32>
    %358 = vector.broadcast %356 : vector<8x1xf32> to vector<8x256xf32>
    %359 = vector.broadcast %357 : vector<1x256xf32> to vector<8x256xf32>
    %360 = arith.mulf %358, %359 : vector<8x256xf32>
    %361 = arith.addf %355, %360 : vector<8x256xf32>
    %362 = vector.extract_strided_slice %311 {offsets = [0, 0], sizes = [8, 1], strides = [1, 1]} : vector<24x1xf32> to vector<8x1xf32>
    %363 = vector.broadcast %362 : vector<8x1xf32> to vector<8x256xf32>
    %364 = arith.mulf %361, %363 : vector<8x256xf32>
    %365 = vector.extract_strided_slice %312 {offsets = [0, 0], sizes = [8, 1], strides = [1, 1]} : vector<24x1xf32> to vector<8x1xf32>
    %366 = vector.broadcast %365 : vector<8x1xf32> to vector<8x256xf32>
    %367 = arith.addf %364, %366 : vector<8x256xf32>
    %cst_44 = arith.constant 0.000000e+00 : f32
    %368 = vector.broadcast %cst_44 : f32 to vector<8x256xf32>
    %369 = arith.maximumf %367, %368 : vector<8x256xf32>
    %c0_45 = arith.constant 0 : index
    %c0_46 = arith.constant 0 : index
    %c0_47 = arith.constant 0 : index
    %370 = vector.load %arg18[%c0_45, %c0_46, %c0_47] : memref<3x2x8xf32, #tpu.memory_space<vmem>>, vector<1x2x8xf32>
    %371 = vector.shape_cast %370 : vector<1x2x8xf32> to vector<2x8xf32>
    %372 = vector.extract_strided_slice %371 {offsets = [0, 0], sizes = [2, 1], strides = [1, 1]} : vector<2x8xf32> to vector<2x1xf32>
    %373 = vector.extract_strided_slice %369 {offsets = [0, 0], sizes = [1, 256], strides = [1, 1]} : vector<8x256xf32> to vector<1x256xf32>
    %374 = vector.broadcast %372 : vector<2x1xf32> to vector<2x256xf32>
    %375 = vector.broadcast %373 : vector<1x256xf32> to vector<2x256xf32>
    %376 = arith.mulf %374, %375 : vector<2x256xf32>
    %377 = vector.extract_strided_slice %371 {offsets = [0, 1], sizes = [2, 1], strides = [1, 1]} : vector<2x8xf32> to vector<2x1xf32>
    %378 = vector.extract_strided_slice %369 {offsets = [1, 0], sizes = [1, 256], strides = [1, 1]} : vector<8x256xf32> to vector<1x256xf32>
    %379 = vector.broadcast %377 : vector<2x1xf32> to vector<2x256xf32>
    %380 = vector.broadcast %378 : vector<1x256xf32> to vector<2x256xf32>
    %381 = arith.mulf %379, %380 : vector<2x256xf32>
    %382 = arith.addf %376, %381 : vector<2x256xf32>
    %383 = vector.extract_strided_slice %371 {offsets = [0, 2], sizes = [2, 1], strides = [1, 1]} : vector<2x8xf32> to vector<2x1xf32>
    %384 = vector.extract_strided_slice %369 {offsets = [2, 0], sizes = [1, 256], strides = [1, 1]} : vector<8x256xf32> to vector<1x256xf32>
    %385 = vector.broadcast %383 : vector<2x1xf32> to vector<2x256xf32>
    %386 = vector.broadcast %384 : vector<1x256xf32> to vector<2x256xf32>
    %387 = arith.mulf %385, %386 : vector<2x256xf32>
    %388 = arith.addf %382, %387 : vector<2x256xf32>
    %389 = vector.extract_strided_slice %371 {offsets = [0, 3], sizes = [2, 1], strides = [1, 1]} : vector<2x8xf32> to vector<2x1xf32>
    %390 = vector.extract_strided_slice %369 {offsets = [3, 0], sizes = [1, 256], strides = [1, 1]} : vector<8x256xf32> to vector<1x256xf32>
    %391 = vector.broadcast %389 : vector<2x1xf32> to vector<2x256xf32>
    %392 = vector.broadcast %390 : vector<1x256xf32> to vector<2x256xf32>
    %393 = arith.mulf %391, %392 : vector<2x256xf32>
    %394 = arith.addf %388, %393 : vector<2x256xf32>
    %395 = vector.extract_strided_slice %371 {offsets = [0, 4], sizes = [2, 1], strides = [1, 1]} : vector<2x8xf32> to vector<2x1xf32>
    %396 = vector.extract_strided_slice %369 {offsets = [4, 0], sizes = [1, 256], strides = [1, 1]} : vector<8x256xf32> to vector<1x256xf32>
    %397 = vector.broadcast %395 : vector<2x1xf32> to vector<2x256xf32>
    %398 = vector.broadcast %396 : vector<1x256xf32> to vector<2x256xf32>
    %399 = arith.mulf %397, %398 : vector<2x256xf32>
    %400 = arith.addf %394, %399 : vector<2x256xf32>
    %401 = vector.extract_strided_slice %371 {offsets = [0, 5], sizes = [2, 1], strides = [1, 1]} : vector<2x8xf32> to vector<2x1xf32>
    %402 = vector.extract_strided_slice %369 {offsets = [5, 0], sizes = [1, 256], strides = [1, 1]} : vector<8x256xf32> to vector<1x256xf32>
    %403 = vector.broadcast %401 : vector<2x1xf32> to vector<2x256xf32>
    %404 = vector.broadcast %402 : vector<1x256xf32> to vector<2x256xf32>
    %405 = arith.mulf %403, %404 : vector<2x256xf32>
    %406 = arith.addf %400, %405 : vector<2x256xf32>
    %407 = vector.extract_strided_slice %371 {offsets = [0, 6], sizes = [2, 1], strides = [1, 1]} : vector<2x8xf32> to vector<2x1xf32>
    %408 = vector.extract_strided_slice %369 {offsets = [6, 0], sizes = [1, 256], strides = [1, 1]} : vector<8x256xf32> to vector<1x256xf32>
    %409 = vector.broadcast %407 : vector<2x1xf32> to vector<2x256xf32>
    %410 = vector.broadcast %408 : vector<1x256xf32> to vector<2x256xf32>
    %411 = arith.mulf %409, %410 : vector<2x256xf32>
    %412 = arith.addf %406, %411 : vector<2x256xf32>
    %413 = vector.extract_strided_slice %371 {offsets = [0, 7], sizes = [2, 1], strides = [1, 1]} : vector<2x8xf32> to vector<2x1xf32>
    %414 = vector.extract_strided_slice %369 {offsets = [7, 0], sizes = [1, 256], strides = [1, 1]} : vector<8x256xf32> to vector<1x256xf32>
    %415 = vector.broadcast %413 : vector<2x1xf32> to vector<2x256xf32>
    %416 = vector.broadcast %414 : vector<1x256xf32> to vector<2x256xf32>
    %417 = arith.mulf %415, %416 : vector<2x256xf32>
    %418 = arith.addf %412, %417 : vector<2x256xf32>
    %c0_48 = arith.constant 0 : index
    %c0_49 = arith.constant 0 : index
    %c0_50 = arith.constant 0 : index
    %419 = vector.load %arg19[%c0_48, %c0_49, %c0_50] : memref<3x2x1xf32, #tpu.memory_space<vmem>>, vector<1x2x1xf32>
    %420 = vector.shape_cast %419 : vector<1x2x1xf32> to vector<2x1xf32>
    %421 = vector.broadcast %420 : vector<2x1xf32> to vector<2x256xf32>
    %422 = arith.addf %418, %421 : vector<2x256xf32>
    %423 = vector.extract_strided_slice %422 {offsets = [0, 0], sizes = [1, 256], strides = [1, 1]} : vector<2x256xf32> to vector<1x256xf32>
    %c0_51 = arith.constant 0 : index
    %c0_52 = arith.constant 0 : index
    %c0_53 = arith.constant 0 : index
    %424 = vector.load %arg20[%c0_51, %c0_52, %c0_53] : memref<1x1x256xf32, #tpu.memory_space<vmem>>, vector<1x1x256xf32>
    %425 = vector.shape_cast %424 : vector<1x1x256xf32> to vector<1x256xf32>
    %426 = vector.shape_cast %423 : vector<1x256xf32> to vector<1x1x256xf32>
    tpu.vector_store %arg20[%c0_51, %c0_52, %c0_53], %426 {strides = array<i32>} : memref<1x1x256xf32, #tpu.memory_space<vmem>>, vector<1x1x256xf32>,
    %427 = vector.extract_strided_slice %310 {offsets = [8, 0], sizes = [8, 8], strides = [1, 1]} : vector<24x8xf32> to vector<8x8xf32>
    %428 = vector.extract_strided_slice %309 {offsets = [8, 0], sizes = [8, 256], strides = [1, 1]} : vector<24x256xf32> to vector<8x256xf32>
    %429 = vector.extract_strided_slice %427 {offsets = [0, 0], sizes = [8, 1], strides = [1, 1]} : vector<8x8xf32> to vector<8x1xf32>
    %430 = vector.extract_strided_slice %428 {offsets = [0, 0], sizes = [1, 256], strides = [1, 1]} : vector<8x256xf32> to vector<1x256xf32>
    %431 = vector.broadcast %429 : vector<8x1xf32> to vector<8x256xf32>
    %432 = vector.broadcast %430 : vector<1x256xf32> to vector<8x256xf32>
    %433 = arith.mulf %431, %432 : vector<8x256xf32>
    %434 = vector.extract_strided_slice %427 {offsets = [0, 1], sizes = [8, 1], strides = [1, 1]} : vector<8x8xf32> to vector<8x1xf32>
    %435 = vector.extract_strided_slice %428 {offsets = [1, 0], sizes = [1, 256], strides = [1, 1]} : vector<8x256xf32> to vector<1x256xf32>
    %436 = vector.broadcast %434 : vector<8x1xf32> to vector<8x256xf32>
    %437 = vector.broadcast %435 : vector<1x256xf32> to vector<8x256xf32>
    %438 = arith.mulf %436, %437 : vector<8x256xf32>
    %439 = arith.addf %433, %438 : vector<8x256xf32>
    %440 = vector.extract_strided_slice %427 {offsets = [0, 2], sizes = [8, 1], strides = [1, 1]} : vector<8x8xf32> to vector<8x1xf32>
    %441 = vector.extract_strided_slice %428 {offsets = [2, 0], sizes = [1, 256], strides = [1, 1]} : vector<8x256xf32> to vector<1x256xf32>
    %442 = vector.broadcast %440 : vector<8x1xf32> to vector<8x256xf32>
    %443 = vector.broadcast %441 : vector<1x256xf32> to vector<8x256xf32>
    %444 = arith.mulf %442, %443 : vector<8x256xf32>
    %445 = arith.addf %439, %444 : vector<8x256xf32>
    %446 = vector.extract_strided_slice %427 {offsets = [0, 3], sizes = [8, 1], strides = [1, 1]} : vector<8x8xf32> to vector<8x1xf32>
    %447 = vector.extract_strided_slice %428 {offsets = [3, 0], sizes = [1, 256], strides = [1, 1]} : vector<8x256xf32> to vector<1x256xf32>
    %448 = vector.broadcast %446 : vector<8x1xf32> to vector<8x256xf32>
    %449 = vector.broadcast %447 : vector<1x256xf32> to vector<8x256xf32>
    %450 = arith.mulf %448, %449 : vector<8x256xf32>
    %451 = arith.addf %445, %450 : vector<8x256xf32>
    %452 = vector.extract_strided_slice %427 {offsets = [0, 4], sizes = [8, 1], strides = [1, 1]} : vector<8x8xf32> to vector<8x1xf32>
    %453 = vector.extract_strided_slice %428 {offsets = [4, 0], sizes = [1, 256], strides = [1, 1]} : vector<8x256xf32> to vector<1x256xf32>
    %454 = vector.broadcast %452 : vector<8x1xf32> to vector<8x256xf32>
    %455 = vector.broadcast %453 : vector<1x256xf32> to vector<8x256xf32>
    %456 = arith.mulf %454, %455 : vector<8x256xf32>
    %457 = arith.addf %451, %456 : vector<8x256xf32>
    %458 = vector.extract_strided_slice %427 {offsets = [0, 5], sizes = [8, 1], strides = [1, 1]} : vector<8x8xf32> to vector<8x1xf32>
    %459 = vector.extract_strided_slice %428 {offsets = [5, 0], sizes = [1, 256], strides = [1, 1]} : vector<8x256xf32> to vector<1x256xf32>
    %460 = vector.broadcast %458 : vector<8x1xf32> to vector<8x256xf32>
    %461 = vector.broadcast %459 : vector<1x256xf32> to vector<8x256xf32>
    %462 = arith.mulf %460, %461 : vector<8x256xf32>
    %463 = arith.addf %457, %462 : vector<8x256xf32>
    %464 = vector.extract_strided_slice %427 {offsets = [0, 6], sizes = [8, 1], strides = [1, 1]} : vector<8x8xf32> to vector<8x1xf32>
    %465 = vector.extract_strided_slice %428 {offsets = [6, 0], sizes = [1, 256], strides = [1, 1]} : vector<8x256xf32> to vector<1x256xf32>
    %466 = vector.broadcast %464 : vector<8x1xf32> to vector<8x256xf32>
    %467 = vector.broadcast %465 : vector<1x256xf32> to vector<8x256xf32>
    %468 = arith.mulf %466, %467 : vector<8x256xf32>
    %469 = arith.addf %463, %468 : vector<8x256xf32>
    %470 = vector.extract_strided_slice %427 {offsets = [0, 7], sizes = [8, 1], strides = [1, 1]} : vector<8x8xf32> to vector<8x1xf32>
    %471 = vector.extract_strided_slice %428 {offsets = [7, 0], sizes = [1, 256], strides = [1, 1]} : vector<8x256xf32> to vector<1x256xf32>
    %472 = vector.broadcast %470 : vector<8x1xf32> to vector<8x256xf32>
    %473 = vector.broadcast %471 : vector<1x256xf32> to vector<8x256xf32>
    %474 = arith.mulf %472, %473 : vector<8x256xf32>
    %475 = arith.addf %469, %474 : vector<8x256xf32>
    %476 = vector.extract_strided_slice %311 {offsets = [8, 0], sizes = [8, 1], strides = [1, 1]} : vector<24x1xf32> to vector<8x1xf32>
    %477 = vector.broadcast %476 : vector<8x1xf32> to vector<8x256xf32>
    %478 = arith.mulf %475, %477 : vector<8x256xf32>
    %479 = vector.extract_strided_slice %312 {offsets = [8, 0], sizes = [8, 1], strides = [1, 1]} : vector<24x1xf32> to vector<8x1xf32>
    %480 = vector.broadcast %479 : vector<8x1xf32> to vector<8x256xf32>
    %481 = arith.addf %478, %480 : vector<8x256xf32>
    %cst_54 = arith.constant 0.000000e+00 : f32
    %482 = vector.broadcast %cst_54 : f32 to vector<8x256xf32>
    %483 = arith.maximumf %481, %482 : vector<8x256xf32>
    %c1 = arith.constant 1 : index
    %c0_55 = arith.constant 0 : index
    %c0_56 = arith.constant 0 : index
    %484 = vector.load %arg18[%c1, %c0_55, %c0_56] : memref<3x2x8xf32, #tpu.memory_space<vmem>>, vector<1x2x8xf32>
    %485 = vector.shape_cast %484 : vector<1x2x8xf32> to vector<2x8xf32>
    %486 = vector.extract_strided_slice %485 {offsets = [0, 0], sizes = [2, 1], strides = [1, 1]} : vector<2x8xf32> to vector<2x1xf32>
    %487 = vector.extract_strided_slice %483 {offsets = [0, 0], sizes = [1, 256], strides = [1, 1]} : vector<8x256xf32> to vector<1x256xf32>
    %488 = vector.broadcast %486 : vector<2x1xf32> to vector<2x256xf32>
    %489 = vector.broadcast %487 : vector<1x256xf32> to vector<2x256xf32>
    %490 = arith.mulf %488, %489 : vector<2x256xf32>
    %491 = vector.extract_strided_slice %485 {offsets = [0, 1], sizes = [2, 1], strides = [1, 1]} : vector<2x8xf32> to vector<2x1xf32>
    %492 = vector.extract_strided_slice %483 {offsets = [1, 0], sizes = [1, 256], strides = [1, 1]} : vector<8x256xf32> to vector<1x256xf32>
    %493 = vector.broadcast %491 : vector<2x1xf32> to vector<2x256xf32>
    %494 = vector.broadcast %492 : vector<1x256xf32> to vector<2x256xf32>
    %495 = arith.mulf %493, %494 : vector<2x256xf32>
    %496 = arith.addf %490, %495 : vector<2x256xf32>
    %497 = vector.extract_strided_slice %485 {offsets = [0, 2], sizes = [2, 1], strides = [1, 1]} : vector<2x8xf32> to vector<2x1xf32>
    %498 = vector.extract_strided_slice %483 {offsets = [2, 0], sizes = [1, 256], strides = [1, 1]} : vector<8x256xf32> to vector<1x256xf32>
    %499 = vector.broadcast %497 : vector<2x1xf32> to vector<2x256xf32>
    %500 = vector.broadcast %498 : vector<1x256xf32> to vector<2x256xf32>
    %501 = arith.mulf %499, %500 : vector<2x256xf32>
    %502 = arith.addf %496, %501 : vector<2x256xf32>
    %503 = vector.extract_strided_slice %485 {offsets = [0, 3], sizes = [2, 1], strides = [1, 1]} : vector<2x8xf32> to vector<2x1xf32>
    %504 = vector.extract_strided_slice %483 {offsets = [3, 0], sizes = [1, 256], strides = [1, 1]} : vector<8x256xf32> to vector<1x256xf32>
    %505 = vector.broadcast %503 : vector<2x1xf32> to vector<2x256xf32>
    %506 = vector.broadcast %504 : vector<1x256xf32> to vector<2x256xf32>
    %507 = arith.mulf %505, %506 : vector<2x256xf32>
    %508 = arith.addf %502, %507 : vector<2x256xf32>
    %509 = vector.extract_strided_slice %485 {offsets = [0, 4], sizes = [2, 1], strides = [1, 1]} : vector<2x8xf32> to vector<2x1xf32>
    %510 = vector.extract_strided_slice %483 {offsets = [4, 0], sizes = [1, 256], strides = [1, 1]} : vector<8x256xf32> to vector<1x256xf32>
    %511 = vector.broadcast %509 : vector<2x1xf32> to vector<2x256xf32>
    %512 = vector.broadcast %510 : vector<1x256xf32> to vector<2x256xf32>
    %513 = arith.mulf %511, %512 : vector<2x256xf32>
    %514 = arith.addf %508, %513 : vector<2x256xf32>
    %515 = vector.extract_strided_slice %485 {offsets = [0, 5], sizes = [2, 1], strides = [1, 1]} : vector<2x8xf32> to vector<2x1xf32>
    %516 = vector.extract_strided_slice %483 {offsets = [5, 0], sizes = [1, 256], strides = [1, 1]} : vector<8x256xf32> to vector<1x256xf32>
    %517 = vector.broadcast %515 : vector<2x1xf32> to vector<2x256xf32>
    %518 = vector.broadcast %516 : vector<1x256xf32> to vector<2x256xf32>
    %519 = arith.mulf %517, %518 : vector<2x256xf32>
    %520 = arith.addf %514, %519 : vector<2x256xf32>
    %521 = vector.extract_strided_slice %485 {offsets = [0, 6], sizes = [2, 1], strides = [1, 1]} : vector<2x8xf32> to vector<2x1xf32>
    %522 = vector.extract_strided_slice %483 {offsets = [6, 0], sizes = [1, 256], strides = [1, 1]} : vector<8x256xf32> to vector<1x256xf32>
    %523 = vector.broadcast %521 : vector<2x1xf32> to vector<2x256xf32>
    %524 = vector.broadcast %522 : vector<1x256xf32> to vector<2x256xf32>
    %525 = arith.mulf %523, %524 : vector<2x256xf32>
    %526 = arith.addf %520, %525 : vector<2x256xf32>
    %527 = vector.extract_strided_slice %485 {offsets = [0, 7], sizes = [2, 1], strides = [1, 1]} : vector<2x8xf32> to vector<2x1xf32>
    %528 = vector.extract_strided_slice %483 {offsets = [7, 0], sizes = [1, 256], strides = [1, 1]} : vector<8x256xf32> to vector<1x256xf32>
    %529 = vector.broadcast %527 : vector<2x1xf32> to vector<2x256xf32>
    %530 = vector.broadcast %528 : vector<1x256xf32> to vector<2x256xf32>
    %531 = arith.mulf %529, %530 : vector<2x256xf32>
    %532 = arith.addf %526, %531 : vector<2x256xf32>
    %c1_57 = arith.constant 1 : index
    %c0_58 = arith.constant 0 : index
    %c0_59 = arith.constant 0 : index
    %533 = vector.load %arg19[%c1_57, %c0_58, %c0_59] : memref<3x2x1xf32, #tpu.memory_space<vmem>>, vector<1x2x1xf32>
    %534 = vector.shape_cast %533 : vector<1x2x1xf32> to vector<2x1xf32>
    %535 = vector.broadcast %534 : vector<2x1xf32> to vector<2x256xf32>
    %536 = arith.addf %532, %535 : vector<2x256xf32>
    %c0_60 = arith.constant 0 : index
    %c0_61 = arith.constant 0 : index
    %c0_62 = arith.constant 0 : index
    %537 = vector.load %arg21[%c0_60, %c0_61, %c0_62] : memref<1x2x256xf32, #tpu.memory_space<vmem>>, vector<1x2x256xf32>
    %538 = vector.shape_cast %537 : vector<1x2x256xf32> to vector<2x256xf32>
    %539 = vector.shape_cast %536 : vector<2x256xf32> to vector<1x2x256xf32>
    tpu.vector_store %arg21[%c0_60, %c0_61, %c0_62], %539 {strides = array<i32>} : memref<1x2x256xf32, #tpu.memory_space<vmem>>, vector<1x2x256xf32>,
    %540 = vector.extract_strided_slice %310 {offsets = [16, 0], sizes = [8, 8], strides = [1, 1]} : vector<24x8xf32> to vector<8x8xf32>
    %541 = vector.extract_strided_slice %309 {offsets = [16, 0], sizes = [8, 256], strides = [1, 1]} : vector<24x256xf32> to vector<8x256xf32>
    %542 = vector.extract_strided_slice %540 {offsets = [0, 0], sizes = [8, 1], strides = [1, 1]} : vector<8x8xf32> to vector<8x1xf32>
    %543 = vector.extract_strided_slice %541 {offsets = [0, 0], sizes = [1, 256], strides = [1, 1]} : vector<8x256xf32> to vector<1x256xf32>
    %544 = vector.broadcast %542 : vector<8x1xf32> to vector<8x256xf32>
    %545 = vector.broadcast %543 : vector<1x256xf32> to vector<8x256xf32>
    %546 = arith.mulf %544, %545 : vector<8x256xf32>
    %547 = vector.extract_strided_slice %540 {offsets = [0, 1], sizes = [8, 1], strides = [1, 1]} : vector<8x8xf32> to vector<8x1xf32>
    %548 = vector.extract_strided_slice %541 {offsets = [1, 0], sizes = [1, 256], strides = [1, 1]} : vector<8x256xf32> to vector<1x256xf32>
    %549 = vector.broadcast %547 : vector<8x1xf32> to vector<8x256xf32>
    %550 = vector.broadcast %548 : vector<1x256xf32> to vector<8x256xf32>
    %551 = arith.mulf %549, %550 : vector<8x256xf32>
    %552 = arith.addf %546, %551 : vector<8x256xf32>
    %553 = vector.extract_strided_slice %540 {offsets = [0, 2], sizes = [8, 1], strides = [1, 1]} : vector<8x8xf32> to vector<8x1xf32>
    %554 = vector.extract_strided_slice %541 {offsets = [2, 0], sizes = [1, 256], strides = [1, 1]} : vector<8x256xf32> to vector<1x256xf32>
    %555 = vector.broadcast %553 : vector<8x1xf32> to vector<8x256xf32>
    %556 = vector.broadcast %554 : vector<1x256xf32> to vector<8x256xf32>
    %557 = arith.mulf %555, %556 : vector<8x256xf32>
    %558 = arith.addf %552, %557 : vector<8x256xf32>
    %559 = vector.extract_strided_slice %540 {offsets = [0, 3], sizes = [8, 1], strides = [1, 1]} : vector<8x8xf32> to vector<8x1xf32>
    %560 = vector.extract_strided_slice %541 {offsets = [3, 0], sizes = [1, 256], strides = [1, 1]} : vector<8x256xf32> to vector<1x256xf32>
    %561 = vector.broadcast %559 : vector<8x1xf32> to vector<8x256xf32>
    %562 = vector.broadcast %560 : vector<1x256xf32> to vector<8x256xf32>
    %563 = arith.mulf %561, %562 : vector<8x256xf32>
    %564 = arith.addf %558, %563 : vector<8x256xf32>
    %565 = vector.extract_strided_slice %540 {offsets = [0, 4], sizes = [8, 1], strides = [1, 1]} : vector<8x8xf32> to vector<8x1xf32>
    %566 = vector.extract_strided_slice %541 {offsets = [4, 0], sizes = [1, 256], strides = [1, 1]} : vector<8x256xf32> to vector<1x256xf32>
    %567 = vector.broadcast %565 : vector<8x1xf32> to vector<8x256xf32>
    %568 = vector.broadcast %566 : vector<1x256xf32> to vector<8x256xf32>
    %569 = arith.mulf %567, %568 : vector<8x256xf32>
    %570 = arith.addf %564, %569 : vector<8x256xf32>
    %571 = vector.extract_strided_slice %540 {offsets = [0, 5], sizes = [8, 1], strides = [1, 1]} : vector<8x8xf32> to vector<8x1xf32>
    %572 = vector.extract_strided_slice %541 {offsets = [5, 0], sizes = [1, 256], strides = [1, 1]} : vector<8x256xf32> to vector<1x256xf32>
    %573 = vector.broadcast %571 : vector<8x1xf32> to vector<8x256xf32>
    %574 = vector.broadcast %572 : vector<1x256xf32> to vector<8x256xf32>
    %575 = arith.mulf %573, %574 : vector<8x256xf32>
    %576 = arith.addf %570, %575 : vector<8x256xf32>
    %577 = vector.extract_strided_slice %540 {offsets = [0, 6], sizes = [8, 1], strides = [1, 1]} : vector<8x8xf32> to vector<8x1xf32>
    %578 = vector.extract_strided_slice %541 {offsets = [6, 0], sizes = [1, 256], strides = [1, 1]} : vector<8x256xf32> to vector<1x256xf32>
    %579 = vector.broadcast %577 : vector<8x1xf32> to vector<8x256xf32>
    %580 = vector.broadcast %578 : vector<1x256xf32> to vector<8x256xf32>
    %581 = arith.mulf %579, %580 : vector<8x256xf32>
    %582 = arith.addf %576, %581 : vector<8x256xf32>
    %583 = vector.extract_strided_slice %540 {offsets = [0, 7], sizes = [8, 1], strides = [1, 1]} : vector<8x8xf32> to vector<8x1xf32>
    %584 = vector.extract_strided_slice %541 {offsets = [7, 0], sizes = [1, 256], strides = [1, 1]} : vector<8x256xf32> to vector<1x256xf32>
    %585 = vector.broadcast %583 : vector<8x1xf32> to vector<8x256xf32>
    %586 = vector.broadcast %584 : vector<1x256xf32> to vector<8x256xf32>
    %587 = arith.mulf %585, %586 : vector<8x256xf32>
    %588 = arith.addf %582, %587 : vector<8x256xf32>
    %589 = vector.extract_strided_slice %311 {offsets = [16, 0], sizes = [8, 1], strides = [1, 1]} : vector<24x1xf32> to vector<8x1xf32>
    %590 = vector.broadcast %589 : vector<8x1xf32> to vector<8x256xf32>
    %591 = arith.mulf %588, %590 : vector<8x256xf32>
    %592 = vector.extract_strided_slice %312 {offsets = [16, 0], sizes = [8, 1], strides = [1, 1]} : vector<24x1xf32> to vector<8x1xf32>
    %593 = vector.broadcast %592 : vector<8x1xf32> to vector<8x256xf32>
    %594 = arith.addf %591, %593 : vector<8x256xf32>
    %cst_63 = arith.constant 0.000000e+00 : f32
    %595 = vector.broadcast %cst_63 : f32 to vector<8x256xf32>
    %596 = arith.maximumf %594, %595 : vector<8x256xf32>
    %c2 = arith.constant 2 : index
    %c0_64 = arith.constant 0 : index
    %c0_65 = arith.constant 0 : index
    %597 = vector.load %arg18[%c2, %c0_64, %c0_65] : memref<3x2x8xf32, #tpu.memory_space<vmem>>, vector<1x2x8xf32>
    %598 = vector.shape_cast %597 : vector<1x2x8xf32> to vector<2x8xf32>
    %599 = vector.extract_strided_slice %598 {offsets = [0, 0], sizes = [2, 1], strides = [1, 1]} : vector<2x8xf32> to vector<2x1xf32>
    %600 = vector.extract_strided_slice %596 {offsets = [0, 0], sizes = [1, 256], strides = [1, 1]} : vector<8x256xf32> to vector<1x256xf32>
    %601 = vector.broadcast %599 : vector<2x1xf32> to vector<2x256xf32>
    %602 = vector.broadcast %600 : vector<1x256xf32> to vector<2x256xf32>
    %603 = arith.mulf %601, %602 : vector<2x256xf32>
    %604 = vector.extract_strided_slice %598 {offsets = [0, 1], sizes = [2, 1], strides = [1, 1]} : vector<2x8xf32> to vector<2x1xf32>
    %605 = vector.extract_strided_slice %596 {offsets = [1, 0], sizes = [1, 256], strides = [1, 1]} : vector<8x256xf32> to vector<1x256xf32>
    %606 = vector.broadcast %604 : vector<2x1xf32> to vector<2x256xf32>
    %607 = vector.broadcast %605 : vector<1x256xf32> to vector<2x256xf32>
    %608 = arith.mulf %606, %607 : vector<2x256xf32>
    %609 = arith.addf %603, %608 : vector<2x256xf32>
    %610 = vector.extract_strided_slice %598 {offsets = [0, 2], sizes = [2, 1], strides = [1, 1]} : vector<2x8xf32> to vector<2x1xf32>
    %611 = vector.extract_strided_slice %596 {offsets = [2, 0], sizes = [1, 256], strides = [1, 1]} : vector<8x256xf32> to vector<1x256xf32>
    %612 = vector.broadcast %610 : vector<2x1xf32> to vector<2x256xf32>
    %613 = vector.broadcast %611 : vector<1x256xf32> to vector<2x256xf32>
    %614 = arith.mulf %612, %613 : vector<2x256xf32>
    %615 = arith.addf %609, %614 : vector<2x256xf32>
    %616 = vector.extract_strided_slice %598 {offsets = [0, 3], sizes = [2, 1], strides = [1, 1]} : vector<2x8xf32> to vector<2x1xf32>
    %617 = vector.extract_strided_slice %596 {offsets = [3, 0], sizes = [1, 256], strides = [1, 1]} : vector<8x256xf32> to vector<1x256xf32>
    %618 = vector.broadcast %616 : vector<2x1xf32> to vector<2x256xf32>
    %619 = vector.broadcast %617 : vector<1x256xf32> to vector<2x256xf32>
    %620 = arith.mulf %618, %619 : vector<2x256xf32>
    %621 = arith.addf %615, %620 : vector<2x256xf32>
    %622 = vector.extract_strided_slice %598 {offsets = [0, 4], sizes = [2, 1], strides = [1, 1]} : vector<2x8xf32> to vector<2x1xf32>
    %623 = vector.extract_strided_slice %596 {offsets = [4, 0], sizes = [1, 256], strides = [1, 1]} : vector<8x256xf32> to vector<1x256xf32>
    %624 = vector.broadcast %622 : vector<2x1xf32> to vector<2x256xf32>
    %625 = vector.broadcast %623 : vector<1x256xf32> to vector<2x256xf32>
    %626 = arith.mulf %624, %625 : vector<2x256xf32>
    %627 = arith.addf %621, %626 : vector<2x256xf32>
    %628 = vector.extract_strided_slice %598 {offsets = [0, 5], sizes = [2, 1], strides = [1, 1]} : vector<2x8xf32> to vector<2x1xf32>
    %629 = vector.extract_strided_slice %596 {offsets = [5, 0], sizes = [1, 256], strides = [1, 1]} : vector<8x256xf32> to vector<1x256xf32>
    %630 = vector.broadcast %628 : vector<2x1xf32> to vector<2x256xf32>
    %631 = vector.broadcast %629 : vector<1x256xf32> to vector<2x256xf32>
    %632 = arith.mulf %630, %631 : vector<2x256xf32>
    %633 = arith.addf %627, %632 : vector<2x256xf32>
    %634 = vector.extract_strided_slice %598 {offsets = [0, 6], sizes = [2, 1], strides = [1, 1]} : vector<2x8xf32> to vector<2x1xf32>
    %635 = vector.extract_strided_slice %596 {offsets = [6, 0], sizes = [1, 256], strides = [1, 1]} : vector<8x256xf32> to vector<1x256xf32>
    %636 = vector.broadcast %634 : vector<2x1xf32> to vector<2x256xf32>
    %637 = vector.broadcast %635 : vector<1x256xf32> to vector<2x256xf32>
    %638 = arith.mulf %636, %637 : vector<2x256xf32>
    %639 = arith.addf %633, %638 : vector<2x256xf32>
    %640 = vector.extract_strided_slice %598 {offsets = [0, 7], sizes = [2, 1], strides = [1, 1]} : vector<2x8xf32> to vector<2x1xf32>
    %641 = vector.extract_strided_slice %596 {offsets = [7, 0], sizes = [1, 256], strides = [1, 1]} : vector<8x256xf32> to vector<1x256xf32>
    %642 = vector.broadcast %640 : vector<2x1xf32> to vector<2x256xf32>
    %643 = vector.broadcast %641 : vector<1x256xf32> to vector<2x256xf32>
    %644 = arith.mulf %642, %643 : vector<2x256xf32>
    %645 = arith.addf %639, %644 : vector<2x256xf32>
    %c2_66 = arith.constant 2 : index
    %c0_67 = arith.constant 0 : index
    %c0_68 = arith.constant 0 : index
    %646 = vector.load %arg19[%c2_66, %c0_67, %c0_68] : memref<3x2x1xf32, #tpu.memory_space<vmem>>, vector<1x2x1xf32>
    %647 = vector.shape_cast %646 : vector<1x2x1xf32> to vector<2x1xf32>
    %648 = vector.broadcast %647 : vector<2x1xf32> to vector<2x256xf32>
    %649 = arith.addf %645, %648 : vector<2x256xf32>
    %c0_69 = arith.constant 0 : index
    %c0_70 = arith.constant 0 : index
    %c0_71 = arith.constant 0 : index
    %650 = vector.load %arg22[%c0_69, %c0_70, %c0_71] : memref<1x2x256xf32, #tpu.memory_space<vmem>>, vector<1x2x256xf32>
    %651 = vector.shape_cast %650 : vector<1x2x256xf32> to vector<2x256xf32>
    %652 = vector.shape_cast %649 : vector<2x256xf32> to vector<1x2x256xf32>
    tpu.vector_store %arg22[%c0_69, %c0_70, %c0_71], %652 {strides = array<i32>} : memref<1x2x256xf32, #tpu.memory_space<vmem>>, vector<1x2x256xf32>,
    return
  }
  func.func @transform_0(%arg0: i32) -> (i32, i32, i32) {
    %c0_i32 = arith.constant 0 : i32
    %c0_i32_0 = arith.constant 0 : i32
    %c0_i32_1 = arith.constant 0 : i32
    return %arg0, %c0_i32, %c0_i32_0 : i32, i32, i32
  }
  func.func @transform_1(%arg0: i32) -> (i32, i32, i32) {
    %c0_i32 = arith.constant 0 : i32
    %c0_i32_0 = arith.constant 0 : i32
    %c0_i32_1 = arith.constant 0 : i32
    return %arg0, %c0_i32, %c0_i32_0 : i32, i32, i32
  }
  func.func @transform_2(%arg0: i32) -> (i32, i32) {
    %c0_i32 = arith.constant 0 : i32
    %c0_i32_0 = arith.constant 0 : i32
    %c0_i32_1 = arith.constant 0 : i32
    return %c0_i32, %c0_i32_0 : i32, i32
  }
  func.func @transform_3(%arg0: i32) -> (i32, i32) {
    %c0_i32 = arith.constant 0 : i32
    %c0_i32_0 = arith.constant 0 : i32
    %c0_i32_1 = arith.constant 0 : i32
    return %c0_i32, %c0_i32_0 : i32, i32
  }
  func.func @transform_4(%arg0: i32) -> (i32, i32) {
    %c0_i32 = arith.constant 0 : i32
    %c0_i32_0 = arith.constant 0 : i32
    %c0_i32_1 = arith.constant 0 : i32
    return %c0_i32, %c0_i32_0 : i32, i32
  }
  func.func @transform_5(%arg0: i32) -> (i32, i32) {
    %c0_i32 = arith.constant 0 : i32
    %c0_i32_0 = arith.constant 0 : i32
    %c0_i32_1 = arith.constant 0 : i32
    return %c0_i32, %c0_i32_0 : i32, i32
  }
  func.func @transform_6(%arg0: i32) -> (i32, i32) {
    %c0_i32 = arith.constant 0 : i32
    %c0_i32_0 = arith.constant 0 : i32
    %c0_i32_1 = arith.constant 0 : i32
    return %c0_i32, %c0_i32_0 : i32, i32
  }
  func.func @transform_7(%arg0: i32) -> (i32, i32) {
    %c0_i32 = arith.constant 0 : i32
    %c0_i32_0 = arith.constant 0 : i32
    %c0_i32_1 = arith.constant 0 : i32
    return %c0_i32, %c0_i32_0 : i32, i32
  }
  func.func @transform_8(%arg0: i32) -> (i32, i32) {
    %c0_i32 = arith.constant 0 : i32
    %c0_i32_0 = arith.constant 0 : i32
    %c0_i32_1 = arith.constant 0 : i32
    return %c0_i32, %c0_i32_0 : i32, i32
  }
  func.func @transform_9(%arg0: i32) -> (i32, i32) {
    %c0_i32 = arith.constant 0 : i32
    %c0_i32_0 = arith.constant 0 : i32
    %c0_i32_1 = arith.constant 0 : i32
    return %c0_i32, %c0_i32_0 : i32, i32
  }
  func.func @transform_10(%arg0: i32) -> (i32, i32) {
    %c0_i32 = arith.constant 0 : i32
    %c0_i32_0 = arith.constant 0 : i32
    %c0_i32_1 = arith.constant 0 : i32
    return %c0_i32, %c0_i32_0 : i32, i32
  }
  func.func @transform_11(%arg0: i32) -> (i32, i32) {
    %c0_i32 = arith.constant 0 : i32
    %c0_i32_0 = arith.constant 0 : i32
    %c0_i32_1 = arith.constant 0 : i32
    return %c0_i32, %c0_i32_0 : i32, i32
  }
  func.func @transform_12(%arg0: i32) -> (i32, i32) {
    %c0_i32 = arith.constant 0 : i32
    %c0_i32_0 = arith.constant 0 : i32
    %c0_i32_1 = arith.constant 0 : i32
    return %c0_i32, %c0_i32_0 : i32, i32
  }
  func.func @transform_13(%arg0: i32) -> (i32, i32) {
    %c0_i32 = arith.constant 0 : i32
    %c0_i32_0 = arith.constant 0 : i32
    %c0_i32_1 = arith.constant 0 : i32
    return %c0_i32, %c0_i32_0 : i32, i32
  }
  func.func @transform_14(%arg0: i32) -> (i32, i32) {
    %c0_i32 = arith.constant 0 : i32
    %c0_i32_0 = arith.constant 0 : i32
    %c0_i32_1 = arith.constant 0 : i32
    return %c0_i32, %c0_i32_0 : i32, i32
  }
  func.func @transform_15(%arg0: i32) -> (i32, i32) {
    %c0_i32 = arith.constant 0 : i32
    %c0_i32_0 = arith.constant 0 : i32
    %c0_i32_1 = arith.constant 0 : i32
    return %c0_i32, %c0_i32_0 : i32, i32
  }
  func.func @transform_16(%arg0: i32) -> (i32, i32) {
    %c0_i32 = arith.constant 0 : i32
    %c0_i32_0 = arith.constant 0 : i32
    %c0_i32_1 = arith.constant 0 : i32
    return %c0_i32, %c0_i32_0 : i32, i32
  }
  func.func @transform_17(%arg0: i32) -> (i32, i32, i32) {
    %c0_i32 = arith.constant 0 : i32
    %c0_i32_0 = arith.constant 0 : i32
    %c0_i32_1 = arith.constant 0 : i32
    %c0_i32_2 = arith.constant 0 : i32
    return %c0_i32, %c0_i32_0, %c0_i32_1 : i32, i32, i32
  }
  func.func @transform_18(%arg0: i32) -> (i32, i32, i32) {
    %c0_i32 = arith.constant 0 : i32
    %c0_i32_0 = arith.constant 0 : i32
    %c0_i32_1 = arith.constant 0 : i32
    %c0_i32_2 = arith.constant 0 : i32
    return %c0_i32, %c0_i32_0, %c0_i32_1 : i32, i32, i32
  }
  func.func @transform_19(%arg0: i32) -> (i32, i32, i32) {
    %c0_i32 = arith.constant 0 : i32
    %c0_i32_0 = arith.constant 0 : i32
    %c0_i32_1 = arith.constant 0 : i32
    return %arg0, %c0_i32, %c0_i32_0 : i32, i32, i32
  }
  func.func @transform_20(%arg0: i32) -> (i32, i32, i32) {
    %c0_i32 = arith.constant 0 : i32
    %c0_i32_0 = arith.constant 0 : i32
    %c0_i32_1 = arith.constant 0 : i32
    return %arg0, %c0_i32, %c0_i32_0 : i32, i32, i32
  }
  func.func @transform_21(%arg0: i32) -> (i32, i32, i32) {
    %c0_i32 = arith.constant 0 : i32
    %c0_i32_0 = arith.constant 0 : i32
    %c0_i32_1 = arith.constant 0 : i32
    return %arg0, %c0_i32, %c0_i32_0 : i32, i32, i32
  }
}

</mosaic_0001>

<llo_original>
// kernel: depthwise_afpn_forward.1
$region0: #{depthwise_afpn_forward.1}
  #allocation0 [shape = 'u32[]', space=smem, size = 0x4, offset = 0x4, fixed_abs, tag = 'smem constant byte address 0x4 - core index']
  #allocation1 [shape = 'u32[144,128]{1,0:T(1,128)}', space=vmem, size = 0x12000, scoped, tag = 'internal scratch']
  %s0 = inlined_call_operand.vmem [shape: f32[2,4,128], index: 0, kind: input, shape index: {}]
  %s1 = inlined_call_operand.vmem [shape: f32[2,4,256], index: 1, kind: input, shape index: {}]
  %s2 = inlined_call_operand.vmem [shape: f32[24,4], index: 2, kind: input, shape index: {}]
  %s3 = inlined_call_operand.vmem [shape: f32[24,1], index: 3, kind: input, shape index: {}]
  %s4 = inlined_call_operand.vmem [shape: f32[24,1], index: 4, kind: input, shape index: {}]
  %s5 = inlined_call_operand.vmem [shape: f32[24,9], index: 5, kind: input, shape index: {}]
  %s6 = inlined_call_operand.vmem [shape: f32[24,1], index: 6, kind: input, shape index: {}]
  %s7 = inlined_call_operand.vmem [shape: f32[24,1], index: 7, kind: input, shape index: {}]
  %s8 = inlined_call_operand.vmem [shape: f32[24,4], index: 8, kind: input, shape index: {}]
  %s9 = inlined_call_operand.vmem [shape: f32[24,1], index: 9, kind: input, shape index: {}]
  %s10 = inlined_call_operand.vmem [shape: f32[24,1], index: 10, kind: input, shape index: {}]
  %s11 = inlined_call_operand.vmem [shape: f32[24,9], index: 11, kind: input, shape index: {}]
  %s12 = inlined_call_operand.vmem [shape: f32[24,1], index: 12, kind: input, shape index: {}]
  %s13 = inlined_call_operand.vmem [shape: f32[24,1], index: 13, kind: input, shape index: {}]
  %s14 = inlined_call_operand.vmem [shape: f32[24,8], index: 14, kind: input, shape index: {}]
  %s15 = inlined_call_operand.vmem [shape: f32[24,1], index: 15, kind: input, shape index: {}]
  %s16 = inlined_call_operand.vmem [shape: f32[24,1], index: 16, kind: input, shape index: {}]
  %s17 = inlined_call_operand.vmem [shape: f32[3,2,8], index: 17, kind: input, shape index: {}]
  %s18 = inlined_call_operand.vmem [shape: f32[3,2,1], index: 18, kind: input, shape index: {}]
  %s19 = inlined_call_operand.vmem [shape: f32[2,1,256], index: 19, kind: output, shape index: {0}]
  %s20 = inlined_call_operand.vmem [shape: f32[2,2,256], index: 20, kind: output, shape index: {1}]
  %s21 = inlined_call_operand.vmem [shape: f32[2,2,256], index: 21, kind: output, shape index: {2}]
  %22 = xla_tuple %s19, %s20, %s21
  %s23 = sld [smem:[#allocation0]]
  $region125: #{depthwise_afpn_forward.1} parent=0
    _
  %s25 = ssub.s32 1, %s23
  %s26 = scalar_select 0, %s25, %s23
  loop: start=0, step=1, limit=4
  $region2: #{depthwise_afpn_forward.1} parent=0 // loop_pre_header
    _
  $region3: #{depthwise_afpn_forward.1} parent=0 // loop_header
    %s28 = sphi 0, %s32
    %p29 = scmp.ge.s32.totalorder %s28, 4
    %s38 = sphi 0, %s40
    %s41 = sphi 0, %s38
    %s42 = sphi 0, %s41
    %s58 = sphi 0, %s42
    %s64 = sphi 0, %s66
    %s67 = sphi 0, %s64
    %s68 = sphi 0, %s67
    %s84 = sphi 0, %s68
    %s88 = sphi 0, %s88
    %s90 = sphi 0, %s88
    %s91 = sphi 0, %s90
    %s105 = sphi 0, %s91
    %s109 = sphi 0, %s109
    %s111 = sphi 0, %s109
    %s112 = sphi 0, %s111
    %s126 = sphi 0, %s112
    %s130 = sphi 0, %s130
    %s132 = sphi 0, %s130
    %s133 = sphi 0, %s132
    %s147 = sphi 0, %s133
    %s151 = sphi 0, %s151
    %s153 = sphi 0, %s151
    %s154 = sphi 0, %s153
    %s168 = sphi 0, %s154
    %s172 = sphi 0, %s172
    %s174 = sphi 0, %s172
    %s175 = sphi 0, %s174
    %s189 = sphi 0, %s175
    %s193 = sphi 0, %s193
    %s195 = sphi 0, %s193
    %s196 = sphi 0, %s195
    %s210 = sphi 0, %s196
    %s214 = sphi 0, %s214
    %s216 = sphi 0, %s214
    %s217 = sphi 0, %s216
    %s231 = sphi 0, %s217
    %s235 = sphi 0, %s235
    %s237 = sphi 0, %s235
    %s238 = sphi 0, %s237
    %s252 = sphi 0, %s238
    %s256 = sphi 0, %s256
    %s258 = sphi 0, %s256
    %s259 = sphi 0, %s258
    %s273 = sphi 0, %s259
    %s277 = sphi 0, %s277
    %s279 = sphi 0, %s277
    %s280 = sphi 0, %s279
    %s294 = sphi 0, %s280
    %s298 = sphi 0, %s298
    %s300 = sphi 0, %s298
    %s301 = sphi 0, %s300
    %s315 = sphi 0, %s301
    %s319 = sphi 0, %s319
    %s321 = sphi 0, %s319
    %s322 = sphi 0, %s321
    %s336 = sphi 0, %s322
    %s340 = sphi 0, %s340
    %s342 = sphi 0, %s340
    %s343 = sphi 0, %s342
    %s357 = sphi 0, %s343
    %s361 = sphi 0, %s361
    %s363 = sphi 0, %s361
    %s364 = sphi 0, %s363
    %s378 = sphi 0, %s364
    %s382 = sphi 0, %s382
    %s384 = sphi 0, %s382
    %s385 = sphi 0, %s384
    %s399 = sphi 0, %s385
    %s403 = sphi 0, %s403
    %s405 = sphi 0, %s403
    %s406 = sphi 0, %s405
    %s420 = sphi 0, %s406
    %s424 = sphi 0, %s424
    %s426 = sphi 0, %s424
    %s427 = sphi 0, %s426
    %s441 = sphi 0, %s427
    %s447 = sphi 0, %s449
    %s450 = sphi 0, %s447
    %s451 = sphi 0, %s450
    %s467 = sphi 0, %s451
    %s473 = sphi 0, %s475
    %s476 = sphi 0, %s473
    %s477 = sphi 0, %s476
    %s493 = sphi 0, %s477
    %s499 = sphi 0, %s501
    %s502 = sphi 0, %s499
    %s503 = sphi 0, %s502
    %s519 = sphi 0, %s503
  $region4: #{depthwise_afpn_forward.1} parent=0 // loop_header_branch
    %31 = sbr.rel (%p29) target = $region8
  $region5: #{depthwise_afpn_forward.1} parent=0 // loop_body
    %s33 = ssub.s32 %s28, 1
    %s34 = ssub.s32 %s28, 2
    %s35 = sadd.s32 %s28, 1
    %s36 = ssub.s32 %s28, %s35
    %p37 = scmp.eq.s32.totalorder %s36, 0
    %s39 = sadd.s32 %s38, 1
    %s40 = scalar_select %p37, %s38, %s39
    %p43 = pneg %p37
    %p44 = scmp.eq.s32.totalorder %s28, 1
    %p45 = por %p43, %p44
    %p46 = scmp.ne.s32.totalorder %s38, %s41
    %p47 = scmp.eq.s32.totalorder %s28, 0
    %p48 = por %p46, %p47
    %p49 = scmp.ne.s32.totalorder %s38, %s41
    %p50 = scmp.eq.s32.totalorder %s33, 1
    %p51 = por %p49, %p50
    %p52 = scmp.ne.s32.totalorder %s41, %s42
    %p53 = scmp.eq.s32.totalorder %s33, 0
    %p54 = por %p52, %p53
    %p55 = scmp.ne.s32.totalorder %s41, %s42
    %p56 = scmp.eq.s32.totalorder %s34, 1
    %p57 = por %p55, %p56
    %p59 = scmp.ne.s32.totalorder %s42, %s58
    %p60 = scmp.eq.s32.totalorder %s34, 0
    %p61 = por %p59, %p60
    %s62 = ssub.s32 %s28, %s35
    %p63 = scmp.eq.s32.totalorder %s62, 0
    %s65 = sadd.s32 %s64, 1
    %s66 = scalar_select %p63, %s64, %s65
    %p69 = pneg %p63
    %p70 = scmp.eq.s32.totalorder %s28, 1
    %p71 = por %p69, %p70
    %p72 = scmp.ne.s32.totalorder %s64, %s67
    %p73 = scmp.eq.s32.totalorder %s28, 0
    %p74 = por %p72, %p73
    %p75 = scmp.ne.s32.totalorder %s64, %s67
    %p76 = scmp.eq.s32.totalorder %s33, 1
    %p77 = por %p75, %p76
    %p78 = scmp.ne.s32.totalorder %s67, %s68
    %p79 = scmp.eq.s32.totalorder %s33, 0
    %p80 = por %p78, %p79
    %p81 = scmp.ne.s32.totalorder %s67, %s68
    %p82 = scmp.eq.s32.totalorder %s34, 1
    %p83 = por %p81, %p82
    %p85 = scmp.ne.s32.totalorder %s68, %s84
    %p86 = scmp.eq.s32.totalorder %s34, 0
    %p87 = por %p85, %p86
    %s89 = sadd.s32 %s88, 1
    %p92 = scmp.eq.s32.totalorder %s28, 1
    %p93 = scmp.ne.s32.totalorder %s88, %s90
    %p94 = scmp.eq.s32.totalorder %s28, 0
    %p95 = por %p93, %p94
    %p96 = scmp.ne.s32.totalorder %s88, %s90
    %p97 = scmp.eq.s32.totalorder %s33, 1
    %p98 = por %p96, %p97
    %p99 = scmp.ne.s32.totalorder %s90, %s91
    %p100 = scmp.eq.s32.totalorder %s33, 0
    %p101 = por %p99, %p100
    %p102 = scmp.ne.s32.totalorder %s90, %s91
    %p103 = scmp.eq.s32.totalorder %s34, 1
    %p104 = por %p102, %p103
    %p106 = scmp.ne.s32.totalorder %s91, %s105
    %p107 = scmp.eq.s32.totalorder %s34, 0
    %p108 = por %p106, %p107
    %s110 = sadd.s32 %s109, 1
    %p113 = scmp.eq.s32.totalorder %s28, 1
    %p114 = scmp.ne.s32.totalorder %s109, %s111
    %p115 = scmp.eq.s32.totalorder %s28, 0
    %p116 = por %p114, %p115
    %p117 = scmp.ne.s32.totalorder %s109, %s111
    %p118 = scmp.eq.s32.totalorder %s33, 1
    %p119 = por %p117, %p118
    %p120 = scmp.ne.s32.totalorder %s111, %s112
    %p121 = scmp.eq.s32.totalorder %s33, 0
    %p122 = por %p120, %p121
    %p123 = scmp.ne.s32.totalorder %s111, %s112
    %p124 = scmp.eq.s32.totalorder %s34, 1
    %p125 = por %p123, %p124
    %p127 = scmp.ne.s32.totalorder %s112, %s126
    %p128 = scmp.eq.s32.totalorder %s34, 0
    %p129 = por %p127, %p128
    %s131 = sadd.s32 %s130, 1
    %p134 = scmp.eq.s32.totalorder %s28, 1
    %p135 = scmp.ne.s32.totalorder %s130, %s132
    %p136 = scmp.eq.s32.totalorder %s28, 0
    %p137 = por %p135, %p136
    %p138 = scmp.ne.s32.totalorder %s130, %s132
    %p139 = scmp.eq.s32.totalorder %s33, 1
    %p140 = por %p138, %p139
    %p141 = scmp.ne.s32.totalorder %s132, %s133
    %p142 = scmp.eq.s32.totalorder %s33, 0
    %p143 = por %p141, %p142
    %p144 = scmp.ne.s32.totalorder %s132, %s133
    %p145 = scmp.eq.s32.totalorder %s34, 1
    %p146 = por %p144, %p145
    %p148 = scmp.ne.s32.totalorder %s133, %s147
    %p149 = scmp.eq.s32.totalorder %s34, 0
    %p150 = por %p148, %p149
    %s152 = sadd.s32 %s151, 1
    %p155 = scmp.eq.s32.totalorder %s28, 1
    %p156 = scmp.ne.s32.totalorder %s151, %s153
    %p157 = scmp.eq.s32.totalorder %s28, 0
    %p158 = por %p156, %p157
    %p159 = scmp.ne.s32.totalorder %s151, %s153
    %p160 = scmp.eq.s32.totalorder %s33, 1
    %p161 = por %p159, %p160
    %p162 = scmp.ne.s32.totalorder %s153, %s154
    %p163 = scmp.eq.s32.totalorder %s33, 0
    %p164 = por %p162, %p163
    %p165 = scmp.ne.s32.totalorder %s153, %s154
    %p166 = scmp.eq.s32.totalorder %s34, 1
    %p167 = por %p165, %p166
    %p169 = scmp.ne.s32.totalorder %s154, %s168
    %p170 = scmp.eq.s32.totalorder %s34, 0
    %p171 = por %p169, %p170
    %s173 = sadd.s32 %s172, 1
    %p176 = scmp.eq.s32.totalorder %s28, 1
    %p177 = scmp.ne.s32.totalorder %s172, %s174
    %p178 = scmp.eq.s32.totalorder %s28, 0
    %p179 = por %p177, %p178
    %p180 = scmp.ne.s32.totalorder %s172, %s174
    %p181 = scmp.eq.s32.totalorder %s33, 1
    %p182 = por %p180, %p181
    %p183 = scmp.ne.s32.totalorder %s174, %s175
    %p184 = scmp.eq.s32.totalorder %s33, 0
    %p185 = por %p183, %p184
    %p186 = scmp.ne.s32.totalorder %s174, %s175
    %p187 = scmp.eq.s32.totalorder %s34, 1
    %p188 = por %p186, %p187
    %p190 = scmp.ne.s32.totalorder %s175, %s189
    %p191 = scmp.eq.s32.totalorder %s34, 0
    %p192 = por %p190, %p191
    %s194 = sadd.s32 %s193, 1
    %p197 = scmp.eq.s32.totalorder %s28, 1
    %p198 = scmp.ne.s32.totalorder %s193, %s195
    %p199 = scmp.eq.s32.totalorder %s28, 0
    %p200 = por %p198, %p199
    %p201 = scmp.ne.s32.totalorder %s193, %s195
    %p202 = scmp.eq.s32.totalorder %s33, 1
    %p203 = por %p201, %p202
    %p204 = scmp.ne.s32.totalorder %s195, %s196
    %p205 = scmp.eq.s32.totalorder %s33, 0
    %p206 = por %p204, %p205
    %p207 = scmp.ne.s32.totalorder %s195, %s196
    %p208 = scmp.eq.s32.totalorder %s34, 1
    %p209 = por %p207, %p208
    %p211 = scmp.ne.s32.totalorder %s196, %s210
    %p212 = scmp.eq.s32.totalorder %s34, 0
    %p213 = por %p211, %p212
    %s215 = sadd.s32 %s214, 1
    %p218 = scmp.eq.s32.totalorder %s28, 1
    %p219 = scmp.ne.s32.totalorder %s214, %s216
    %p220 = scmp.eq.s32.totalorder %s28, 0
    %p221 = por %p219, %p220
    %p222 = scmp.ne.s32.totalorder %s214, %s216
    %p223 = scmp.eq.s32.totalorder %s33, 1
    %p224 = por %p222, %p223
    %p225 = scmp.ne.s32.totalorder %s216, %s217
    %p226 = scmp.eq.s32.totalorder %s33, 0
    %p227 = por %p225, %p226
    %p228 = scmp.ne.s32.totalorder %s216, %s217
    %p229 = scmp.eq.s32.totalorder %s34, 1
    %p230 = por %p228, %p229
    %p232 = scmp.ne.s32.totalorder %s217, %s231
    %p233 = scmp.eq.s32.totalorder %s34, 0
    %p234 = por %p232, %p233
    %s236 = sadd.s32 %s235, 1
    %p239 = scmp.eq.s32.totalorder %s28, 1
    %p240 = scmp.ne.s32.totalorder %s235, %s237
    %p241 = scmp.eq.s32.totalorder %s28, 0
    %p242 = por %p240, %p241
    %p243 = scmp.ne.s32.totalorder %s235, %s237
    %p244 = scmp.eq.s32.totalorder %s33, 1
    %p245 = por %p243, %p244
    %p246 = scmp.ne.s32.totalorder %s237, %s238
    %p247 = scmp.eq.s32.totalorder %s33, 0
    %p248 = por %p246, %p247
    %p249 = scmp.ne.s32.totalorder %s237, %s238
    %p250 = scmp.eq.s32.totalorder %s34, 1
    %p251 = por %p249, %p250
    %p253 = scmp.ne.s32.totalorder %s238, %s252
    %p254 = scmp.eq.s32.totalorder %s34, 0
    %p255 = por %p253, %p254
    %s257 = sadd.s32 %s256, 1
    %p260 = scmp.eq.s32.totalorder %s28, 1
    %p261 = scmp.ne.s32.totalorder %s256, %s258
    %p262 = scmp.eq.s32.totalorder %s28, 0
    %p263 = por %p261, %p262
    %p264 = scmp.ne.s32.totalorder %s256, %s258
    %p265 = scmp.eq.s32.totalorder %s33, 1
    %p266 = por %p264, %p265
    %p267 = scmp.ne.s32.totalorder %s258, %s259
    %p268 = scmp.eq.s32.totalorder %s33, 0
    %p269 = por %p267, %p268
    %p270 = scmp.ne.s32.totalorder %s258, %s259
    %p271 = scmp.eq.s32.totalorder %s34, 1
    %p272 = por %p270, %p271
    %p274 = scmp.ne.s32.totalorder %s259, %s273
    %p275 = scmp.eq.s32.totalorder %s34, 0
    %p276 = por %p274, %p275
    %s278 = sadd.s32 %s277, 1
    %p281 = scmp.eq.s32.totalorder %s28, 1
    %p282 = scmp.ne.s32.totalorder %s277, %s279
    %p283 = scmp.eq.s32.totalorder %s28, 0
    %p284 = por %p282, %p283
    %p285 = scmp.ne.s32.totalorder %s277, %s279
    %p286 = scmp.eq.s32.totalorder %s33, 1
    %p287 = por %p285, %p286
    %p288 = scmp.ne.s32.totalorder %s279, %s280
    %p289 = scmp.eq.s32.totalorder %s33, 0
    %p290 = por %p288, %p289
    %p291 = scmp.ne.s32.totalorder %s279, %s280
    %p292 = scmp.eq.s32.totalorder %s34, 1
    %p293 = por %p291, %p292
    %p295 = scmp.ne.s32.totalorder %s280, %s294
    %p296 = scmp.eq.s32.totalorder %s34, 0
    %p297 = por %p295, %p296
    %s299 = sadd.s32 %s298, 1
    %p302 = scmp.eq.s32.totalorder %s28, 1
    %p303 = scmp.ne.s32.totalorder %s298, %s300
    %p304 = scmp.eq.s32.totalorder %s28, 0
    %p305 = por %p303, %p304
    %p306 = scmp.ne.s32.totalorder %s298, %s300
    %p307 = scmp.eq.s32.totalorder %s33, 1
    %p308 = por %p306, %p307
    %p309 = scmp.ne.s32.totalorder %s300, %s301
    %p310 = scmp.eq.s32.totalorder %s33, 0
    %p311 = por %p309, %p310
    %p312 = scmp.ne.s32.totalorder %s300, %s301
    %p313 = scmp.eq.s32.totalorder %s34, 1
    %p314 = por %p312, %p313
    %p316 = scmp.ne.s32.totalorder %s301, %s315
    %p317 = scmp.eq.s32.totalorder %s34, 0
    %p318 = por %p316, %p317
    %s320 = sadd.s32 %s319, 1
    %p323 = scmp.eq.s32.totalorder %s28, 1
    %p324 = scmp.ne.s32.totalorder %s319, %s321
    %p325 = scmp.eq.s32.totalorder %s28, 0
    %p326 = por %p324, %p325
    %p327 = scmp.ne.s32.totalorder %s319, %s321
    %p328 = scmp.eq.s32.totalorder %s33, 1
    %p329 = por %p327, %p328
    %p330 = scmp.ne.s32.totalorder %s321, %s322
    %p331 = scmp.eq.s32.totalorder %s33, 0
    %p332 = por %p330, %p331
    %p333 = scmp.ne.s32.totalorder %s321, %s322
    %p334 = scmp.eq.s32.totalorder %s34, 1
    %p335 = por %p333, %p334
    %p337 = scmp.ne.s32.totalorder %s322, %s336
    %p338 = scmp.eq.s32.totalorder %s34, 0
    %p339 = por %p337, %p338
    %s341 = sadd.s32 %s340, 1
    %p344 = scmp.eq.s32.totalorder %s28, 1
    %p345 = scmp.ne.s32.totalorder %s340, %s342
    %p346 = scmp.eq.s32.totalorder %s28, 0
    %p347 = por %p345, %p346
    %p348 = scmp.ne.s32.totalorder %s340, %s342
    %p349 = scmp.eq.s32.totalorder %s33, 1
    %p350 = por %p348, %p349
    %p351 = scmp.ne.s32.totalorder %s342, %s343
    %p352 = scmp.eq.s32.totalorder %s33, 0
    %p353 = por %p351, %p352
    %p354 = scmp.ne.s32.totalorder %s342, %s343
    %p355 = scmp.eq.s32.totalorder %s34, 1
    %p356 = por %p354, %p355
    %p358 = scmp.ne.s32.totalorder %s343, %s357
    %p359 = scmp.eq.s32.totalorder %s34, 0
    %p360 = por %p358, %p359
    %s362 = sadd.s32 %s361, 1
    %p365 = scmp.eq.s32.totalorder %s28, 1
    %p366 = scmp.ne.s32.totalorder %s361, %s363
    %p367 = scmp.eq.s32.totalorder %s28, 0
    %p368 = por %p366, %p367
    %p369 = scmp.ne.s32.totalorder %s361, %s363
    %p370 = scmp.eq.s32.totalorder %s33, 1
    %p371 = por %p369, %p370
    %p372 = scmp.ne.s32.totalorder %s363, %s364
    %p373 = scmp.eq.s32.totalorder %s33, 0
    %p374 = por %p372, %p373
    %p375 = scmp.ne.s32.totalorder %s363, %s364
    %p376 = scmp.eq.s32.totalorder %s34, 1
    %p377 = por %p375, %p376
    %p379 = scmp.ne.s32.totalorder %s364, %s378
    %p380 = scmp.eq.s32.totalorder %s34, 0
    %p381 = por %p379, %p380
    %s383 = sadd.s32 %s382, 1
    %p386 = scmp.eq.s32.totalorder %s28, 1
    %p387 = scmp.ne.s32.totalorder %s382, %s384
    %p388 = scmp.eq.s32.totalorder %s28, 0
    %p389 = por %p387, %p388
    %p390 = scmp.ne.s32.totalorder %s382, %s384
    %p391 = scmp.eq.s32.totalorder %s33, 1
    %p392 = por %p390, %p391
    %p393 = scmp.ne.s32.totalorder %s384, %s385
    %p394 = scmp.eq.s32.totalorder %s33, 0
    %p395 = por %p393, %p394
    %p396 = scmp.ne.s32.totalorder %s384, %s385
    %p397 = scmp.eq.s32.totalorder %s34, 1
    %p398 = por %p396, %p397
    %p400 = scmp.ne.s32.totalorder %s385, %s399
    %p401 = scmp.eq.s32.totalorder %s34, 0
    %p402 = por %p400, %p401
    %s404 = sadd.s32 %s403, 1
    %p407 = scmp.eq.s32.totalorder %s28, 1
    %p408 = scmp.ne.s32.totalorder %s403, %s405
    %p409 = scmp.eq.s32.totalorder %s28, 0
    %p410 = por %p408, %p409
    %p411 = scmp.ne.s32.totalorder %s403, %s405
    %p412 = scmp.eq.s32.totalorder %s33, 1
    %p413 = por %p411, %p412
    %p414 = scmp.ne.s32.totalorder %s405, %s406
    %p415 = scmp.eq.s32.totalorder %s33, 0
    %p416 = por %p414, %p415
    %p417 = scmp.ne.s32.totalorder %s405, %s406
    %p418 = scmp.eq.s32.totalorder %s34, 1
    %p419 = por %p417, %p418
    %p421 = scmp.ne.s32.totalorder %s406, %s420
    %p422 = scmp.eq.s32.totalorder %s34, 0
    %p423 = por %p421, %p422
    %s425 = sadd.s32 %s424, 1
    %p428 = scmp.eq.s32.totalorder %s28, 1
    %p429 = scmp.ne.s32.totalorder %s424, %s426
    %p430 = scmp.eq.s32.totalorder %s28, 0
    %p431 = por %p429, %p430
    %p432 = scmp.ne.s32.totalorder %s424, %s426
    %p433 = scmp.eq.s32.totalorder %s33, 1
    %p434 = por %p432, %p433
    %p435 = scmp.ne.s32.totalorder %s426, %s427
    %p436 = scmp.eq.s32.totalorder %s33, 0
    %p437 = por %p435, %p436
    %p438 = scmp.ne.s32.totalorder %s426, %s427
    %p439 = scmp.eq.s32.totalorder %s34, 1
    %p440 = por %p438, %p439
    %p442 = scmp.ne.s32.totalorder %s427, %s441
    %p443 = scmp.eq.s32.totalorder %s34, 0
    %p444 = por %p442, %p443
    %s445 = ssub.s32 %s28, %s35
    %p446 = scmp.eq.s32.totalorder %s445, 0
    %s448 = sadd.s32 %s447, 1
    %s449 = scalar_select %p446, %s447, %s448
    %p452 = pneg %p446
    %p453 = scmp.eq.s32.totalorder %s28, 1
    %p454 = por %p452, %p453
    %p455 = scmp.ne.s32.totalorder %s447, %s450
    %p456 = scmp.eq.s32.totalorder %s28, 0
    %p457 = por %p455, %p456
    %p458 = scmp.ne.s32.totalorder %s447, %s450
    %p459 = scmp.eq.s32.totalorder %s33, 1
    %p460 = por %p458, %p459
    %p461 = scmp.ne.s32.totalorder %s450, %s451
    %p462 = scmp.eq.s32.totalorder %s33, 0
    %p463 = por %p461, %p462
    %p464 = scmp.ne.s32.totalorder %s450, %s451
    %p465 = scmp.eq.s32.totalorder %s34, 1
    %p466 = por %p464, %p465
    %p468 = scmp.ne.s32.totalorder %s451, %s467
    %p469 = scmp.eq.s32.totalorder %s34, 0
    %p470 = por %p468, %p469
    %s471 = ssub.s32 %s28, %s35
    %p472 = scmp.eq.s32.totalorder %s471, 0
    %s474 = sadd.s32 %s473, 1
    %s475 = scalar_select %p472, %s473, %s474
    %p478 = pneg %p472
    %p479 = scmp.eq.s32.totalorder %s28, 1
    %p480 = por %p478, %p479
    %p481 = scmp.ne.s32.totalorder %s473, %s476
    %p482 = scmp.eq.s32.totalorder %s28, 0
    %p483 = por %p481, %p482
    %p484 = scmp.ne.s32.totalorder %s473, %s476
    %p485 = scmp.eq.s32.totalorder %s33, 1
    %p486 = por %p484, %p485
    %p487 = scmp.ne.s32.totalorder %s476, %s477
    %p488 = scmp.eq.s32.totalorder %s33, 0
    %p489 = por %p487, %p488
    %p490 = scmp.ne.s32.totalorder %s476, %s477
    %p491 = scmp.eq.s32.totalorder %s34, 1
    %p492 = por %p490, %p491
    %p494 = scmp.ne.s32.totalorder %s477, %s493
    %p495 = scmp.eq.s32.totalorder %s34, 0
    %p496 = por %p494, %p495
    %s497 = ssub.s32 %s28, %s35
    %p498 = scmp.eq.s32.totalorder %s497, 0
    %s500 = sadd.s32 %s499, 1
    %s501 = scalar_select %p498, %s499, %s500
    %p504 = pneg %p498
    %p505 = scmp.eq.s32.totalorder %s28, 1
    %p506 = por %p504, %p505
    %p507 = scmp.ne.s32.totalorder %s499, %s502
    %p508 = scmp.eq.s32.totalorder %s28, 0
    %p509 = por %p507, %p508
    %p510 = scmp.ne.s32.totalorder %s499, %s502
    %p511 = scmp.eq.s32.totalorder %s33, 1
    %p512 = por %p510, %p511
    %p513 = scmp.ne.s32.totalorder %s502, %s503
    %p514 = scmp.eq.s32.totalorder %s33, 0
    %p515 = por %p513, %p514
    %p516 = scmp.ne.s32.totalorder %s502, %s503
    %p517 = scmp.eq.s32.totalorder %s34, 1
    %p518 = por %p516, %p517
    %p520 = scmp.ne.s32.totalorder %s503, %s519
    %p521 = scmp.eq.s32.totalorder %s34, 0
    %p522 = por %p520, %p521
    %p523 = scmp.le.s32.totalorder 1, %s28
    %p524 = scmp.lt.s32.totalorder %s28, 3
    %p525 = pnand %p523, %p524
    %p526 = pneg %p525
    // Predicated region
    $region9: #{depthwise_afpn_forward.1} parent=5 // pred_check
      _
    $region10: #{depthwise_afpn_forward.1} parent=5 // pred_check_branch
      %528 = sbr.rel (%p525) target = $region12
    $region11: #{depthwise_afpn_forward.1} parent=5 // pred_region
      %s529 = ssub.s32 %s28, 1
      // Predicated region
      $region13: #{depthwise_afpn_forward.1} parent=11 // pred_check
        %p530 = pneg %p101
      $region14: #{depthwise_afpn_forward.1} parent=11 // pred_check_branch
        %532 = sbr.rel (%p530) target = $region16
      $region15: #{depthwise_afpn_forward.1} parent=11 // pred_region
        _
      $region16: #{depthwise_afpn_forward.1} parent=11 // pred_fallthru
        _
      // Predicated region
      $region17: #{depthwise_afpn_forward.1} parent=11 // pred_check
        %p533 = pneg %p122
      $region18: #{depthwise_afpn_forward.1} parent=11 // pred_check_branch
        %535 = sbr.rel (%p533) target = $region20
      $region19: #{depthwise_afpn_forward.1} parent=11 // pred_region
        _
      $region20: #{depthwise_afpn_forward.1} parent=11 // pred_fallthru
        _
      // Predicated region
      $region21: #{depthwise_afpn_forward.1} parent=11 // pred_check
        %p536 = pneg %p143
      $region22: #{depthwise_afpn_forward.1} parent=11 // pred_check_branch
        %538 = sbr.rel (%p536) target = $region24
      $region23: #{depthwise_afpn_forward.1} parent=11 // pred_region
        _
      $region24: #{depthwise_afpn_forward.1} parent=11 // pred_fallthru
        _
      // Predicated region
      $region25: #{depthwise_afpn_forward.1} parent=11 // pred_check
        %p539 = pneg %p164
      $region26: #{depthwise_afpn_forward.1} parent=11 // pred_check_branch
        %541 = sbr.rel (%p539) target = $region28
      $region27: #{depthwise_afpn_forward.1} parent=11 // pred_region
        _
      $region28: #{depthwise_afpn_forward.1} parent=11 // pred_fallthru
        _
      // Predicated region
      $region29: #{depthwise_afpn_forward.1} parent=11 // pred_check
        %p542 = pneg %p185
      $region30: #{depthwise_afpn_forward.1} parent=11 // pred_check_branch
        %544 = sbr.rel (%p542) target = $region32
      $region31: #{depthwise_afpn_forward.1} parent=11 // pred_region
        _
      $region32: #{depthwise_afpn_forward.1} parent=11 // pred_fallthru
        _
      // Predicated region
      $region33: #{depthwise_afpn_forward.1} parent=11 // pred_check
        %p545 = pneg %p206
      $region34: #{depthwise_afpn_forward.1} parent=11 // pred_check_branch
        %547 = sbr.rel (%p545) target = $region36
      $region35: #{depthwise_afpn_forward.1} parent=11 // pred_region
        _
      $region36: #{depthwise_afpn_forward.1} parent=11 // pred_fallthru
        _
      // Predicated region
      $region37: #{depthwise_afpn_forward.1} parent=11 // pred_check
        %p548 = pneg %p227
      $region38: #{depthwise_afpn_forward.1} parent=11 // pred_check_branch
        %550 = sbr.rel (%p548) target = $region40
      $region39: #{depthwise_afpn_forward.1} parent=11 // pred_region
        _
      $region40: #{depthwise_afpn_forward.1} parent=11 // pred_fallthru
        _
      // Predicated region
      $region41: #{depthwise_afpn_forward.1} parent=11 // pred_check
        %p551 = pneg %p248
      $region42: #{depthwise_afpn_forward.1} parent=11 // pred_check_branch
        %553 = sbr.rel (%p551) target = $region44
      $region43: #{depthwise_afpn_forward.1} parent=11 // pred_region
        _
      $region44: #{depthwise_afpn_forward.1} parent=11 // pred_fallthru
        _
      // Predicated region
      $region45: #{depthwise_afpn_forward.1} parent=11 // pred_check
        %p554 = pneg %p269
      $region46: #{depthwise_afpn_forward.1} parent=11 // pred_check_branch
        %556 = sbr.rel (%p554) target = $region48
      $region47: #{depthwise_afpn_forward.1} parent=11 // pred_region
        _
      $region48: #{depthwise_afpn_forward.1} parent=11 // pred_fallthru
        _
      // Predicated region
      $region49: #{depthwise_afpn_forward.1} parent=11 // pred_check
        %p557 = pneg %p290
      $region50: #{depthwise_afpn_forward.1} parent=11 // pred_check_branch
        %559 = sbr.rel (%p557) target = $region52
      $region51: #{depthwise_afpn_forward.1} parent=11 // pred_region
        _
      $region52: #{depthwise_afpn_forward.1} parent=11 // pred_fallthru
        _
      // Predicated region
      $region53: #{depthwise_afpn_forward.1} parent=11 // pred_check
        %p560 = pneg %p311
      $region54: #{depthwise_afpn_forward.1} parent=11 // pred_check_branch
        %562 = sbr.rel (%p560) target = $region56
      $region55: #{depthwise_afpn_forward.1} parent=11 // pred_region
        _
      $region56: #{depthwise_afpn_forward.1} parent=11 // pred_fallthru
        _
      // Predicated region
      $region57: #{depthwise_afpn_forward.1} parent=11 // pred_check
        %p563 = pneg %p332
      $region58: #{depthwise_afpn_forward.1} parent=11 // pred_check_branch
        %565 = sbr.rel (%p563) target = $region60
      $region59: #{depthwise_afpn_forward.1} parent=11 // pred_region
        _
      $region60: #{depthwise_afpn_forward.1} parent=11 // pred_fallthru
        _
      // Predicated region
      $region61: #{depthwise_afpn_forward.1} parent=11 // pred_check
        %p566 = pneg %p353
      $region62: #{depthwise_afpn_forward.1} parent=11 // pred_check_branch
        %568 = sbr.rel (%p566) target = $region64
      $region63: #{depthwise_afpn_forward.1} parent=11 // pred_region
        _
      $region64: #{depthwise_afpn_forward.1} parent=11 // pred_fallthru
        _
      // Predicated region
      $region65: #{depthwise_afpn_forward.1} parent=11 // pred_check
        %p569 = pneg %p374
      $region66: #{depthwise_afpn_forward.1} parent=11 // pred_check_branch
        %571 = sbr.rel (%p569) target = $region68
      $region67: #{depthwise_afpn_forward.1} parent=11 // pred_region
        _
      $region68: #{depthwise_afpn_forward.1} parent=11 // pred_fallthru
        _
      // Predicated region
      $region69: #{depthwise_afpn_forward.1} parent=11 // pred_check
        %p572 = pneg %p395
      $region70: #{depthwise_afpn_forward.1} parent=11 // pred_check_branch
        %574 = sbr.rel (%p572) target = $region72
      $region71: #{depthwise_afpn_forward.1} parent=11 // pred_region
        _
      $region72: #{depthwise_afpn_forward.1} parent=11 // pred_fallthru
        _
      // Predicated region
      $region73: #{depthwise_afpn_forward.1} parent=11 // pred_check
        %p575 = pneg %p416
      $region74: #{depthwise_afpn_forward.1} parent=11 // pred_check_branch
        %577 = sbr.rel (%p575) target = $region76
      $region75: #{depthwise_afpn_forward.1} parent=11 // pred_region
        _
      $region76: #{depthwise_afpn_forward.1} parent=11 // pred_fallthru
        _
      // Predicated region
      $region77: #{depthwise_afpn_forward.1} parent=11 // pred_check
        %p578 = pneg %p437
      $region78: #{depthwise_afpn_forward.1} parent=11 // pred_check_branch
        %580 = sbr.rel (%p578) target = $region80
      $region79: #{depthwise_afpn_forward.1} parent=11 // pred_region
        _
      $region80: #{depthwise_afpn_forward.1} parent=11 // pred_fallthru
        _
    $region12: #{depthwise_afpn_forward.1} parent=5 // pred_fallthru
      _
    %p581 = scmp.lt.s32.totalorder %s28, 2
    // Predicated region
    $region81: #{depthwise_afpn_forward.1} parent=5 // pred_check
      %p582 = pneg %p581
    $region82: #{depthwise_afpn_forward.1} parent=5 // pred_check_branch
      %584 = sbr.rel (%p582) target = $region84
    $region83: #{depthwise_afpn_forward.1} parent=5 // pred_region
      // Predicated region
      $region85: #{depthwise_afpn_forward.1} parent=83 // pred_check
        %p585 = pneg %p48
      $region86: #{depthwise_afpn_forward.1} parent=83 // pred_check_branch
        %587 = sbr.rel (%p585) target = $region88
      $region87: #{depthwise_afpn_forward.1} parent=83 // pred_region
        %p588 = scmp.lt.s32.totalorder %s28, 1
        %s589 = scalar_select %p588, %s28, 1
        %s590 = smul.addr %s589, 4
        %s591 = scalar_lea.vmem %s0, %s590
      $region88: #{depthwise_afpn_forward.1} parent=83 // pred_fallthru
        _
      // Predicated region
      $region89: #{depthwise_afpn_forward.1} parent=83 // pred_check
        %p592 = pneg %p74
      $region90: #{depthwise_afpn_forward.1} parent=83 // pred_check_branch
        %594 = sbr.rel (%p592) target = $region92
      $region91: #{depthwise_afpn_forward.1} parent=83 // pred_region
        %p595 = scmp.lt.s32.totalorder %s28, 1
        %s596 = scalar_select %p595, %s28, 1
        %s597 = smul.addr %s596, 2
        %s598 = smul.addr %s597, 4
        %s599 = scalar_lea.vmem %s1, %s598
      $region92: #{depthwise_afpn_forward.1} parent=83 // pred_fallthru
        _
    $region84: #{depthwise_afpn_forward.1} parent=5 // pred_fallthru
      _
    %p600 = scmp.le.s32.totalorder 1, %s28
    %p601 = scmp.lt.s32.totalorder %s28, 3
    %p602 = pnand %p600, %p601
    %p603 = pneg %p602
    // Predicated region
    $region93: #{depthwise_afpn_forward.1} parent=5 // pred_check
      _
    $region94: #{depthwise_afpn_forward.1} parent=5 // pred_check_branch
      %605 = sbr.rel (%p602) target = $region96
    $region95: #{depthwise_afpn_forward.1} parent=5 // pred_region
      %s606 = ssub.s32 %s28, 1
      %p607 = scmp.lt.s32.totalorder %s33, 1
      %s608 = scalar_select %p607, %s33, 1
      %s609 = smul.addr %s608, 4
      %s610 = scalar_lea.vmem %s0, %s609
      %p611 = pneg %p54
      %p612 = pneg %p51
      %p613 = scmp.lt.s32.totalorder %s33, 1
      %s614 = scalar_select %p613, %s33, 1
      %s615 = smul.addr %s614, 2
      %s616 = smul.addr %s615, 4
      %s617 = scalar_lea.vmem %s1, %s616
      %p618 = pneg %p80
      %p619 = pneg %p77
      %p620 = pneg %p101
      %p621 = pneg %p98
      %p622 = pneg %p122
      %p623 = pneg %p119
      %p624 = pneg %p143
      %p625 = pneg %p140
      %p626 = pneg %p164
      %p627 = pneg %p161
      %p628 = pneg %p185
      %p629 = pneg %p182
      %p630 = pneg %p206
      %p631 = pneg %p203
      %p632 = pneg %p227
      %p633 = pneg %p224
      %p634 = pneg %p248
      %p635 = pneg %p245
      %p636 = pneg %p269
      %p637 = pneg %p266
      %p638 = pneg %p290
      %p639 = pneg %p287
      %p640 = pneg %p311
      %p641 = pneg %p308
      %p642 = pneg %p332
      %p643 = pneg %p329
      %p644 = pneg %p353
      %p645 = pneg %p350
      %p646 = pneg %p374
      %p647 = pneg %p371
      %p648 = pneg %p395
      %p649 = pneg %p392
      %p650 = pneg %p416
      %p651 = pneg %p413
      %p652 = pneg %p437
      %p653 = pneg %p434
      %p654 = pneg %p463
      %p655 = pneg %p460
      %p656 = scmp.lt.s32.totalorder %s33, 1
      %s657 = scalar_select %p656, %s33, 1
      %s658 = smul.addr %s657, 2
      %s659 = scalar_lea.vmem %s19, %s658
      %p660 = pneg %p489
      %p661 = pneg %p486
      %p662 = scmp.lt.s32.totalorder %s33, 1
      %s663 = scalar_select %p662, %s33, 1
      %s664 = smul.addr %s663, 2
      %s665 = smul.addr %s664, 2
      %s666 = scalar_lea.vmem %s20, %s665
      %p667 = pneg %p515
      %p668 = pneg %p512
      %p669 = scmp.lt.s32.totalorder %s33, 1
      %s670 = scalar_select %p669, %s33, 1
      %s671 = smul.addr %s670, 2
      %s672 = smul.addr %s671, 2
      %s673 = scalar_lea.vmem %s21, %s672
      %p674 = scmp.lt.s32.totalorder %s33, 1
      %s675 = scalar_select %p674, %s33, 1
      %s676 = smul.addr %s675, 4
      %s677 = scalar_lea.vmem %s0, %s676
      %p678 = scmp.lt.s32.totalorder %s33, 1
      %s679 = scalar_select %p678, %s33, 1
      %s680 = smul.addr %s679, 2
      %s681 = smul.addr %s680, 4
      %s682 = scalar_lea.vmem %s1, %s681
      %p683 = scmp.lt.s32.totalorder %s33, 1
      %s684 = scalar_select %p683, %s33, 1
      %s685 = smul.addr %s684, 2
      %s686 = scalar_lea.vmem %s19, %s685
      %p687 = scmp.lt.s32.totalorder %s33, 1
      %s688 = scalar_select %p687, %s33, 1
      %s689 = smul.addr %s688, 2
      %s690 = smul.addr %s689, 2
      %s691 = scalar_lea.vmem %s20, %s690
      %p692 = scmp.lt.s32.totalorder %s33, 1
      %s693 = scalar_select %p692, %s33, 1
      %s694 = smul.addr %s693, 2
      %s695 = smul.addr %s694, 2
      %s696 = scalar_lea.vmem %s21, %s695
      %v697 = vld [vmem:[%s677] sm:$0xf]
      %v698 = vld [vmem:[%s2] sm:$0xff]
      %v699 = vld [vmem:[%s2 + $0x8] sm:$0xff]
      %v700 = vld [vmem:[%s2 + $0x10] sm:$0xff]
      %702 = vset.pattern.permute.xlu0 0
      %703 = vperm.xlu0 %702, %v698
      %v704 = vpop.permute.xlu0 %703
      %707 = vset.pattern.permute.xlu0 0
      %708 = vperm.xlu0 %707, %v699
      %v709 = vpop.permute.xlu0 %708
      %712 = vset.pattern.permute.xlu0 0
      %713 = vperm.xlu0 %712, %v700
      %v714 = vpop.permute.xlu0 %713
      %v716 = vlaneseq
      %v717 = vshrl.u32 %v716, 7
      %v718 = vsub.s32 0, %v717
      %v719 = vrot.slane %v697, %v718
      %v720 = vmul.f32 %v704, %v719
      %v721 = vmul.f32 %v709, %v719
      %v722 = vmul.f32 %v714, %v719
      %723 = vset.pattern.permute.xlu0 1
      %724 = vperm.xlu0 %723, %v698
      %v725 = vpop.permute.xlu0 %724
      %727 = vset.pattern.permute.xlu0 1
      %728 = vperm.xlu0 %727, %v699
      %v729 = vpop.permute.xlu0 %728
      %731 = vset.pattern.permute.xlu0 1
      %732 = vperm.xlu0 %731, %v700
      %v733 = vpop.permute.xlu0 %732
      %v735 = vlaneseq
      %v736 = vshrl.u32 %v735, 7
      %v737 = vsub.s32 1, %v736
      %v738 = vrot.slane %v697, %v737
      %v739 = vmul.f32 %v725, %v738
      %v740 = vmul.f32 %v729, %v738
      %v741 = vmul.f32 %v733, %v738
      %v742 = vadd.f32 %v720, %v739
      %v743 = vadd.f32 %v721, %v740
      %v744 = vadd.f32 %v722, %v741
      %745 = vset.pattern.permute.xlu0 2
      %746 = vperm.xlu0 %745, %v698
      %v747 = vpop.permute.xlu0 %746
      %749 = vset.pattern.permute.xlu0 2
      %750 = vperm.xlu0 %749, %v699
      %v751 = vpop.permute.xlu0 %750
      %753 = vset.pattern.permute.xlu0 2
      %754 = vperm.xlu0 %753, %v700
      %v755 = vpop.permute.xlu0 %754
      %v757 = vlaneseq
      %v758 = vshrl.u32 %v757, 7
      %v759 = vsub.s32 2, %v758
      %v760 = vrot.slane %v697, %v759
      %v761 = vmul.f32 %v747, %v760
      %v762 = vmul.f32 %v751, %v760
      %v763 = vmul.f32 %v755, %v760
      %v764 = vadd.f32 %v742, %v761
      %v765 = vadd.f32 %v743, %v762
      %v766 = vadd.f32 %v744, %v763
      %767 = vset.pattern.permute.xlu0 3
      %768 = vperm.xlu0 %767, %v698
      %v769 = vpop.permute.xlu0 %768
      %771 = vset.pattern.permute.xlu0 3
      %772 = vperm.xlu0 %771, %v699
      %v773 = vpop.permute.xlu0 %772
      %775 = vset.pattern.permute.xlu0 3
      %776 = vperm.xlu0 %775, %v700
      %v777 = vpop.permute.xlu0 %776
      %v779 = vlaneseq
      %v780 = vshrl.u32 %v779, 7
      %v781 = vsub.s32 3, %v780
      %v782 = vrot.slane %v697, %v781
      %v783 = vmul.f32 %v769, %v782
      %v784 = vmul.f32 %v773, %v782
      %v785 = vmul.f32 %v777, %v782
      %v786 = vadd.f32 %v764, %v783
      %v787 = vadd.f32 %v765, %v784
      %v788 = vadd.f32 %v766, %v785
      %v789 = vld [vmem:[%s3] sm:$0xff]
      %v790 = vld [vmem:[%s3 + $0x8] sm:$0xff]
      %v791 = vld [vmem:[%s3 + $0x10] sm:$0xff]
      %793 = vset.pattern.permute.xlu0 0
      %794 = vperm.xlu0 %793, %v789
      %v795 = vpop.permute.xlu0 %794
      %798 = vset.pattern.permute.xlu0 0
      %799 = vperm.xlu0 %798, %v790
      %v800 = vpop.permute.xlu0 %799
      %803 = vset.pattern.permute.xlu0 0
      %804 = vperm.xlu0 %803, %v791
      %v805 = vpop.permute.xlu0 %804
      %v807 = vmul.f32 %v786, %v795
      %v808 = vmul.f32 %v787, %v800
      %v809 = vmul.f32 %v788, %v805
      %v810 = vld [vmem:[%s4] sm:$0xff]
      %v811 = vld [vmem:[%s4 + $0x8] sm:$0xff]
      %v812 = vld [vmem:[%s4 + $0x10] sm:$0xff]
      %814 = vset.pattern.permute.xlu0 0
      %815 = vperm.xlu0 %814, %v810
      %v816 = vpop.permute.xlu0 %815
      %819 = vset.pattern.permute.xlu0 0
      %820 = vperm.xlu0 %819, %v811
      %v821 = vpop.permute.xlu0 %820
      %824 = vset.pattern.permute.xlu0 0
      %825 = vperm.xlu0 %824, %v812
      %v826 = vpop.permute.xlu0 %825
      %v828 = vadd.f32 %v807, %v816
      %v829 = vadd.f32 %v808, %v821
      %v830 = vadd.f32 %v809, %v826
      %v831 = vmax.f32 %v828, 0.0
      %v832 = vmax.f32 %v829, 0.0
      %v833 = vmax.f32 %v830, 0.0
      %v834 = vld [vmem:[%s5] sm:$0xff]
      %v835 = vld [vmem:[%s5 + $0x8] sm:$0xff]
      %v836 = vld [vmem:[%s5 + $0x10] sm:$0xff]
      %838 = vset.pattern.permute.xlu0 0
      %839 = vperm.xlu0 %838, %v834
      %v840 = vpop.permute.xlu0 %839
      %843 = vset.pattern.permute.xlu0 0
      %844 = vperm.xlu0 %843, %v835
      %v845 = vpop.permute.xlu0 %844
      %848 = vset.pattern.permute.xlu0 0
      %849 = vperm.xlu0 %848, %v836
      %v850 = vpop.permute.xlu0 %849
      %v852 = vmul.f32 %v831, %v840
      %v853 = vmul.f32 %v832, %v845
      %v854 = vmul.f32 %v833, %v850
      %v855 = vadd.f32 %v852, 0.0
      %v856 = vadd.f32 %v853, 0.0
      %v857 = vadd.f32 %v854, 0.0
      %858 = vset.pattern.permute.xlu0 1
      %859 = vperm.xlu0 %858, %v834
      %v860 = vpop.permute.xlu0 %859
      %862 = vset.pattern.permute.xlu0 1
      %863 = vperm.xlu0 %862, %v835
      %v864 = vpop.permute.xlu0 %863
      %866 = vset.pattern.permute.xlu0 1
      %867 = vperm.xlu0 %866, %v836
      %v868 = vpop.permute.xlu0 %867
      %v870 = vmul.f32 %v831, %v860
      %v871 = vmul.f32 %v860, 0.0
      %v872 = vmul.f32 %v832, %v864
      %v873 = vmul.f32 %v864, 0.0
      %v874 = vmul.f32 %v833, %v868
      %v875 = vmul.f32 %v868, 0.0
      %882 = vrot.lane.b32.xlu0 %v870, 127
      %v883 = vpop.permute.xlu0 %882
      %884 = vrot.lane.b32.xlu0 %v871, 127
      %v885 = vpop.permute.xlu0 %884
      %886 = vrot.lane.b32.xlu0 %v872, 127
      %v887 = vpop.permute.xlu0 %886
      %888 = vrot.lane.b32.xlu0 %v873, 127
      %v889 = vpop.permute.xlu0 %888
      %890 = vrot.lane.b32.xlu0 %v874, 127
      %v891 = vpop.permute.xlu0 %890
      %892 = vrot.lane.b32.xlu0 %v875, 127
      %v893 = vpop.permute.xlu0 %892
      %vm894 = vcmask 1039360
      %v895 = vsel %vm894, %v883, %v885
      %v896 = vsel %vm894, %v887, %v889
      %v897 = vsel %vm894, %v891, %v893
      %v901 = vadd.f32 %v855, %v895
      %v902 = vadd.f32 %v856, %v896
      %v903 = vadd.f32 %v857, %v897
      %904 = vset.pattern.permute.xlu0 2
      %905 = vperm.xlu0 %904, %v834
      %v906 = vpop.permute.xlu0 %905
      %908 = vset.pattern.permute.xlu0 2
      %909 = vperm.xlu0 %908, %v835
      %v910 = vpop.permute.xlu0 %909
      %912 = vset.pattern.permute.xlu0 2
      %913 = vperm.xlu0 %912, %v836
      %v914 = vpop.permute.xlu0 %913
      %v916 = vmul.f32 %v831, %v906
      %v917 = vmul.f32 %v906, 0.0
      %v918 = vmul.f32 %v832, %v910
      %v919 = vmul.f32 %v910, 0.0
      %v920 = vmul.f32 %v833, %v914
      %v921 = vmul.f32 %v914, 0.0
      %928 = vrot.lane.b32.xlu0 %v916, 126
      %v929 = vpop.permute.xlu0 %928
      %930 = vrot.lane.b32.xlu0 %v917, 126
      %v931 = vpop.permute.xlu0 %930
      %932 = vrot.lane.b32.xlu0 %v918, 126
      %v933 = vpop.permute.xlu0 %932
      %934 = vrot.lane.b32.xlu0 %v919, 126
      %v935 = vpop.permute.xlu0 %934
      %936 = vrot.lane.b32.xlu0 %v920, 126
      %v937 = vpop.permute.xlu0 %936
      %938 = vrot.lane.b32.xlu0 %v921, 126
      %v939 = vpop.permute.xlu0 %938
      %vm940 = vcmask 1031168
      %v941 = vsel %vm940, %v929, %v931
      %v942 = vsel %vm940, %v933, %v935
      %v943 = vsel %vm940, %v937, %v939
      %v947 = vadd.f32 %v901, %v941
      %v948 = vadd.f32 %v902, %v942
      %v949 = vadd.f32 %v903, %v943
      %950 = vset.pattern.permute.xlu0 3
      %951 = vperm.xlu0 %950, %v834
      %v952 = vpop.permute.xlu0 %951
      %954 = vset.pattern.permute.xlu0 3
      %955 = vperm.xlu0 %954, %v835
      %v956 = vpop.permute.xlu0 %955
      %958 = vset.pattern.permute.xlu0 3
      %959 = vperm.xlu0 %958, %v836
      %v960 = vpop.permute.xlu0 %959
      %v962 = vmul.f32 %v831, %v952
      %v963 = vmul.f32 %v952, 0.0
      %v964 = vmul.f32 %v832, %v956
      %v965 = vmul.f32 %v956, 0.0
      %v966 = vmul.f32 %v833, %v960
      %v967 = vmul.f32 %v960, 0.0
      %974 = vrot.lane.b32.xlu0 %v962, 117
      %v975 = vpop.permute.xlu0 %974
      %976 = vrot.lane.b32.xlu0 %v963, 117
      %v977 = vpop.permute.xlu0 %976
      %978 = vrot.lane.b32.xlu0 %v964, 117
      %v979 = vpop.permute.xlu0 %978
      %980 = vrot.lane.b32.xlu0 %v965, 117
      %v981 = vpop.permute.xlu0 %980
      %982 = vrot.lane.b32.xlu0 %v966, 117
      %v983 = vpop.permute.xlu0 %982
      %984 = vrot.lane.b32.xlu0 %v967, 117
      %v985 = vpop.permute.xlu0 %984
      %vm986 = vcmask 957440
      %v987 = vsel %vm986, %v975, %v977
      %v988 = vsel %vm986, %v979, %v981
      %v989 = vsel %vm986, %v983, %v985
      %v993 = vadd.f32 %v947, %v987
      %v994 = vadd.f32 %v948, %v988
      %v995 = vadd.f32 %v949, %v989
      %996 = vset.pattern.permute.xlu0 4
      %997 = vperm.xlu0 %996, %v834
      %v998 = vpop.permute.xlu0 %997
      %1000 = vset.pattern.permute.xlu0 4
      %1001 = vperm.xlu0 %1000, %v835
      %v1002 = vpop.permute.xlu0 %1001
      %1004 = vset.pattern.permute.xlu0 4
      %1005 = vperm.xlu0 %1004, %v836
      %v1006 = vpop.permute.xlu0 %1005
      %v1008 = vmul.f32 %v831, %v998
      %v1009 = vmul.f32 %v998, 0.0
      %v1010 = vmul.f32 %v832, %v1002
      %v1011 = vmul.f32 %v1002, 0.0
      %v1012 = vmul.f32 %v833, %v1006
      %v1013 = vmul.f32 %v1006, 0.0
      %1020 = vrot.lane.b32.xlu0 %v1008, 116
      %v1021 = vpop.permute.xlu0 %1020
      %1022 = vrot.lane.b32.xlu0 %v1009, 116
      %v1023 = vpop.permute.xlu0 %1022
      %1024 = vrot.lane.b32.xlu0 %v1010, 116
      %v1025 = vpop.permute.xlu0 %1024
      %1026 = vrot.lane.b32.xlu0 %v1011, 116
      %v1027 = vpop.permute.xlu0 %1026
      %1028 = vrot.lane.b32.xlu0 %v1012, 116
      %v1029 = vpop.permute.xlu0 %1028
      %1030 = vrot.lane.b32.xlu0 %v1013, 116
      %v1031 = vpop.permute.xlu0 %1030
      %vm1032 = vcmask 949248
      %v1033 = vsel %vm1032, %v1021, %v1023
      %v1034 = vsel %vm1032, %v1025, %v1027
      %v1035 = vsel %vm1032, %v1029, %v1031
      %v1039 = vadd.f32 %v993, %v1033
      %v1040 = vadd.f32 %v994, %v1034
      %v1041 = vadd.f32 %v995, %v1035
      %1042 = vset.pattern.permute.xlu0 5
      %1043 = vperm.xlu0 %1042, %v834
      %v1044 = vpop.permute.xlu0 %1043
      %1046 = vset.pattern.permute.xlu0 5
      %1047 = vperm.xlu0 %1046, %v835
      %v1048 = vpop.permute.xlu0 %1047
      %1050 = vset.pattern.permute.xlu0 5
      %1051 = vperm.xlu0 %1050, %v836
      %v1052 = vpop.permute.xlu0 %1051
      %v1054 = vmul.f32 %v831, %v1044
      %v1055 = vmul.f32 %v1044, 0.0
      %v1056 = vmul.f32 %v832, %v1048
      %v1057 = vmul.f32 %v1048, 0.0
      %v1058 = vmul.f32 %v833, %v1052
      %v1059 = vmul.f32 %v1052, 0.0
      %1066 = vrot.lane.b32.xlu0 %v1054, 115
      %v1067 = vpop.permute.xlu0 %1066
      %1068 = vrot.lane.b32.xlu0 %v1055, 115
      %v1069 = vpop.permute.xlu0 %1068
      %1070 = vrot.lane.b32.xlu0 %v1056, 115
      %v1071 = vpop.permute.xlu0 %1070
      %1072 = vrot.lane.b32.xlu0 %v1057, 115
      %v1073 = vpop.permute.xlu0 %1072
      %1074 = vrot.lane.b32.xlu0 %v1058, 115
      %v1075 = vpop.permute.xlu0 %1074
      %1076 = vrot.lane.b32.xlu0 %v1059, 115
      %v1077 = vpop.permute.xlu0 %1076
      %vm1078 = vcmask 941056
      %v1079 = vsel %vm1078, %v1067, %v1069
      %v1080 = vsel %vm1078, %v1071, %v1073
      %v1081 = vsel %vm1078, %v1075, %v1077
      %v1085 = vadd.f32 %v1039, %v1079
      %v1086 = vadd.f32 %v1040, %v1080
      %v1087 = vadd.f32 %v1041, %v1081
      %1088 = vset.pattern.permute.xlu0 6
      %1089 = vperm.xlu0 %1088, %v834
      %v1090 = vpop.permute.xlu0 %1089
      %1092 = vset.pattern.permute.xlu0 6
      %1093 = vperm.xlu0 %1092, %v835
      %v1094 = vpop.permute.xlu0 %1093
      %1096 = vset.pattern.permute.xlu0 6
      %1097 = vperm.xlu0 %1096, %v836
      %v1098 = vpop.permute.xlu0 %1097
      %v1100 = vmul.f32 %v831, %v1090
      %v1101 = vmul.f32 %v1090, 0.0
      %v1102 = vmul.f32 %v832, %v1094
      %v1103 = vmul.f32 %v1094, 0.0
      %v1104 = vmul.f32 %v833, %v1098
      %v1105 = vmul.f32 %v1098, 0.0
      %1112 = vrot.lane.b32.xlu0 %v1100, 106
      %v1113 = vpop.permute.xlu0 %1112
      %1114 = vrot.lane.b32.xlu0 %v1101, 106
      %v1115 = vpop.permute.xlu0 %1114
      %1116 = vrot.lane.b32.xlu0 %v1102, 106
      %v1117 = vpop.permute.xlu0 %1116
      %1118 = vrot.lane.b32.xlu0 %v1103, 106
      %v1119 = vpop.permute.xlu0 %1118
      %1120 = vrot.lane.b32.xlu0 %v1104, 106
      %v1121 = vpop.permute.xlu0 %1120
      %1122 = vrot.lane.b32.xlu0 %v1105, 106
      %v1123 = vpop.permute.xlu0 %1122
      %vm1124 = vcmask 867328
      %v1125 = vsel %vm1124, %v1113, %v1115
      %v1126 = vsel %vm1124, %v1117, %v1119
      %v1127 = vsel %vm1124, %v1121, %v1123
      %v1131 = vadd.f32 %v1085, %v1125
      %v1132 = vadd.f32 %v1086, %v1126
      %v1133 = vadd.f32 %v1087, %v1127
      %1134 = vset.pattern.permute.xlu0 7
      %1135 = vperm.xlu0 %1134, %v834
      %v1136 = vpop.permute.xlu0 %1135
      %1138 = vset.pattern.permute.xlu0 7
      %1139 = vperm.xlu0 %1138, %v835
      %v1140 = vpop.permute.xlu0 %1139
      %1142 = vset.pattern.permute.xlu0 7
      %1143 = vperm.xlu0 %1142, %v836
      %v1144 = vpop.permute.xlu0 %1143
      %v1146 = vmul.f32 %v831, %v1136
      %v1147 = vmul.f32 %v1136, 0.0
      %v1148 = vmul.f32 %v832, %v1140
      %v1149 = vmul.f32 %v1140, 0.0
      %v1150 = vmul.f32 %v833, %v1144
      %v1151 = vmul.f32 %v1144, 0.0
      %1158 = vrot.lane.b32.xlu0 %v1146, 105
      %v1159 = vpop.permute.xlu0 %1158
      %1160 = vrot.lane.b32.xlu0 %v1147, 105
      %v1161 = vpop.permute.xlu0 %1160
      %1162 = vrot.lane.b32.xlu0 %v1148, 105
      %v1163 = vpop.permute.xlu0 %1162
      %1164 = vrot.lane.b32.xlu0 %v1149, 105
      %v1165 = vpop.permute.xlu0 %1164
      %1166 = vrot.lane.b32.xlu0 %v1150, 105
      %v1167 = vpop.permute.xlu0 %1166
      %1168 = vrot.lane.b32.xlu0 %v1151, 105
      %v1169 = vpop.permute.xlu0 %1168
      %vm1170 = vcmask 859136
      %v1171 = vsel %vm1170, %v1159, %v1161
      %v1172 = vsel %vm1170, %v1163, %v1165
      %v1173 = vsel %vm1170, %v1167, %v1169
      %v1177 = vadd.f32 %v1131, %v1171
      %v1178 = vadd.f32 %v1132, %v1172
      %v1179 = vadd.f32 %v1133, %v1173
      %1180 = vset.pattern.permute.xlu0 8
      %1181 = vperm.xlu0 %1180, %v834
      %v1182 = vpop.permute.xlu0 %1181
      %1184 = vset.pattern.permute.xlu0 8
      %1185 = vperm.xlu0 %1184, %v835
      %v1186 = vpop.permute.xlu0 %1185
      %1188 = vset.pattern.permute.xlu0 8
      %1189 = vperm.xlu0 %1188, %v836
      %v1190 = vpop.permute.xlu0 %1189
      %v1192 = vmul.f32 %v831, %v1182
      %v1193 = vmul.f32 %v1182, 0.0
      %v1194 = vmul.f32 %v832, %v1186
      %v1195 = vmul.f32 %v1186, 0.0
      %v1196 = vmul.f32 %v833, %v1190
      %v1197 = vmul.f32 %v1190, 0.0
      %1204 = vrot.lane.b32.xlu0 %v1192, 104
      %v1205 = vpop.permute.xlu0 %1204
      %1206 = vrot.lane.b32.xlu0 %v1193, 104
      %v1207 = vpop.permute.xlu0 %1206
      %1208 = vrot.lane.b32.xlu0 %v1194, 104
      %v1209 = vpop.permute.xlu0 %1208
      %1210 = vrot.lane.b32.xlu0 %v1195, 104
      %v1211 = vpop.permute.xlu0 %1210
      %1212 = vrot.lane.b32.xlu0 %v1196, 104
      %v1213 = vpop.permute.xlu0 %1212
      %1214 = vrot.lane.b32.xlu0 %v1197, 104
      %v1215 = vpop.permute.xlu0 %1214
      %vm1216 = vcmask 850944
      %v1217 = vsel %vm1216, %v1205, %v1207
      %v1218 = vsel %vm1216, %v1209, %v1211
      %v1219 = vsel %vm1216, %v1213, %v1215
      %v1223 = vadd.f32 %v1177, %v1217
      %v1224 = vadd.f32 %v1178, %v1218
      %v1225 = vadd.f32 %v1179, %v1219
      %v1226 = vld [vmem:[%s6] sm:$0xff]
      %v1227 = vld [vmem:[%s6 + $0x8] sm:$0xff]
      %v1228 = vld [vmem:[%s6 + $0x10] sm:$0xff]
      %1230 = vset.pattern.permute.xlu0 0
      %1231 = vperm.xlu0 %1230, %v1226
      %v1232 = vpop.permute.xlu0 %1231
      %1235 = vset.pattern.permute.xlu0 0
      %1236 = vperm.xlu0 %1235, %v1227
      %v1237 = vpop.permute.xlu0 %1236
      %1240 = vset.pattern.permute.xlu0 0
      %1241 = vperm.xlu0 %1240, %v1228
      %v1242 = vpop.permute.xlu0 %1241
      %v1244 = vmul.f32 %v1223, %v1232
      %v1245 = vmul.f32 %v1224, %v1237
      %v1246 = vmul.f32 %v1225, %v1242
      %v1247 = vld [vmem:[%s7] sm:$0xff]
      %v1248 = vld [vmem:[%s7 + $0x8] sm:$0xff]
      %v1249 = vld [vmem:[%s7 + $0x10] sm:$0xff]
      %1251 = vset.pattern.permute.xlu0 0
      %1252 = vperm.xlu0 %1251, %v1247
      %v1253 = vpop.permute.xlu0 %1252
      %1256 = vset.pattern.permute.xlu0 0
      %1257 = vperm.xlu0 %1256, %v1248
      %v1258 = vpop.permute.xlu0 %1257
      %1261 = vset.pattern.permute.xlu0 0
      %1262 = vperm.xlu0 %1261, %v1249
      %v1263 = vpop.permute.xlu0 %1262
      %v1265 = vadd.f32 %v1244, %v1253
      %v1266 = vadd.f32 %v1245, %v1258
      %v1267 = vadd.f32 %v1246, %v1263
      %v1268 = vmax.f32 %v1265, 0.0
      %v1269 = vmax.f32 %v1266, 0.0
      %v1270 = vmax.f32 %v1267, 0.0
      %v1271 = vld [vmem:[%s682] sm:$0xff]
      %v1273 = vcombine.high %v1271, %v1271
      %v1275 = vld [vmem:[%s8] sm:$0xff]
      %v1276 = vld [vmem:[%s8 + $0x8] sm:$0xff]
      %v1277 = vld [vmem:[%s8 + $0x10] sm:$0xff]
      %1279 = vset.pattern.permute.xlu0 0
      %1280 = vperm.xlu0 %1279, %v1275
      %v1281 = vpop.permute.xlu0 %1280
      %1284 = vset.pattern.permute.xlu0 0
      %1285 = vperm.xlu0 %1284, %v1276
      %v1286 = vpop.permute.xlu0 %1285
      %1289 = vset.pattern.permute.xlu0 0
      %1290 = vperm.xlu0 %1289, %v1277
      %v1291 = vpop.permute.xlu0 %1290
      %v1293 = vlaneseq
      %v1294 = vshrl.u32 %v1293, 7
      %v1295 = vsub.s32 0, %v1294
      %v1296 = vrot.slane %v1271, %v1295
      %v1297 = vlaneseq
      %v1298 = vshrl.u32 %v1297, 7
      %v1299 = vsub.s32 0, %v1298
      %v1300 = vrot.slane %v1273, %v1299
      %v1301 = vlaneseq
      %v1302 = vshrl.u32 %v1301, 7
      %v1303 = vsub.s32 0, %v1302
      %v1304 = vmul.f32 %v1281, %v1296
      %v1305 = vmul.f32 %v1281, %v1300
      %v1306 = vmul.f32 %v1281, 0.0
      %v1307 = vmul.f32 %v1286, %v1296
      %v1308 = vmul.f32 %v1286, %v1300
      %v1309 = vmul.f32 %v1286, 0.0
      %v1310 = vmul.f32 %v1291, %v1296
      %v1311 = vmul.f32 %v1291, %v1300
      %v1312 = vmul.f32 %v1291, 0.0
      %1313 = vset.pattern.permute.xlu0 1
      %1314 = vperm.xlu0 %1313, %v1275
      %v1315 = vpop.permute.xlu0 %1314
      %1317 = vset.pattern.permute.xlu0 1
      %1318 = vperm.xlu0 %1317, %v1276
      %v1319 = vpop.permute.xlu0 %1318
      %1321 = vset.pattern.permute.xlu0 1
      %1322 = vperm.xlu0 %1321, %v1277
      %v1323 = vpop.permute.xlu0 %1322
      %v1325 = vlaneseq
      %v1326 = vshrl.u32 %v1325, 7
      %v1327 = vsub.s32 1, %v1326
      %v1328 = vrot.slane %v1271, %v1327
      %v1329 = vlaneseq
      %v1330 = vshrl.u32 %v1329, 7
      %v1331 = vsub.s32 1, %v1330
      %v1332 = vrot.slane %v1273, %v1331
      %v1333 = vlaneseq
      %v1334 = vshrl.u32 %v1333, 7
      %v1335 = vsub.s32 1, %v1334
      %v1336 = vmul.f32 %v1315, %v1328
      %v1337 = vmul.f32 %v1315, %v1332
      %v1338 = vmul.f32 %v1315, 0.0
      %v1339 = vmul.f32 %v1319, %v1328
      %v1340 = vmul.f32 %v1319, %v1332
      %v1341 = vmul.f32 %v1319, 0.0
      %v1342 = vmul.f32 %v1323, %v1328
      %v1343 = vmul.f32 %v1323, %v1332
      %v1344 = vmul.f32 %v1323, 0.0
      %v1345 = vadd.f32 %v1304, %v1336
      %v1346 = vadd.f32 %v1305, %v1337
      %v1347 = vadd.f32 %v1306, %v1338
      %v1348 = vadd.f32 %v1307, %v1339
      %v1349 = vadd.f32 %v1308, %v1340
      %v1350 = vadd.f32 %v1309, %v1341
      %v1351 = vadd.f32 %v1310, %v1342
      %v1352 = vadd.f32 %v1311, %v1343
      %v1353 = vadd.f32 %v1312, %v1344
      %1354 = vset.pattern.permute.xlu0 2
      %1355 = vperm.xlu0 %1354, %v1275
      %v1356 = vpop.permute.xlu0 %1355
      %1358 = vset.pattern.permute.xlu0 2
      %1359 = vperm.xlu0 %1358, %v1276
      %v1360 = vpop.permute.xlu0 %1359
      %1362 = vset.pattern.permute.xlu0 2
      %1363 = vperm.xlu0 %1362, %v1277
      %v1364 = vpop.permute.xlu0 %1363
      %v1366 = vlaneseq
      %v1367 = vshrl.u32 %v1366, 7
      %v1368 = vsub.s32 2, %v1367
      %v1369 = vrot.slane %v1271, %v1368
      %v1370 = vlaneseq
      %v1371 = vshrl.u32 %v1370, 7
      %v1372 = vsub.s32 2, %v1371
      %v1373 = vrot.slane %v1273, %v1372
      %v1374 = vlaneseq
      %v1375 = vshrl.u32 %v1374, 7
      %v1376 = vsub.s32 2, %v1375
      %v1377 = vmul.f32 %v1356, %v1369
      %v1378 = vmul.f32 %v1356, %v1373
      %v1379 = vmul.f32 %v1356, 0.0
      %v1380 = vmul.f32 %v1360, %v1369
      %v1381 = vmul.f32 %v1360, %v1373
      %v1382 = vmul.f32 %v1360, 0.0
      %v1383 = vmul.f32 %v1364, %v1369
      %v1384 = vmul.f32 %v1364, %v1373
      %v1385 = vmul.f32 %v1364, 0.0
      %v1386 = vadd.f32 %v1345, %v1377
      %v1387 = vadd.f32 %v1346, %v1378
      %v1388 = vadd.f32 %v1347, %v1379
      %v1389 = vadd.f32 %v1348, %v1380
      %v1390 = vadd.f32 %v1349, %v1381
      %v1391 = vadd.f32 %v1350, %v1382
      %v1392 = vadd.f32 %v1351, %v1383
      %v1393 = vadd.f32 %v1352, %v1384
      %v1394 = vadd.f32 %v1353, %v1385
      %1395 = vset.pattern.permute.xlu0 3
      %1396 = vperm.xlu0 %1395, %v1275
      %v1397 = vpop.permute.xlu0 %1396
      %1399 = vset.pattern.permute.xlu0 3
      %1400 = vperm.xlu0 %1399, %v1276
      %v1401 = vpop.permute.xlu0 %1400
      %1403 = vset.pattern.permute.xlu0 3
      %1404 = vperm.xlu0 %1403, %v1277
      %v1405 = vpop.permute.xlu0 %1404
      %v1407 = vlaneseq
      %v1408 = vshrl.u32 %v1407, 7
      %v1409 = vsub.s32 3, %v1408
      %v1410 = vrot.slane %v1271, %v1409
      %v1411 = vlaneseq
      %v1412 = vshrl.u32 %v1411, 7
      %v1413 = vsub.s32 3, %v1412
      %v1414 = vrot.slane %v1273, %v1413
      %v1415 = vlaneseq
      %v1416 = vshrl.u32 %v1415, 7
      %v1417 = vsub.s32 3, %v1416
      %v1418 = vmul.f32 %v1397, %v1410
      %v1419 = vmul.f32 %v1397, %v1414
      %v1420 = vmul.f32 %v1397, 0.0
      %v1421 = vmul.f32 %v1401, %v1410
      %v1422 = vmul.f32 %v1401, %v1414
      %v1423 = vmul.f32 %v1401, 0.0
      %v1424 = vmul.f32 %v1405, %v1410
      %v1425 = vmul.f32 %v1405, %v1414
      %v1426 = vmul.f32 %v1405, 0.0
      %v1427 = vadd.f32 %v1386, %v1418
      %v1428 = vadd.f32 %v1387, %v1419
      %v1429 = vadd.f32 %v1388, %v1420
      %v1430 = vadd.f32 %v1389, %v1421
      %v1431 = vadd.f32 %v1390, %v1422
      %v1432 = vadd.f32 %v1391, %v1423
      %v1433 = vadd.f32 %v1392, %v1424
      %v1434 = vadd.f32 %v1393, %v1425
      %v1435 = vadd.f32 %v1394, %v1426
      %v1436 = vld [vmem:[%s9] sm:$0xff]
      %v1437 = vld [vmem:[%s9 + $0x8] sm:$0xff]
      %v1438 = vld [vmem:[%s9 + $0x10] sm:$0xff]
      %1440 = vset.pattern.permute.xlu0 0
      %1441 = vperm.xlu0 %1440, %v1436
      %v1442 = vpop.permute.xlu0 %1441
      %1445 = vset.pattern.permute.xlu0 0
      %1446 = vperm.xlu0 %1445, %v1437
      %v1447 = vpop.permute.xlu0 %1446
      %1450 = vset.pattern.permute.xlu0 0
      %1451 = vperm.xlu0 %1450, %v1438
      %v1452 = vpop.permute.xlu0 %1451
      %v1454 = vmul.f32 %v1427, %v1442
      %v1455 = vmul.f32 %v1428, %v1442
      %v1456 = vmul.f32 %v1429, %v1442
      %v1457 = vmul.f32 %v1430, %v1447
      %v1458 = vmul.f32 %v1431, %v1447
      %v1459 = vmul.f32 %v1432, %v1447
      %v1460 = vmul.f32 %v1433, %v1452
      %v1461 = vmul.f32 %v1434, %v1452
      %v1462 = vmul.f32 %v1435, %v1452
      %v1463 = vld [vmem:[%s10] sm:$0xff]
      %v1464 = vld [vmem:[%s10 + $0x8] sm:$0xff]
      %v1465 = vld [vmem:[%s10 + $0x10] sm:$0xff]
      %1467 = vset.pattern.permute.xlu0 0
      %1468 = vperm.xlu0 %1467, %v1463
      %v1469 = vpop.permute.xlu0 %1468
      %1472 = vset.pattern.permute.xlu0 0
      %1473 = vperm.xlu0 %1472, %v1464
      %v1474 = vpop.permute.xlu0 %1473
      %1477 = vset.pattern.permute.xlu0 0
      %1478 = vperm.xlu0 %1477, %v1465
      %v1479 = vpop.permute.xlu0 %1478
      %v1481 = vadd.f32 %v1454, %v1469
      %v1482 = vadd.f32 %v1455, %v1469
      %v1483 = vadd.f32 %v1456, %v1469
      %v1484 = vadd.f32 %v1457, %v1474
      %v1485 = vadd.f32 %v1458, %v1474
      %v1486 = vadd.f32 %v1459, %v1474
      %v1487 = vadd.f32 %v1460, %v1479
      %v1488 = vadd.f32 %v1461, %v1479
      %v1489 = vadd.f32 %v1462, %v1479
      %v1490 = vmax.f32 %v1481, 0.0
      %v1491 = vmax.f32 %v1482, 0.0
      %v1492 = vmax.f32 %v1483, 0.0
      %v1493 = vmax.f32 %v1484, 0.0
      %v1494 = vmax.f32 %v1485, 0.0
      %v1495 = vmax.f32 %v1486, 0.0
      %v1496 = vmax.f32 %v1487, 0.0
      %v1497 = vmax.f32 %v1488, 0.0
      %v1498 = vmax.f32 %v1489, 0.0
      %v1499 = vld [vmem:[%s11] sm:$0xff]
      %v1500 = vld [vmem:[%s11 + $0x8] sm:$0xff]
      %v1501 = vld [vmem:[%s11 + $0x10] sm:$0xff]
      %1503 = vset.pattern.permute.xlu0 0
      %1504 = vperm.xlu0 %1503, %v1499
      %v1505 = vpop.permute.xlu0 %1504
      %1508 = vset.pattern.permute.xlu0 0
      %1509 = vperm.xlu0 %1508, %v1500
      %v1510 = vpop.permute.xlu0 %1509
      %1513 = vset.pattern.permute.xlu0 0
      %1514 = vperm.xlu0 %1513, %v1501
      %v1515 = vpop.permute.xlu0 %1514
      %v1517 = vmul.f32 %v1490, %v1505
      %v1518 = vmul.f32 %v1491, %v1505
      %v1519 = vmul.f32 %v1493, %v1510
      %v1520 = vmul.f32 %v1494, %v1510
      %v1521 = vmul.f32 %v1496, %v1515
      %v1522 = vmul.f32 %v1497, %v1515
      %v1523 = vadd.f32 %v1517, 0.0
      %v1524 = vadd.f32 %v1518, 0.0
      %v1525 = vadd.f32 %v1519, 0.0
      %v1526 = vadd.f32 %v1520, 0.0
      %v1527 = vadd.f32 %v1521, 0.0
      %v1528 = vadd.f32 %v1522, 0.0
      %1529 = vset.pattern.permute.xlu0 1
      %1530 = vperm.xlu0 %1529, %v1499
      %v1531 = vpop.permute.xlu0 %1530
      %1533 = vset.pattern.permute.xlu0 1
      %1534 = vperm.xlu0 %1533, %v1500
      %v1535 = vpop.permute.xlu0 %1534
      %1537 = vset.pattern.permute.xlu0 1
      %1538 = vperm.xlu0 %1537, %v1501
      %v1539 = vpop.permute.xlu0 %1538
      %v1541 = vmul.f32 %v1490, %v1531
      %v1542 = vmul.f32 %v1491, %v1531
      %v1543 = vmul.f32 %v1492, %v1531
      %v1544 = vmul.f32 %v1493, %v1535
      %v1545 = vmul.f32 %v1494, %v1535
      %v1546 = vmul.f32 %v1495, %v1535
      %v1547 = vmul.f32 %v1496, %v1539
      %v1548 = vmul.f32 %v1497, %v1539
      %v1549 = vmul.f32 %v1498, %v1539
      %1559 = vrot.lane.b32.xlu0 %v1541, 127
      %v1560 = vpop.permute.xlu0 %1559
      %1561 = vrot.lane.b32.xlu0 %v1542, 127
      %v1562 = vpop.permute.xlu0 %1561
      %1563 = vrot.lane.b32.xlu0 %v1543, 127
      %v1564 = vpop.permute.xlu0 %1563
      %1565 = vrot.lane.b32.xlu0 %v1544, 127
      %v1566 = vpop.permute.xlu0 %1565
      %1567 = vrot.lane.b32.xlu0 %v1545, 127
      %v1568 = vpop.permute.xlu0 %1567
      %1569 = vrot.lane.b32.xlu0 %v1546, 127
      %v1570 = vpop.permute.xlu0 %1569
      %1571 = vrot.lane.b32.xlu0 %v1547, 127
      %v1572 = vpop.permute.xlu0 %1571
      %1573 = vrot.lane.b32.xlu0 %v1548, 127
      %v1574 = vpop.permute.xlu0 %1573
      %1575 = vrot.lane.b32.xlu0 %v1549, 127
      %v1576 = vpop.permute.xlu0 %1575
      %v1577 = vsel %vm894, %v1560, %v1562
      %v1578 = vsel %vm894, %v1562, %v1564
      %v1579 = vsel %vm894, %v1566, %v1568
      %v1580 = vsel %vm894, %v1568, %v1570
      %v1581 = vsel %vm894, %v1572, %v1574
      %v1582 = vsel %vm894, %v1574, %v1576
      %v1589 = vadd.f32 %v1523, %v1577
      %v1590 = vadd.f32 %v1524, %v1578
      %v1591 = vadd.f32 %v1525, %v1579
      %v1592 = vadd.f32 %v1526, %v1580
      %v1593 = vadd.f32 %v1527, %v1581
      %v1594 = vadd.f32 %v1528, %v1582
      %1595 = vset.pattern.permute.xlu0 2
      %1596 = vperm.xlu0 %1595, %v1499
      %v1597 = vpop.permute.xlu0 %1596
      %1599 = vset.pattern.permute.xlu0 2
      %1600 = vperm.xlu0 %1599, %v1500
      %v1601 = vpop.permute.xlu0 %1600
      %1603 = vset.pattern.permute.xlu0 2
      %1604 = vperm.xlu0 %1603, %v1501
      %v1605 = vpop.permute.xlu0 %1604
      %v1607 = vmul.f32 %v1490, %v1597
      %v1608 = vmul.f32 %v1491, %v1597
      %v1609 = vmul.f32 %v1492, %v1597
      %v1610 = vmul.f32 %v1493, %v1601
      %v1611 = vmul.f32 %v1494, %v1601
      %v1612 = vmul.f32 %v1495, %v1601
      %v1613 = vmul.f32 %v1496, %v1605
      %v1614 = vmul.f32 %v1497, %v1605
      %v1615 = vmul.f32 %v1498, %v1605
      %1625 = vrot.lane.b32.xlu0 %v1607, 126
      %v1626 = vpop.permute.xlu0 %1625
      %1627 = vrot.lane.b32.xlu0 %v1608, 126
      %v1628 = vpop.permute.xlu0 %1627
      %1629 = vrot.lane.b32.xlu0 %v1609, 126
      %v1630 = vpop.permute.xlu0 %1629
      %1631 = vrot.lane.b32.xlu0 %v1610, 126
      %v1632 = vpop.permute.xlu0 %1631
      %1633 = vrot.lane.b32.xlu0 %v1611, 126
      %v1634 = vpop.permute.xlu0 %1633
      %1635 = vrot.lane.b32.xlu0 %v1612, 126
      %v1636 = vpop.permute.xlu0 %1635
      %1637 = vrot.lane.b32.xlu0 %v1613, 126
      %v1638 = vpop.permute.xlu0 %1637
      %1639 = vrot.lane.b32.xlu0 %v1614, 126
      %v1640 = vpop.permute.xlu0 %1639
      %1641 = vrot.lane.b32.xlu0 %v1615, 126
      %v1642 = vpop.permute.xlu0 %1641
      %v1643 = vsel %vm940, %v1626, %v1628
      %v1644 = vsel %vm940, %v1628, %v1630
      %v1645 = vsel %vm940, %v1632, %v1634
      %v1646 = vsel %vm940, %v1634, %v1636
      %v1647 = vsel %vm940, %v1638, %v1640
      %v1648 = vsel %vm940, %v1640, %v1642
      %v1655 = vadd.f32 %v1589, %v1643
      %v1656 = vadd.f32 %v1590, %v1644
      %v1657 = vadd.f32 %v1591, %v1645
      %v1658 = vadd.f32 %v1592, %v1646
      %v1659 = vadd.f32 %v1593, %v1647
      %v1660 = vadd.f32 %v1594, %v1648
      %1661 = vset.pattern.permute.xlu0 3
      %1662 = vperm.xlu0 %1661, %v1499
      %v1663 = vpop.permute.xlu0 %1662
      %1665 = vset.pattern.permute.xlu0 3
      %1666 = vperm.xlu0 %1665, %v1500
      %v1667 = vpop.permute.xlu0 %1666
      %1669 = vset.pattern.permute.xlu0 3
      %1670 = vperm.xlu0 %1669, %v1501
      %v1671 = vpop.permute.xlu0 %1670
      %v1673 = vmul.f32 %v1490, %v1663
      %v1674 = vmul.f32 %v1491, %v1663
      %v1675 = vmul.f32 %v1492, %v1663
      %v1676 = vmul.f32 %v1493, %v1667
      %v1677 = vmul.f32 %v1494, %v1667
      %v1678 = vmul.f32 %v1495, %v1667
      %v1679 = vmul.f32 %v1496, %v1671
      %v1680 = vmul.f32 %v1497, %v1671
      %v1681 = vmul.f32 %v1498, %v1671
      %1691 = vrot.lane.b32.xlu0 %v1673, 112
      %v1692 = vpop.permute.xlu0 %1691
      %1693 = vrot.lane.b32.xlu0 %v1674, 112
      %v1694 = vpop.permute.xlu0 %1693
      %1695 = vrot.lane.b32.xlu0 %v1675, 112
      %v1696 = vpop.permute.xlu0 %1695
      %1697 = vrot.lane.b32.xlu0 %v1676, 112
      %v1698 = vpop.permute.xlu0 %1697
      %1699 = vrot.lane.b32.xlu0 %v1677, 112
      %v1700 = vpop.permute.xlu0 %1699
      %1701 = vrot.lane.b32.xlu0 %v1678, 112
      %v1702 = vpop.permute.xlu0 %1701
      %1703 = vrot.lane.b32.xlu0 %v1679, 112
      %v1704 = vpop.permute.xlu0 %1703
      %1705 = vrot.lane.b32.xlu0 %v1680, 112
      %v1706 = vpop.permute.xlu0 %1705
      %1707 = vrot.lane.b32.xlu0 %v1681, 112
      %v1708 = vpop.permute.xlu0 %1707
      %vm1709 = vcmask 916480
      %v1710 = vsel %vm1709, %v1692, %v1694
      %v1711 = vsel %vm1709, %v1694, %v1696
      %v1712 = vsel %vm1709, %v1698, %v1700
      %v1713 = vsel %vm1709, %v1700, %v1702
      %v1714 = vsel %vm1709, %v1704, %v1706
      %v1715 = vsel %vm1709, %v1706, %v1708
      %v1722 = vadd.f32 %v1655, %v1710
      %v1723 = vadd.f32 %v1656, %v1711
      %v1724 = vadd.f32 %v1657, %v1712
      %v1725 = vadd.f32 %v1658, %v1713
      %v1726 = vadd.f32 %v1659, %v1714
      %v1727 = vadd.f32 %v1660, %v1715
      %1728 = vset.pattern.permute.xlu0 4
      %1729 = vperm.xlu0 %1728, %v1499
      %v1730 = vpop.permute.xlu0 %1729
      %1732 = vset.pattern.permute.xlu0 4
      %1733 = vperm.xlu0 %1732, %v1500
      %v1734 = vpop.permute.xlu0 %1733
      %1736 = vset.pattern.permute.xlu0 4
      %1737 = vperm.xlu0 %1736, %v1501
      %v1738 = vpop.permute.xlu0 %1737
      %v1740 = vmul.f32 %v1490, %v1730
      %v1741 = vmul.f32 %v1491, %v1730
      %v1742 = vmul.f32 %v1492, %v1730
      %v1743 = vmul.f32 %v1493, %v1734
      %v1744 = vmul.f32 %v1494, %v1734
      %v1745 = vmul.f32 %v1495, %v1734
      %v1746 = vmul.f32 %v1496, %v1738
      %v1747 = vmul.f32 %v1497, %v1738
      %v1748 = vmul.f32 %v1498, %v1738
      %1758 = vrot.lane.b32.xlu0 %v1740, 111
      %v1759 = vpop.permute.xlu0 %1758
      %1760 = vrot.lane.b32.xlu0 %v1741, 111
      %v1761 = vpop.permute.xlu0 %1760
      %1762 = vrot.lane.b32.xlu0 %v1742, 111
      %v1763 = vpop.permute.xlu0 %1762
      %1764 = vrot.lane.b32.xlu0 %v1743, 111
      %v1765 = vpop.permute.xlu0 %1764
      %1766 = vrot.lane.b32.xlu0 %v1744, 111
      %v1767 = vpop.permute.xlu0 %1766
      %1768 = vrot.lane.b32.xlu0 %v1745, 111
      %v1769 = vpop.permute.xlu0 %1768
      %1770 = vrot.lane.b32.xlu0 %v1746, 111
      %v1771 = vpop.permute.xlu0 %1770
      %1772 = vrot.lane.b32.xlu0 %v1747, 111
      %v1773 = vpop.permute.xlu0 %1772
      %1774 = vrot.lane.b32.xlu0 %v1748, 111
      %v1775 = vpop.permute.xlu0 %1774
      %vm1776 = vcmask 908288
      %v1777 = vsel %vm1776, %v1759, %v1761
      %v1778 = vsel %vm1776, %v1761, %v1763
      %v1779 = vsel %vm1776, %v1765, %v1767
      %v1780 = vsel %vm1776, %v1767, %v1769
      %v1781 = vsel %vm1776, %v1771, %v1773
      %v1782 = vsel %vm1776, %v1773, %v1775
      %v1789 = vadd.f32 %v1722, %v1777
      %v1790 = vadd.f32 %v1723, %v1778
      %v1791 = vadd.f32 %v1724, %v1779
      %v1792 = vadd.f32 %v1725, %v1780
      %v1793 = vadd.f32 %v1726, %v1781
      %v1794 = vadd.f32 %v1727, %v1782
      %1795 = vset.pattern.permute.xlu0 5
      %1796 = vperm.xlu0 %1795, %v1499
      %v1797 = vpop.permute.xlu0 %1796
      %1799 = vset.pattern.permute.xlu0 5
      %1800 = vperm.xlu0 %1799, %v1500
      %v1801 = vpop.permute.xlu0 %1800
      %1803 = vset.pattern.permute.xlu0 5
      %1804 = vperm.xlu0 %1803, %v1501
      %v1805 = vpop.permute.xlu0 %1804
      %v1807 = vmul.f32 %v1490, %v1797
      %v1808 = vmul.f32 %v1491, %v1797
      %v1809 = vmul.f32 %v1492, %v1797
      %v1810 = vmul.f32 %v1493, %v1801
      %v1811 = vmul.f32 %v1494, %v1801
      %v1812 = vmul.f32 %v1495, %v1801
      %v1813 = vmul.f32 %v1496, %v1805
      %v1814 = vmul.f32 %v1497, %v1805
      %v1815 = vmul.f32 %v1498, %v1805
      %1825 = vrot.lane.b32.xlu0 %v1807, 110
      %v1826 = vpop.permute.xlu0 %1825
      %1827 = vrot.lane.b32.xlu0 %v1808, 110
      %v1828 = vpop.permute.xlu0 %1827
      %1829 = vrot.lane.b32.xlu0 %v1809, 110
      %v1830 = vpop.permute.xlu0 %1829
      %1831 = vrot.lane.b32.xlu0 %v1810, 110
      %v1832 = vpop.permute.xlu0 %1831
      %1833 = vrot.lane.b32.xlu0 %v1811, 110
      %v1834 = vpop.permute.xlu0 %1833
      %1835 = vrot.lane.b32.xlu0 %v1812, 110
      %v1836 = vpop.permute.xlu0 %1835
      %1837 = vrot.lane.b32.xlu0 %v1813, 110
      %v1838 = vpop.permute.xlu0 %1837
      %1839 = vrot.lane.b32.xlu0 %v1814, 110
      %v1840 = vpop.permute.xlu0 %1839
      %1841 = vrot.lane.b32.xlu0 %v1815, 110
      %v1842 = vpop.permute.xlu0 %1841
      %vm1843 = vcmask 900096
      %v1844 = vsel %vm1843, %v1826, %v1828
      %v1845 = vsel %vm1843, %v1828, %v1830
      %v1846 = vsel %vm1843, %v1832, %v1834
      %v1847 = vsel %vm1843, %v1834, %v1836
      %v1848 = vsel %vm1843, %v1838, %v1840
      %v1849 = vsel %vm1843, %v1840, %v1842
      %v1856 = vadd.f32 %v1789, %v1844
      %v1857 = vadd.f32 %v1790, %v1845
      %v1858 = vadd.f32 %v1791, %v1846
      %v1859 = vadd.f32 %v1792, %v1847
      %v1860 = vadd.f32 %v1793, %v1848
      %v1861 = vadd.f32 %v1794, %v1849
      %1862 = vset.pattern.permute.xlu0 6
      %1863 = vperm.xlu0 %1862, %v1499
      %v1864 = vpop.permute.xlu0 %1863
      %1866 = vset.pattern.permute.xlu0 6
      %1867 = vperm.xlu0 %1866, %v1500
      %v1868 = vpop.permute.xlu0 %1867
      %1870 = vset.pattern.permute.xlu0 6
      %1871 = vperm.xlu0 %1870, %v1501
      %v1872 = vpop.permute.xlu0 %1871
      %v1874 = vmul.f32 %v1490, %v1864
      %v1875 = vmul.f32 %v1491, %v1864
      %v1876 = vmul.f32 %v1492, %v1864
      %v1877 = vmul.f32 %v1493, %v1868
      %v1878 = vmul.f32 %v1494, %v1868
      %v1879 = vmul.f32 %v1495, %v1868
      %v1880 = vmul.f32 %v1496, %v1872
      %v1881 = vmul.f32 %v1497, %v1872
      %v1882 = vmul.f32 %v1498, %v1872
      %1892 = vrot.lane.b32.xlu0 %v1874, 96
      %v1893 = vpop.permute.xlu0 %1892
      %1894 = vrot.lane.b32.xlu0 %v1875, 96
      %v1895 = vpop.permute.xlu0 %1894
      %1896 = vrot.lane.b32.xlu0 %v1876, 96
      %v1897 = vpop.permute.xlu0 %1896
      %1898 = vrot.lane.b32.xlu0 %v1877, 96
      %v1899 = vpop.permute.xlu0 %1898
      %1900 = vrot.lane.b32.xlu0 %v1878, 96
      %v1901 = vpop.permute.xlu0 %1900
      %1902 = vrot.lane.b32.xlu0 %v1879, 96
      %v1903 = vpop.permute.xlu0 %1902
      %1904 = vrot.lane.b32.xlu0 %v1880, 96
      %v1905 = vpop.permute.xlu0 %1904
      %1906 = vrot.lane.b32.xlu0 %v1881, 96
      %v1907 = vpop.permute.xlu0 %1906
      %1908 = vrot.lane.b32.xlu0 %v1882, 96
      %v1909 = vpop.permute.xlu0 %1908
      %vm1910 = vcmask 785408
      %v1911 = vsel %vm1910, %v1893, %v1895
      %v1912 = vsel %vm1910, %v1895, %v1897
      %v1913 = vsel %vm1910, %v1899, %v1901
      %v1914 = vsel %vm1910, %v1901, %v1903
      %v1915 = vsel %vm1910, %v1905, %v1907
      %v1916 = vsel %vm1910, %v1907, %v1909
      %v1923 = vadd.f32 %v1856, %v1911
      %v1924 = vadd.f32 %v1857, %v1912
      %v1925 = vadd.f32 %v1858, %v1913
      %v1926 = vadd.f32 %v1859, %v1914
      %v1927 = vadd.f32 %v1860, %v1915
      %v1928 = vadd.f32 %v1861, %v1916
      %1929 = vset.pattern.permute.xlu0 7
      %1930 = vperm.xlu0 %1929, %v1499
      %v1931 = vpop.permute.xlu0 %1930
      %1933 = vset.pattern.permute.xlu0 7
      %1934 = vperm.xlu0 %1933, %v1500
      %v1935 = vpop.permute.xlu0 %1934
      %1937 = vset.pattern.permute.xlu0 7
      %1938 = vperm.xlu0 %1937, %v1501
      %v1939 = vpop.permute.xlu0 %1938
      %v1941 = vmul.f32 %v1490, %v1931
      %v1942 = vmul.f32 %v1491, %v1931
      %v1943 = vmul.f32 %v1492, %v1931
      %v1944 = vmul.f32 %v1493, %v1935
      %v1945 = vmul.f32 %v1494, %v1935
      %v1946 = vmul.f32 %v1495, %v1935
      %v1947 = vmul.f32 %v1496, %v1939
      %v1948 = vmul.f32 %v1497, %v1939
      %v1949 = vmul.f32 %v1498, %v1939
      %1959 = vrot.lane.b32.xlu0 %v1941, 95
      %v1960 = vpop.permute.xlu0 %1959
      %1961 = vrot.lane.b32.xlu0 %v1942, 95
      %v1962 = vpop.permute.xlu0 %1961
      %1963 = vrot.lane.b32.xlu0 %v1943, 95
      %v1964 = vpop.permute.xlu0 %1963
      %1965 = vrot.lane.b32.xlu0 %v1944, 95
      %v1966 = vpop.permute.xlu0 %1965
      %1967 = vrot.lane.b32.xlu0 %v1945, 95
      %v1968 = vpop.permute.xlu0 %1967
      %1969 = vrot.lane.b32.xlu0 %v1946, 95
      %v1970 = vpop.permute.xlu0 %1969
      %1971 = vrot.lane.b32.xlu0 %v1947, 95
      %v1972 = vpop.permute.xlu0 %1971
      %1973 = vrot.lane.b32.xlu0 %v1948, 95
      %v1974 = vpop.permute.xlu0 %1973
      %1975 = vrot.lane.b32.xlu0 %v1949, 95
      %v1976 = vpop.permute.xlu0 %1975
      %vm1977 = vcmask 777216
      %v1978 = vsel %vm1977, %v1960, %v1962
      %v1979 = vsel %vm1977, %v1962, %v1964
      %v1980 = vsel %vm1977, %v1966, %v1968
      %v1981 = vsel %vm1977, %v1968, %v1970
      %v1982 = vsel %vm1977, %v1972, %v1974
      %v1983 = vsel %vm1977, %v1974, %v1976
      %v1990 = vadd.f32 %v1923, %v1978
      %v1991 = vadd.f32 %v1924, %v1979
      %v1992 = vadd.f32 %v1925, %v1980
      %v1993 = vadd.f32 %v1926, %v1981
      %v1994 = vadd.f32 %v1927, %v1982
      %v1995 = vadd.f32 %v1928, %v1983
      %1996 = vset.pattern.permute.xlu0 8
      %1997 = vperm.xlu0 %1996, %v1499
      %v1998 = vpop.permute.xlu0 %1997
      %2000 = vset.pattern.permute.xlu0 8
      %2001 = vperm.xlu0 %2000, %v1500
      %v2002 = vpop.permute.xlu0 %2001
      %2004 = vset.pattern.permute.xlu0 8
      %2005 = vperm.xlu0 %2004, %v1501
      %v2006 = vpop.permute.xlu0 %2005
      %v2008 = vmul.f32 %v1490, %v1998
      %v2009 = vmul.f32 %v1491, %v1998
      %v2010 = vmul.f32 %v1492, %v1998
      %v2011 = vmul.f32 %v1493, %v2002
      %v2012 = vmul.f32 %v1494, %v2002
      %v2013 = vmul.f32 %v1495, %v2002
      %v2014 = vmul.f32 %v1496, %v2006
      %v2015 = vmul.f32 %v1497, %v2006
      %v2016 = vmul.f32 %v1498, %v2006
      %2026 = vrot.lane.b32.xlu0 %v2008, 94
      %v2027 = vpop.permute.xlu0 %2026
      %2028 = vrot.lane.b32.xlu0 %v2009, 94
      %v2029 = vpop.permute.xlu0 %2028
      %2030 = vrot.lane.b32.xlu0 %v2010, 94
      %v2031 = vpop.permute.xlu0 %2030
      %2032 = vrot.lane.b32.xlu0 %v2011, 94
      %v2033 = vpop.permute.xlu0 %2032
      %2034 = vrot.lane.b32.xlu0 %v2012, 94
      %v2035 = vpop.permute.xlu0 %2034
      %2036 = vrot.lane.b32.xlu0 %v2013, 94
      %v2037 = vpop.permute.xlu0 %2036
      %2038 = vrot.lane.b32.xlu0 %v2014, 94
      %v2039 = vpop.permute.xlu0 %2038
      %2040 = vrot.lane.b32.xlu0 %v2015, 94
      %v2041 = vpop.permute.xlu0 %2040
      %2042 = vrot.lane.b32.xlu0 %v2016, 94
      %v2043 = vpop.permute.xlu0 %2042
      %vm2044 = vcmask 769024
      %v2045 = vsel %vm2044, %v2027, %v2029
      %v2046 = vsel %vm2044, %v2029, %v2031
      %v2047 = vsel %vm2044, %v2033, %v2035
      %v2048 = vsel %vm2044, %v2035, %v2037
      %v2049 = vsel %vm2044, %v2039, %v2041
      %v2050 = vsel %vm2044, %v2041, %v2043
      %v2057 = vadd.f32 %v1990, %v2045
      %v2058 = vadd.f32 %v1991, %v2046
      %v2059 = vadd.f32 %v1992, %v2047
      %v2060 = vadd.f32 %v1993, %v2048
      %v2061 = vadd.f32 %v1994, %v2049
      %v2062 = vadd.f32 %v1995, %v2050
      %v2063 = vld [vmem:[%s12] sm:$0xff]
      %v2064 = vld [vmem:[%s12 + $0x8] sm:$0xff]
      %v2065 = vld [vmem:[%s12 + $0x10] sm:$0xff]
      %2067 = vset.pattern.permute.xlu0 0
      %2068 = vperm.xlu0 %2067, %v2063
      %v2069 = vpop.permute.xlu0 %2068
      %2072 = vset.pattern.permute.xlu0 0
      %2073 = vperm.xlu0 %2072, %v2064
      %v2074 = vpop.permute.xlu0 %2073
      %2077 = vset.pattern.permute.xlu0 0
      %2078 = vperm.xlu0 %2077, %v2065
      %v2079 = vpop.permute.xlu0 %2078
      %v2081 = vmul.f32 %v2057, %v2069
      %v2082 = vmul.f32 %v2058, %v2069
      %v2083 = vmul.f32 %v2059, %v2074
      %v2084 = vmul.f32 %v2060, %v2074
      %v2085 = vmul.f32 %v2061, %v2079
      %v2086 = vmul.f32 %v2062, %v2079
      %v2087 = vld [vmem:[%s13] sm:$0xff]
      %v2088 = vld [vmem:[%s13 + $0x8] sm:$0xff]
      %v2089 = vld [vmem:[%s13 + $0x10] sm:$0xff]
      %2091 = vset.pattern.permute.xlu0 0
      %2092 = vperm.xlu0 %2091, %v2087
      %v2093 = vpop.permute.xlu0 %2092
      %2096 = vset.pattern.permute.xlu0 0
      %2097 = vperm.xlu0 %2096, %v2088
      %v2098 = vpop.permute.xlu0 %2097
      %2101 = vset.pattern.permute.xlu0 0
      %2102 = vperm.xlu0 %2101, %v2089
      %v2103 = vpop.permute.xlu0 %2102
      %v2105 = vadd.f32 %v2081, %v2093
      %v2106 = vadd.f32 %v2082, %v2093
      %v2107 = vadd.f32 %v2083, %v2098
      %v2108 = vadd.f32 %v2084, %v2098
      %v2109 = vadd.f32 %v2085, %v2103
      %v2110 = vadd.f32 %v2086, %v2103
      %v2111 = vmax.f32 %v2105, 0.0
      %v2112 = vmax.f32 %v2106, 0.0
      %v2113 = vmax.f32 %v2107, 0.0
      %v2114 = vmax.f32 %v2108, 0.0
      %v2115 = vmax.f32 %v2109, 0.0
      %v2116 = vmax.f32 %v2110, 0.0
      %2118 = vset.pattern.permute.xlu0 24
      %2119 = vperm.xlu0 %2118, %v1268
      %v2120 = vpop.permute.xlu0 %2119
      %2123 = vset.pattern.permute.xlu0 24
      %2124 = vperm.xlu0 %2123, %v1269
      %v2125 = vpop.permute.xlu0 %2124
      %2128 = vset.pattern.permute.xlu0 24
      %2129 = vperm.xlu0 %2128, %v1270
      %v2130 = vpop.permute.xlu0 %2129
      %v2132 = vmul.f32 %v2111, %v2120
      %v2133 = vmul.f32 %v2112, %v2120
      %v2134 = vmul.f32 %v2113, %v2125
      %v2135 = vmul.f32 %v2114, %v2125
      %v2136 = vmul.f32 %v2115, %v2130
      %v2137 = vmul.f32 %v2116, %v2130
      %v2138 = vadd.f32 %v2132, 0.0
      %v2139 = vadd.f32 %v2133, 0.0
      %v2140 = vadd.f32 %v2134, 0.0
      %v2141 = vadd.f32 %v2135, 0.0
      %v2142 = vadd.f32 %v2136, 0.0
      %v2143 = vadd.f32 %v2137, 0.0
      %2144 = vset.pattern.permute.xlu0 25
      %2145 = vperm.xlu0 %2144, %v1268
      %v2146 = vpop.permute.xlu0 %2145
      %2148 = vset.pattern.permute.xlu0 25
      %2149 = vperm.xlu0 %2148, %v1269
      %v2150 = vpop.permute.xlu0 %2149
      %2152 = vset.pattern.permute.xlu0 25
      %2153 = vperm.xlu0 %2152, %v1270
      %v2154 = vpop.permute.xlu0 %2153
      %v2156 = vmul.f32 %v2111, %v2146
      %v2157 = vmul.f32 %v2112, %v2146
      %v2158 = vmul.f32 %v2146, 0.0
      %v2159 = vmul.f32 %v2113, %v2150
      %v2160 = vmul.f32 %v2114, %v2150
      %v2161 = vmul.f32 %v2150, 0.0
      %v2162 = vmul.f32 %v2115, %v2154
      %v2163 = vmul.f32 %v2116, %v2154
      %v2164 = vmul.f32 %v2154, 0.0
      %2174 = vrot.lane.b32.xlu0 %v2156, 127
      %v2175 = vpop.permute.xlu0 %2174
      %2176 = vrot.lane.b32.xlu0 %v2157, 127
      %v2177 = vpop.permute.xlu0 %2176
      %2178 = vrot.lane.b32.xlu0 %v2158, 127
      %v2179 = vpop.permute.xlu0 %2178
      %2180 = vrot.lane.b32.xlu0 %v2159, 127
      %v2181 = vpop.permute.xlu0 %2180
      %2182 = vrot.lane.b32.xlu0 %v2160, 127
      %v2183 = vpop.permute.xlu0 %2182
      %2184 = vrot.lane.b32.xlu0 %v2161, 127
      %v2185 = vpop.permute.xlu0 %2184
      %2186 = vrot.lane.b32.xlu0 %v2162, 127
      %v2187 = vpop.permute.xlu0 %2186
      %2188 = vrot.lane.b32.xlu0 %v2163, 127
      %v2189 = vpop.permute.xlu0 %2188
      %2190 = vrot.lane.b32.xlu0 %v2164, 127
      %v2191 = vpop.permute.xlu0 %2190
      %v2192 = vsel %vm894, %v2175, %v2177
      %v2193 = vsel %vm894, %v2177, %v2179
      %v2194 = vsel %vm894, %v2181, %v2183
      %v2195 = vsel %vm894, %v2183, %v2185
      %v2196 = vsel %vm894, %v2187, %v2189
      %v2197 = vsel %vm894, %v2189, %v2191
      %v2204 = vadd.f32 %v2138, %v2192
      %v2205 = vadd.f32 %v2139, %v2193
      %v2206 = vadd.f32 %v2140, %v2194
      %v2207 = vadd.f32 %v2141, %v2195
      %v2208 = vadd.f32 %v2142, %v2196
      %v2209 = vadd.f32 %v2143, %v2197
      %2210 = vset.pattern.permute.xlu0 26
      %2211 = vperm.xlu0 %2210, %v1268
      %v2212 = vpop.permute.xlu0 %2211
      %2214 = vset.pattern.permute.xlu0 26
      %2215 = vperm.xlu0 %2214, %v1269
      %v2216 = vpop.permute.xlu0 %2215
      %2218 = vset.pattern.permute.xlu0 26
      %2219 = vperm.xlu0 %2218, %v1270
      %v2220 = vpop.permute.xlu0 %2219
      %v2222 = vmul.f32 %v2111, %v2212
      %v2223 = vmul.f32 %v2112, %v2212
      %v2224 = vmul.f32 %v2212, 0.0
      %v2225 = vmul.f32 %v2113, %v2216
      %v2226 = vmul.f32 %v2114, %v2216
      %v2227 = vmul.f32 %v2216, 0.0
      %v2228 = vmul.f32 %v2115, %v2220
      %v2229 = vmul.f32 %v2116, %v2220
      %v2230 = vmul.f32 %v2220, 0.0
      %2240 = vrot.lane.b32.xlu0 %v2222, 126
      %v2241 = vpop.permute.xlu0 %2240
      %2242 = vrot.lane.b32.xlu0 %v2223, 126
      %v2243 = vpop.permute.xlu0 %2242
      %2244 = vrot.lane.b32.xlu0 %v2224, 126
      %v2245 = vpop.permute.xlu0 %2244
      %2246 = vrot.lane.b32.xlu0 %v2225, 126
      %v2247 = vpop.permute.xlu0 %2246
      %2248 = vrot.lane.b32.xlu0 %v2226, 126
      %v2249 = vpop.permute.xlu0 %2248
      %2250 = vrot.lane.b32.xlu0 %v2227, 126
      %v2251 = vpop.permute.xlu0 %2250
      %2252 = vrot.lane.b32.xlu0 %v2228, 126
      %v2253 = vpop.permute.xlu0 %2252
      %2254 = vrot.lane.b32.xlu0 %v2229, 126
      %v2255 = vpop.permute.xlu0 %2254
      %2256 = vrot.lane.b32.xlu0 %v2230, 126
      %v2257 = vpop.permute.xlu0 %2256
      %v2258 = vsel %vm940, %v2241, %v2243
      %v2259 = vsel %vm940, %v2243, %v2245
      %v2260 = vsel %vm940, %v2247, %v2249
      %v2261 = vsel %vm940, %v2249, %v2251
      %v2262 = vsel %vm940, %v2253, %v2255
      %v2263 = vsel %vm940, %v2255, %v2257
      %v2270 = vadd.f32 %v2204, %v2258
      %v2271 = vadd.f32 %v2205, %v2259
      %v2272 = vadd.f32 %v2206, %v2260
      %v2273 = vadd.f32 %v2207, %v2261
      %v2274 = vadd.f32 %v2208, %v2262
      %v2275 = vadd.f32 %v2209, %v2263
      %2276 = vset.pattern.permute.xlu0 27
      %2277 = vperm.xlu0 %2276, %v1268
      %v2278 = vpop.permute.xlu0 %2277
      %2280 = vset.pattern.permute.xlu0 27
      %2281 = vperm.xlu0 %2280, %v1269
      %v2282 = vpop.permute.xlu0 %2281
      %2284 = vset.pattern.permute.xlu0 27
      %2285 = vperm.xlu0 %2284, %v1270
      %v2286 = vpop.permute.xlu0 %2285
      %v2288 = vmul.f32 %v2111, %v2278
      %v2289 = vmul.f32 %v2112, %v2278
      %v2290 = vmul.f32 %v2278, 0.0
      %v2291 = vmul.f32 %v2113, %v2282
      %v2292 = vmul.f32 %v2114, %v2282
      %v2293 = vmul.f32 %v2282, 0.0
      %v2294 = vmul.f32 %v2115, %v2286
      %v2295 = vmul.f32 %v2116, %v2286
      %v2296 = vmul.f32 %v2286, 0.0
      %2306 = vrot.lane.b32.xlu0 %v2288, 125
      %v2307 = vpop.permute.xlu0 %2306
      %2308 = vrot.lane.b32.xlu0 %v2289, 125
      %v2309 = vpop.permute.xlu0 %2308
      %2310 = vrot.lane.b32.xlu0 %v2290, 125
      %v2311 = vpop.permute.xlu0 %2310
      %2312 = vrot.lane.b32.xlu0 %v2291, 125
      %v2313 = vpop.permute.xlu0 %2312
      %2314 = vrot.lane.b32.xlu0 %v2292, 125
      %v2315 = vpop.permute.xlu0 %2314
      %2316 = vrot.lane.b32.xlu0 %v2293, 125
      %v2317 = vpop.permute.xlu0 %2316
      %2318 = vrot.lane.b32.xlu0 %v2294, 125
      %v2319 = vpop.permute.xlu0 %2318
      %2320 = vrot.lane.b32.xlu0 %v2295, 125
      %v2321 = vpop.permute.xlu0 %2320
      %2322 = vrot.lane.b32.xlu0 %v2296, 125
      %v2323 = vpop.permute.xlu0 %2322
      %vm2324 = vcmask 1022976
      %v2325 = vsel %vm2324, %v2307, %v2309
      %v2326 = vsel %vm2324, %v2309, %v2311
      %v2327 = vsel %vm2324, %v2313, %v2315
      %v2328 = vsel %vm2324, %v2315, %v2317
      %v2329 = vsel %vm2324, %v2319, %v2321
      %v2330 = vsel %vm2324, %v2321, %v2323
      %v2337 = vadd.f32 %v2270, %v2325
      %v2338 = vadd.f32 %v2271, %v2326
      %v2339 = vadd.f32 %v2272, %v2327
      %v2340 = vadd.f32 %v2273, %v2328
      %v2341 = vadd.f32 %v2274, %v2329
      %v2342 = vadd.f32 %v2275, %v2330
      %2343 = vset.pattern.permute.xlu0 28
      %2344 = vperm.xlu0 %2343, %v1268
      %v2345 = vpop.permute.xlu0 %2344
      %2347 = vset.pattern.permute.xlu0 28
      %2348 = vperm.xlu0 %2347, %v1269
      %v2349 = vpop.permute.xlu0 %2348
      %2351 = vset.pattern.permute.xlu0 28
      %2352 = vperm.xlu0 %2351, %v1270
      %v2353 = vpop.permute.xlu0 %2352
      %v2355 = vmul.f32 %v2111, %v2345
      %v2356 = vmul.f32 %v2112, %v2345
      %v2357 = vmul.f32 %v2345, 0.0
      %v2358 = vmul.f32 %v2113, %v2349
      %v2359 = vmul.f32 %v2114, %v2349
      %v2360 = vmul.f32 %v2349, 0.0
      %v2361 = vmul.f32 %v2115, %v2353
      %v2362 = vmul.f32 %v2116, %v2353
      %v2363 = vmul.f32 %v2353, 0.0
      %2373 = vrot.lane.b32.xlu0 %v2355, 124
      %v2374 = vpop.permute.xlu0 %2373
      %2375 = vrot.lane.b32.xlu0 %v2356, 124
      %v2376 = vpop.permute.xlu0 %2375
      %2377 = vrot.lane.b32.xlu0 %v2357, 124
      %v2378 = vpop.permute.xlu0 %2377
      %2379 = vrot.lane.b32.xlu0 %v2358, 124
      %v2380 = vpop.permute.xlu0 %2379
      %2381 = vrot.lane.b32.xlu0 %v2359, 124
      %v2382 = vpop.permute.xlu0 %2381
      %2383 = vrot.lane.b32.xlu0 %v2360, 124
      %v2384 = vpop.permute.xlu0 %2383
      %2385 = vrot.lane.b32.xlu0 %v2361, 124
      %v2386 = vpop.permute.xlu0 %2385
      %2387 = vrot.lane.b32.xlu0 %v2362, 124
      %v2388 = vpop.permute.xlu0 %2387
      %2389 = vrot.lane.b32.xlu0 %v2363, 124
      %v2390 = vpop.permute.xlu0 %2389
      %vm2391 = vcmask 1014784
      %v2392 = vsel %vm2391, %v2374, %v2376
      %v2393 = vsel %vm2391, %v2376, %v2378
      %v2394 = vsel %vm2391, %v2380, %v2382
      %v2395 = vsel %vm2391, %v2382, %v2384
      %v2396 = vsel %vm2391, %v2386, %v2388
      %v2397 = vsel %vm2391, %v2388, %v2390
      %v2404 = vadd.f32 %v2337, %v2392
      %v2405 = vadd.f32 %v2338, %v2393
      %v2406 = vadd.f32 %v2339, %v2394
      %v2407 = vadd.f32 %v2340, %v2395
      %v2408 = vadd.f32 %v2341, %v2396
      %v2409 = vadd.f32 %v2342, %v2397
      %2410 = vset.pattern.permute.xlu0 35
      %2411 = vperm.xlu0 %2410, %v1268
      %v2412 = vpop.permute.xlu0 %2411
      %2414 = vset.pattern.permute.xlu0 35
      %2415 = vperm.xlu0 %2414, %v1269
      %v2416 = vpop.permute.xlu0 %2415
      %2418 = vset.pattern.permute.xlu0 35
      %2419 = vperm.xlu0 %2418, %v1270
      %v2420 = vpop.permute.xlu0 %2419
      %v2422 = vmul.f32 %v2111, %v2412
      %v2423 = vmul.f32 %v2112, %v2412
      %v2424 = vmul.f32 %v2412, 0.0
      %v2425 = vmul.f32 %v2113, %v2416
      %v2426 = vmul.f32 %v2114, %v2416
      %v2427 = vmul.f32 %v2416, 0.0
      %v2428 = vmul.f32 %v2115, %v2420
      %v2429 = vmul.f32 %v2116, %v2420
      %v2430 = vmul.f32 %v2420, 0.0
      %2440 = vrot.lane.b32.xlu0 %v2422, 112
      %v2441 = vpop.permute.xlu0 %2440
      %2442 = vrot.lane.b32.xlu0 %v2423, 112
      %v2443 = vpop.permute.xlu0 %2442
      %2444 = vrot.lane.b32.xlu0 %v2424, 112
      %v2445 = vpop.permute.xlu0 %2444
      %2446 = vrot.lane.b32.xlu0 %v2425, 112
      %v2447 = vpop.permute.xlu0 %2446
      %2448 = vrot.lane.b32.xlu0 %v2426, 112
      %v2449 = vpop.permute.xlu0 %2448
      %2450 = vrot.lane.b32.xlu0 %v2427, 112
      %v2451 = vpop.permute.xlu0 %2450
      %2452 = vrot.lane.b32.xlu0 %v2428, 112
      %v2453 = vpop.permute.xlu0 %2452
      %2454 = vrot.lane.b32.xlu0 %v2429, 112
      %v2455 = vpop.permute.xlu0 %2454
      %2456 = vrot.lane.b32.xlu0 %v2430, 112
      %v2457 = vpop.permute.xlu0 %2456
      %v2458 = vsel %vm1709, %v2441, %v2443
      %v2459 = vsel %vm1709, %v2443, %v2445
      %v2460 = vsel %vm1709, %v2447, %v2449
      %v2461 = vsel %vm1709, %v2449, %v2451
      %v2462 = vsel %vm1709, %v2453, %v2455
      %v2463 = vsel %vm1709, %v2455, %v2457
      %v2470 = vadd.f32 %v2404, %v2458
      %v2471 = vadd.f32 %v2405, %v2459
      %v2472 = vadd.f32 %v2406, %v2460
      %v2473 = vadd.f32 %v2407, %v2461
      %v2474 = vadd.f32 %v2408, %v2462
      %v2475 = vadd.f32 %v2409, %v2463
      %2476 = vset.pattern.permute.xlu0 36
      %2477 = vperm.xlu0 %2476, %v1268
      %v2478 = vpop.permute.xlu0 %2477
      %2480 = vset.pattern.permute.xlu0 36
      %2481 = vperm.xlu0 %2480, %v1269
      %v2482 = vpop.permute.xlu0 %2481
      %2484 = vset.pattern.permute.xlu0 36
      %2485 = vperm.xlu0 %2484, %v1270
      %v2486 = vpop.permute.xlu0 %2485
      %v2488 = vmul.f32 %v2111, %v2478
      %v2489 = vmul.f32 %v2112, %v2478
      %v2490 = vmul.f32 %v2478, 0.0
      %v2491 = vmul.f32 %v2113, %v2482
      %v2492 = vmul.f32 %v2114, %v2482
      %v2493 = vmul.f32 %v2482, 0.0
      %v2494 = vmul.f32 %v2115, %v2486
      %v2495 = vmul.f32 %v2116, %v2486
      %v2496 = vmul.f32 %v2486, 0.0
      %2506 = vrot.lane.b32.xlu0 %v2488, 111
      %v2507 = vpop.permute.xlu0 %2506
      %2508 = vrot.lane.b32.xlu0 %v2489, 111
      %v2509 = vpop.permute.xlu0 %2508
      %2510 = vrot.lane.b32.xlu0 %v2490, 111
      %v2511 = vpop.permute.xlu0 %2510
      %2512 = vrot.lane.b32.xlu0 %v2491, 111
      %v2513 = vpop.permute.xlu0 %2512
      %2514 = vrot.lane.b32.xlu0 %v2492, 111
      %v2515 = vpop.permute.xlu0 %2514
      %2516 = vrot.lane.b32.xlu0 %v2493, 111
      %v2517 = vpop.permute.xlu0 %2516
      %2518 = vrot.lane.b32.xlu0 %v2494, 111
      %v2519 = vpop.permute.xlu0 %2518
      %2520 = vrot.lane.b32.xlu0 %v2495, 111
      %v2521 = vpop.permute.xlu0 %2520
      %2522 = vrot.lane.b32.xlu0 %v2496, 111
      %v2523 = vpop.permute.xlu0 %2522
      %v2524 = vsel %vm1776, %v2507, %v2509
      %v2525 = vsel %vm1776, %v2509, %v2511
      %v2526 = vsel %vm1776, %v2513, %v2515
      %v2527 = vsel %vm1776, %v2515, %v2517
      %v2528 = vsel %vm1776, %v2519, %v2521
      %v2529 = vsel %vm1776, %v2521, %v2523
      %v2536 = vadd.f32 %v2470, %v2524
      %v2537 = vadd.f32 %v2471, %v2525
      %v2538 = vadd.f32 %v2472, %v2526
      %v2539 = vadd.f32 %v2473, %v2527
      %v2540 = vadd.f32 %v2474, %v2528
      %v2541 = vadd.f32 %v2475, %v2529
      %2542 = vset.pattern.permute.xlu0 37
      %2543 = vperm.xlu0 %2542, %v1268
      %v2544 = vpop.permute.xlu0 %2543
      %2546 = vset.pattern.permute.xlu0 37
      %2547 = vperm.xlu0 %2546, %v1269
      %v2548 = vpop.permute.xlu0 %2547
      %2550 = vset.pattern.permute.xlu0 37
      %2551 = vperm.xlu0 %2550, %v1270
      %v2552 = vpop.permute.xlu0 %2551
      %v2554 = vmul.f32 %v2111, %v2544
      %v2555 = vmul.f32 %v2112, %v2544
      %v2556 = vmul.f32 %v2544, 0.0
      %v2557 = vmul.f32 %v2113, %v2548
      %v2558 = vmul.f32 %v2114, %v2548
      %v2559 = vmul.f32 %v2548, 0.0
      %v2560 = vmul.f32 %v2115, %v2552
      %v2561 = vmul.f32 %v2116, %v2552
      %v2562 = vmul.f32 %v2552, 0.0
      %2572 = vrot.lane.b32.xlu0 %v2554, 110
      %v2573 = vpop.permute.xlu0 %2572
      %2574 = vrot.lane.b32.xlu0 %v2555, 110
      %v2575 = vpop.permute.xlu0 %2574
      %2576 = vrot.lane.b32.xlu0 %v2556, 110
      %v2577 = vpop.permute.xlu0 %2576
      %2578 = vrot.lane.b32.xlu0 %v2557, 110
      %v2579 = vpop.permute.xlu0 %2578
      %2580 = vrot.lane.b32.xlu0 %v2558, 110
      %v2581 = vpop.permute.xlu0 %2580
      %2582 = vrot.lane.b32.xlu0 %v2559, 110
      %v2583 = vpop.permute.xlu0 %2582
      %2584 = vrot.lane.b32.xlu0 %v2560, 110
      %v2585 = vpop.permute.xlu0 %2584
      %2586 = vrot.lane.b32.xlu0 %v2561, 110
      %v2587 = vpop.permute.xlu0 %2586
      %2588 = vrot.lane.b32.xlu0 %v2562, 110
      %v2589 = vpop.permute.xlu0 %2588
      %v2590 = vsel %vm1843, %v2573, %v2575
      %v2591 = vsel %vm1843, %v2575, %v2577
      %v2592 = vsel %vm1843, %v2579, %v2581
      %v2593 = vsel %vm1843, %v2581, %v2583
      %v2594 = vsel %vm1843, %v2585, %v2587
      %v2595 = vsel %vm1843, %v2587, %v2589
      %v2602 = vadd.f32 %v2536, %v2590
      %v2603 = vadd.f32 %v2537, %v2591
      %v2604 = vadd.f32 %v2538, %v2592
      %v2605 = vadd.f32 %v2539, %v2593
      %v2606 = vadd.f32 %v2540, %v2594
      %v2607 = vadd.f32 %v2541, %v2595
      %2608 = vset.pattern.permute.xlu0 38
      %2609 = vperm.xlu0 %2608, %v1268
      %v2610 = vpop.permute.xlu0 %2609
      %2612 = vset.pattern.permute.xlu0 38
      %2613 = vperm.xlu0 %2612, %v1269
      %v2614 = vpop.permute.xlu0 %2613
      %2616 = vset.pattern.permute.xlu0 38
      %2617 = vperm.xlu0 %2616, %v1270
      %v2618 = vpop.permute.xlu0 %2617
      %v2620 = vmul.f32 %v2111, %v2610
      %v2621 = vmul.f32 %v2112, %v2610
      %v2622 = vmul.f32 %v2610, 0.0
      %v2623 = vmul.f32 %v2113, %v2614
      %v2624 = vmul.f32 %v2114, %v2614
      %v2625 = vmul.f32 %v2614, 0.0
      %v2626 = vmul.f32 %v2115, %v2618
      %v2627 = vmul.f32 %v2116, %v2618
      %v2628 = vmul.f32 %v2618, 0.0
      %2638 = vrot.lane.b32.xlu0 %v2620, 109
      %v2639 = vpop.permute.xlu0 %2638
      %2640 = vrot.lane.b32.xlu0 %v2621, 109
      %v2641 = vpop.permute.xlu0 %2640
      %2642 = vrot.lane.b32.xlu0 %v2622, 109
      %v2643 = vpop.permute.xlu0 %2642
      %2644 = vrot.lane.b32.xlu0 %v2623, 109
      %v2645 = vpop.permute.xlu0 %2644
      %2646 = vrot.lane.b32.xlu0 %v2624, 109
      %v2647 = vpop.permute.xlu0 %2646
      %2648 = vrot.lane.b32.xlu0 %v2625, 109
      %v2649 = vpop.permute.xlu0 %2648
      %2650 = vrot.lane.b32.xlu0 %v2626, 109
      %v2651 = vpop.permute.xlu0 %2650
      %2652 = vrot.lane.b32.xlu0 %v2627, 109
      %v2653 = vpop.permute.xlu0 %2652
      %2654 = vrot.lane.b32.xlu0 %v2628, 109
      %v2655 = vpop.permute.xlu0 %2654
      %vm2656 = vcmask 891904
      %v2657 = vsel %vm2656, %v2639, %v2641
      %v2658 = vsel %vm2656, %v2641, %v2643
      %v2659 = vsel %vm2656, %v2645, %v2647
      %v2660 = vsel %vm2656, %v2647, %v2649
      %v2661 = vsel %vm2656, %v2651, %v2653
      %v2662 = vsel %vm2656, %v2653, %v2655
      %v2669 = vadd.f32 %v2602, %v2657
      %v2670 = vadd.f32 %v2603, %v2658
      %v2671 = vadd.f32 %v2604, %v2659
      %v2672 = vadd.f32 %v2605, %v2660
      %v2673 = vadd.f32 %v2606, %v2661
      %v2674 = vadd.f32 %v2607, %v2662
      %2675 = vset.pattern.permute.xlu0 39
      %2676 = vperm.xlu0 %2675, %v1268
      %v2677 = vpop.permute.xlu0 %2676
      %2679 = vset.pattern.permute.xlu0 39
      %2680 = vperm.xlu0 %2679, %v1269
      %v2681 = vpop.permute.xlu0 %2680
      %2683 = vset.pattern.permute.xlu0 39
      %2684 = vperm.xlu0 %2683, %v1270
      %v2685 = vpop.permute.xlu0 %2684
      %v2687 = vmul.f32 %v2111, %v2677
      %v2688 = vmul.f32 %v2112, %v2677
      %v2689 = vmul.f32 %v2677, 0.0
      %v2690 = vmul.f32 %v2113, %v2681
      %v2691 = vmul.f32 %v2114, %v2681
      %v2692 = vmul.f32 %v2681, 0.0
      %v2693 = vmul.f32 %v2115, %v2685
      %v2694 = vmul.f32 %v2116, %v2685
      %v2695 = vmul.f32 %v2685, 0.0
      %2705 = vrot.lane.b32.xlu0 %v2687, 108
      %v2706 = vpop.permute.xlu0 %2705
      %2707 = vrot.lane.b32.xlu0 %v2688, 108
      %v2708 = vpop.permute.xlu0 %2707
      %2709 = vrot.lane.b32.xlu0 %v2689, 108
      %v2710 = vpop.permute.xlu0 %2709
      %2711 = vrot.lane.b32.xlu0 %v2690, 108
      %v2712 = vpop.permute.xlu0 %2711
      %2713 = vrot.lane.b32.xlu0 %v2691, 108
      %v2714 = vpop.permute.xlu0 %2713
      %2715 = vrot.lane.b32.xlu0 %v2692, 108
      %v2716 = vpop.permute.xlu0 %2715
      %2717 = vrot.lane.b32.xlu0 %v2693, 108
      %v2718 = vpop.permute.xlu0 %2717
      %2719 = vrot.lane.b32.xlu0 %v2694, 108
      %v2720 = vpop.permute.xlu0 %2719
      %2721 = vrot.lane.b32.xlu0 %v2695, 108
      %v2722 = vpop.permute.xlu0 %2721
      %vm2723 = vcmask 883712
      %v2724 = vsel %vm2723, %v2706, %v2708
      %v2725 = vsel %vm2723, %v2708, %v2710
      %v2726 = vsel %vm2723, %v2712, %v2714
      %v2727 = vsel %vm2723, %v2714, %v2716
      %v2728 = vsel %vm2723, %v2718, %v2720
      %v2729 = vsel %vm2723, %v2720, %v2722
      %v2736 = vadd.f32 %v2669, %v2724
      %v2737 = vadd.f32 %v2670, %v2725
      %v2738 = vadd.f32 %v2671, %v2726
      %v2739 = vadd.f32 %v2672, %v2727
      %v2740 = vadd.f32 %v2673, %v2728
      %v2741 = vadd.f32 %v2674, %v2729
      %2742 = vset.pattern.permute.xlu0 46
      %2743 = vperm.xlu0 %2742, %v1268
      %v2744 = vpop.permute.xlu0 %2743
      %2746 = vset.pattern.permute.xlu0 46
      %2747 = vperm.xlu0 %2746, %v1269
      %v2748 = vpop.permute.xlu0 %2747
      %2750 = vset.pattern.permute.xlu0 46
      %2751 = vperm.xlu0 %2750, %v1270
      %v2752 = vpop.permute.xlu0 %2751
      %v2754 = vmul.f32 %v2111, %v2744
      %v2755 = vmul.f32 %v2112, %v2744
      %v2756 = vmul.f32 %v2744, 0.0
      %v2757 = vmul.f32 %v2113, %v2748
      %v2758 = vmul.f32 %v2114, %v2748
      %v2759 = vmul.f32 %v2748, 0.0
      %v2760 = vmul.f32 %v2115, %v2752
      %v2761 = vmul.f32 %v2116, %v2752
      %v2762 = vmul.f32 %v2752, 0.0
      %2772 = vrot.lane.b32.xlu0 %v2754, 96
      %v2773 = vpop.permute.xlu0 %2772
      %2774 = vrot.lane.b32.xlu0 %v2755, 96
      %v2775 = vpop.permute.xlu0 %2774
      %2776 = vrot.lane.b32.xlu0 %v2756, 96
      %v2777 = vpop.permute.xlu0 %2776
      %2778 = vrot.lane.b32.xlu0 %v2757, 96
      %v2779 = vpop.permute.xlu0 %2778
      %2780 = vrot.lane.b32.xlu0 %v2758, 96
      %v2781 = vpop.permute.xlu0 %2780
      %2782 = vrot.lane.b32.xlu0 %v2759, 96
      %v2783 = vpop.permute.xlu0 %2782
      %2784 = vrot.lane.b32.xlu0 %v2760, 96
      %v2785 = vpop.permute.xlu0 %2784
      %2786 = vrot.lane.b32.xlu0 %v2761, 96
      %v2787 = vpop.permute.xlu0 %2786
      %2788 = vrot.lane.b32.xlu0 %v2762, 96
      %v2789 = vpop.permute.xlu0 %2788
      %v2790 = vsel %vm1910, %v2773, %v2775
      %v2791 = vsel %vm1910, %v2775, %v2777
      %v2792 = vsel %vm1910, %v2779, %v2781
      %v2793 = vsel %vm1910, %v2781, %v2783
      %v2794 = vsel %vm1910, %v2785, %v2787
      %v2795 = vsel %vm1910, %v2787, %v2789
      %v2802 = vadd.f32 %v2736, %v2790
      %v2803 = vadd.f32 %v2737, %v2791
      %v2804 = vadd.f32 %v2738, %v2792
      %v2805 = vadd.f32 %v2739, %v2793
      %v2806 = vadd.f32 %v2740, %v2794
      %v2807 = vadd.f32 %v2741, %v2795
      %2808 = vset.pattern.permute.xlu0 47
      %2809 = vperm.xlu0 %2808, %v1268
      %v2810 = vpop.permute.xlu0 %2809
      %2812 = vset.pattern.permute.xlu0 47
      %2813 = vperm.xlu0 %2812, %v1269
      %v2814 = vpop.permute.xlu0 %2813
      %2816 = vset.pattern.permute.xlu0 47
      %2817 = vperm.xlu0 %2816, %v1270
      %v2818 = vpop.permute.xlu0 %2817
      %v2820 = vmul.f32 %v2111, %v2810
      %v2821 = vmul.f32 %v2112, %v2810
      %v2822 = vmul.f32 %v2810, 0.0
      %v2823 = vmul.f32 %v2113, %v2814
      %v2824 = vmul.f32 %v2114, %v2814
      %v2825 = vmul.f32 %v2814, 0.0
      %v2826 = vmul.f32 %v2115, %v2818
      %v2827 = vmul.f32 %v2116, %v2818
      %v2828 = vmul.f32 %v2818, 0.0
      %2838 = vrot.lane.b32.xlu0 %v2820, 95
      %v2839 = vpop.permute.xlu0 %2838
      %2840 = vrot.lane.b32.xlu0 %v2821, 95
      %v2841 = vpop.permute.xlu0 %2840
      %2842 = vrot.lane.b32.xlu0 %v2822, 95
      %v2843 = vpop.permute.xlu0 %2842
      %2844 = vrot.lane.b32.xlu0 %v2823, 95
      %v2845 = vpop.permute.xlu0 %2844
      %2846 = vrot.lane.b32.xlu0 %v2824, 95
      %v2847 = vpop.permute.xlu0 %2846
      %2848 = vrot.lane.b32.xlu0 %v2825, 95
      %v2849 = vpop.permute.xlu0 %2848
      %2850 = vrot.lane.b32.xlu0 %v2826, 95
      %v2851 = vpop.permute.xlu0 %2850
      %2852 = vrot.lane.b32.xlu0 %v2827, 95
      %v2853 = vpop.permute.xlu0 %2852
      %2854 = vrot.lane.b32.xlu0 %v2828, 95
      %v2855 = vpop.permute.xlu0 %2854
      %v2856 = vsel %vm1977, %v2839, %v2841
      %v2857 = vsel %vm1977, %v2841, %v2843
      %v2858 = vsel %vm1977, %v2845, %v2847
      %v2859 = vsel %vm1977, %v2847, %v2849
      %v2860 = vsel %vm1977, %v2851, %v2853
      %v2861 = vsel %vm1977, %v2853, %v2855
      %v2868 = vadd.f32 %v2802, %v2856
      %v2869 = vadd.f32 %v2803, %v2857
      %v2870 = vadd.f32 %v2804, %v2858
      %v2871 = vadd.f32 %v2805, %v2859
      %v2872 = vadd.f32 %v2806, %v2860
      %v2873 = vadd.f32 %v2807, %v2861
      %2874 = vset.pattern.permute.xlu0 48
      %2875 = vperm.xlu0 %2874, %v1268
      %v2876 = vpop.permute.xlu0 %2875
      %2878 = vset.pattern.permute.xlu0 48
      %2879 = vperm.xlu0 %2878, %v1269
      %v2880 = vpop.permute.xlu0 %2879
      %2882 = vset.pattern.permute.xlu0 48
      %2883 = vperm.xlu0 %2882, %v1270
      %v2884 = vpop.permute.xlu0 %2883
      %v2886 = vmul.f32 %v2111, %v2876
      %v2887 = vmul.f32 %v2112, %v2876
      %v2888 = vmul.f32 %v2876, 0.0
      %v2889 = vmul.f32 %v2113, %v2880
      %v2890 = vmul.f32 %v2114, %v2880
      %v2891 = vmul.f32 %v2880, 0.0
      %v2892 = vmul.f32 %v2115, %v2884
      %v2893 = vmul.f32 %v2116, %v2884
      %v2894 = vmul.f32 %v2884, 0.0
      %2904 = vrot.lane.b32.xlu0 %v2886, 94
      %v2905 = vpop.permute.xlu0 %2904
      %2906 = vrot.lane.b32.xlu0 %v2887, 94
      %v2907 = vpop.permute.xlu0 %2906
      %2908 = vrot.lane.b32.xlu0 %v2888, 94
      %v2909 = vpop.permute.xlu0 %2908
      %2910 = vrot.lane.b32.xlu0 %v2889, 94
      %v2911 = vpop.permute.xlu0 %2910
      %2912 = vrot.lane.b32.xlu0 %v2890, 94
      %v2913 = vpop.permute.xlu0 %2912
      %2914 = vrot.lane.b32.xlu0 %v2891, 94
      %v2915 = vpop.permute.xlu0 %2914
      %2916 = vrot.lane.b32.xlu0 %v2892, 94
      %v2917 = vpop.permute.xlu0 %2916
      %2918 = vrot.lane.b32.xlu0 %v2893, 94
      %v2919 = vpop.permute.xlu0 %2918
      %2920 = vrot.lane.b32.xlu0 %v2894, 94
      %v2921 = vpop.permute.xlu0 %2920
      %v2922 = vsel %vm2044, %v2905, %v2907
      %v2923 = vsel %vm2044, %v2907, %v2909
      %v2924 = vsel %vm2044, %v2911, %v2913
      %v2925 = vsel %vm2044, %v2913, %v2915
      %v2926 = vsel %vm2044, %v2917, %v2919
      %v2927 = vsel %vm2044, %v2919, %v2921
      %v2934 = vadd.f32 %v2868, %v2922
      %v2935 = vadd.f32 %v2869, %v2923
      %v2936 = vadd.f32 %v2870, %v2924
      %v2937 = vadd.f32 %v2871, %v2925
      %v2938 = vadd.f32 %v2872, %v2926
      %v2939 = vadd.f32 %v2873, %v2927
      %2940 = vset.pattern.permute.xlu0 49
      %2941 = vperm.xlu0 %2940, %v1268
      %v2942 = vpop.permute.xlu0 %2941
      %2944 = vset.pattern.permute.xlu0 49
      %2945 = vperm.xlu0 %2944, %v1269
      %v2946 = vpop.permute.xlu0 %2945
      %2948 = vset.pattern.permute.xlu0 49
      %2949 = vperm.xlu0 %2948, %v1270
      %v2950 = vpop.permute.xlu0 %2949
      %v2952 = vmul.f32 %v2111, %v2942
      %v2953 = vmul.f32 %v2112, %v2942
      %v2954 = vmul.f32 %v2942, 0.0
      %v2955 = vmul.f32 %v2113, %v2946
      %v2956 = vmul.f32 %v2114, %v2946
      %v2957 = vmul.f32 %v2946, 0.0
      %v2958 = vmul.f32 %v2115, %v2950
      %v2959 = vmul.f32 %v2116, %v2950
      %v2960 = vmul.f32 %v2950, 0.0
      %2970 = vrot.lane.b32.xlu0 %v2952, 93
      %v2971 = vpop.permute.xlu0 %2970
      %2972 = vrot.lane.b32.xlu0 %v2953, 93
      %v2973 = vpop.permute.xlu0 %2972
      %2974 = vrot.lane.b32.xlu0 %v2954, 93
      %v2975 = vpop.permute.xlu0 %2974
      %2976 = vrot.lane.b32.xlu0 %v2955, 93
      %v2977 = vpop.permute.xlu0 %2976
      %2978 = vrot.lane.b32.xlu0 %v2956, 93
      %v2979 = vpop.permute.xlu0 %2978
      %2980 = vrot.lane.b32.xlu0 %v2957, 93
      %v2981 = vpop.permute.xlu0 %2980
      %2982 = vrot.lane.b32.xlu0 %v2958, 93
      %v2983 = vpop.permute.xlu0 %2982
      %2984 = vrot.lane.b32.xlu0 %v2959, 93
      %v2985 = vpop.permute.xlu0 %2984
      %2986 = vrot.lane.b32.xlu0 %v2960, 93
      %v2987 = vpop.permute.xlu0 %2986
      %vm2988 = vcmask 760832
      %v2989 = vsel %vm2988, %v2971, %v2973
      %v2990 = vsel %vm2988, %v2973, %v2975
      %v2991 = vsel %vm2988, %v2977, %v2979
      %v2992 = vsel %vm2988, %v2979, %v2981
      %v2993 = vsel %vm2988, %v2983, %v2985
      %v2994 = vsel %vm2988, %v2985, %v2987
      %v3001 = vadd.f32 %v2934, %v2989
      %v3002 = vadd.f32 %v2935, %v2990
      %v3003 = vadd.f32 %v2936, %v2991
      %v3004 = vadd.f32 %v2937, %v2992
      %v3005 = vadd.f32 %v2938, %v2993
      %v3006 = vadd.f32 %v2939, %v2994
      %3007 = vset.pattern.permute.xlu0 50
      %3008 = vperm.xlu0 %3007, %v1268
      %v3009 = vpop.permute.xlu0 %3008
      %3011 = vset.pattern.permute.xlu0 50
      %3012 = vperm.xlu0 %3011, %v1269
      %v3013 = vpop.permute.xlu0 %3012
      %3015 = vset.pattern.permute.xlu0 50
      %3016 = vperm.xlu0 %3015, %v1270
      %v3017 = vpop.permute.xlu0 %3016
      %v3019 = vmul.f32 %v2111, %v3009
      %v3020 = vmul.f32 %v2112, %v3009
      %v3021 = vmul.f32 %v3009, 0.0
      %v3022 = vmul.f32 %v2113, %v3013
      %v3023 = vmul.f32 %v2114, %v3013
      %v3024 = vmul.f32 %v3013, 0.0
      %v3025 = vmul.f32 %v2115, %v3017
      %v3026 = vmul.f32 %v2116, %v3017
      %v3027 = vmul.f32 %v3017, 0.0
      %3037 = vrot.lane.b32.xlu0 %v3019, 92
      %v3038 = vpop.permute.xlu0 %3037
      %3039 = vrot.lane.b32.xlu0 %v3020, 92
      %v3040 = vpop.permute.xlu0 %3039
      %3041 = vrot.lane.b32.xlu0 %v3021, 92
      %v3042 = vpop.permute.xlu0 %3041
      %3043 = vrot.lane.b32.xlu0 %v3022, 92
      %v3044 = vpop.permute.xlu0 %3043
      %3045 = vrot.lane.b32.xlu0 %v3023, 92
      %v3046 = vpop.permute.xlu0 %3045
      %3047 = vrot.lane.b32.xlu0 %v3024, 92
      %v3048 = vpop.permute.xlu0 %3047
      %3049 = vrot.lane.b32.xlu0 %v3025, 92
      %v3050 = vpop.permute.xlu0 %3049
      %3051 = vrot.lane.b32.xlu0 %v3026, 92
      %v3052 = vpop.permute.xlu0 %3051
      %3053 = vrot.lane.b32.xlu0 %v3027, 92
      %v3054 = vpop.permute.xlu0 %3053
      %vm3055 = vcmask 752640
      %v3056 = vsel %vm3055, %v3038, %v3040
      %v3057 = vsel %vm3055, %v3040, %v3042
      %v3058 = vsel %vm3055, %v3044, %v3046
      %v3059 = vsel %vm3055, %v3046, %v3048
      %v3060 = vsel %vm3055, %v3050, %v3052
      %v3061 = vsel %vm3055, %v3052, %v3054
      %v3068 = vadd.f32 %v3001, %v3056
      %v3069 = vadd.f32 %v3002, %v3057
      %v3070 = vadd.f32 %v3003, %v3058
      %v3071 = vadd.f32 %v3004, %v3059
      %v3072 = vadd.f32 %v3005, %v3060
      %v3073 = vadd.f32 %v3006, %v3061
      %3074 = vset.pattern.permute.xlu0 57
      %3075 = vperm.xlu0 %3074, %v1268
      %v3076 = vpop.permute.xlu0 %3075
      %3078 = vset.pattern.permute.xlu0 57
      %3079 = vperm.xlu0 %3078, %v1269
      %v3080 = vpop.permute.xlu0 %3079
      %3082 = vset.pattern.permute.xlu0 57
      %3083 = vperm.xlu0 %3082, %v1270
      %v3084 = vpop.permute.xlu0 %3083
      %v3086 = vmul.f32 %v2111, %v3076
      %v3087 = vmul.f32 %v2112, %v3076
      %v3088 = vmul.f32 %v3076, 0.0
      %v3089 = vmul.f32 %v2113, %v3080
      %v3090 = vmul.f32 %v2114, %v3080
      %v3091 = vmul.f32 %v3080, 0.0
      %v3092 = vmul.f32 %v2115, %v3084
      %v3093 = vmul.f32 %v2116, %v3084
      %v3094 = vmul.f32 %v3084, 0.0
      %3104 = vrot.lane.b32.xlu0 %v3086, 80
      %v3105 = vpop.permute.xlu0 %3104
      %3106 = vrot.lane.b32.xlu0 %v3087, 80
      %v3107 = vpop.permute.xlu0 %3106
      %3108 = vrot.lane.b32.xlu0 %v3088, 80
      %v3109 = vpop.permute.xlu0 %3108
      %3110 = vrot.lane.b32.xlu0 %v3089, 80
      %v3111 = vpop.permute.xlu0 %3110
      %3112 = vrot.lane.b32.xlu0 %v3090, 80
      %v3113 = vpop.permute.xlu0 %3112
      %3114 = vrot.lane.b32.xlu0 %v3091, 80
      %v3115 = vpop.permute.xlu0 %3114
      %3116 = vrot.lane.b32.xlu0 %v3092, 80
      %v3117 = vpop.permute.xlu0 %3116
      %3118 = vrot.lane.b32.xlu0 %v3093, 80
      %v3119 = vpop.permute.xlu0 %3118
      %3120 = vrot.lane.b32.xlu0 %v3094, 80
      %v3121 = vpop.permute.xlu0 %3120
      %vm3122 = vcmask 654336
      %v3123 = vsel %vm3122, %v3105, %v3107
      %v3124 = vsel %vm3122, %v3107, %v3109
      %v3125 = vsel %vm3122, %v3111, %v3113
      %v3126 = vsel %vm3122, %v3113, %v3115
      %v3127 = vsel %vm3122, %v3117, %v3119
      %v3128 = vsel %vm3122, %v3119, %v3121
      %v3135 = vadd.f32 %v3068, %v3123
      %v3136 = vadd.f32 %v3069, %v3124
      %v3137 = vadd.f32 %v3070, %v3125
      %v3138 = vadd.f32 %v3071, %v3126
      %v3139 = vadd.f32 %v3072, %v3127
      %v3140 = vadd.f32 %v3073, %v3128
      %3141 = vset.pattern.permute.xlu0 58
      %3142 = vperm.xlu0 %3141, %v1268
      %v3143 = vpop.permute.xlu0 %3142
      %3145 = vset.pattern.permute.xlu0 58
      %3146 = vperm.xlu0 %3145, %v1269
      %v3147 = vpop.permute.xlu0 %3146
      %3149 = vset.pattern.permute.xlu0 58
      %3150 = vperm.xlu0 %3149, %v1270
      %v3151 = vpop.permute.xlu0 %3150
      %v3153 = vmul.f32 %v2111, %v3143
      %v3154 = vmul.f32 %v2112, %v3143
      %v3155 = vmul.f32 %v3143, 0.0
      %v3156 = vmul.f32 %v2113, %v3147
      %v3157 = vmul.f32 %v2114, %v3147
      %v3158 = vmul.f32 %v3147, 0.0
      %v3159 = vmul.f32 %v2115, %v3151
      %v3160 = vmul.f32 %v2116, %v3151
      %v3161 = vmul.f32 %v3151, 0.0
      %3171 = vrot.lane.b32.xlu0 %v3153, 79
      %v3172 = vpop.permute.xlu0 %3171
      %3173 = vrot.lane.b32.xlu0 %v3154, 79
      %v3174 = vpop.permute.xlu0 %3173
      %3175 = vrot.lane.b32.xlu0 %v3155, 79
      %v3176 = vpop.permute.xlu0 %3175
      %3177 = vrot.lane.b32.xlu0 %v3156, 79
      %v3178 = vpop.permute.xlu0 %3177
      %3179 = vrot.lane.b32.xlu0 %v3157, 79
      %v3180 = vpop.permute.xlu0 %3179
      %3181 = vrot.lane.b32.xlu0 %v3158, 79
      %v3182 = vpop.permute.xlu0 %3181
      %3183 = vrot.lane.b32.xlu0 %v3159, 79
      %v3184 = vpop.permute.xlu0 %3183
      %3185 = vrot.lane.b32.xlu0 %v3160, 79
      %v3186 = vpop.permute.xlu0 %3185
      %3187 = vrot.lane.b32.xlu0 %v3161, 79
      %v3188 = vpop.permute.xlu0 %3187
      %vm3189 = vcmask 646144
      %v3190 = vsel %vm3189, %v3172, %v3174
      %v3191 = vsel %vm3189, %v3174, %v3176
      %v3192 = vsel %vm3189, %v3178, %v3180
      %v3193 = vsel %vm3189, %v3180, %v3182
      %v3194 = vsel %vm3189, %v3184, %v3186
      %v3195 = vsel %vm3189, %v3186, %v3188
      %v3202 = vadd.f32 %v3135, %v3190
      %v3203 = vadd.f32 %v3136, %v3191
      %v3204 = vadd.f32 %v3137, %v3192
      %v3205 = vadd.f32 %v3138, %v3193
      %v3206 = vadd.f32 %v3139, %v3194
      %v3207 = vadd.f32 %v3140, %v3195
      %3208 = vset.pattern.permute.xlu0 59
      %3209 = vperm.xlu0 %3208, %v1268
      %v3210 = vpop.permute.xlu0 %3209
      %3212 = vset.pattern.permute.xlu0 59
      %3213 = vperm.xlu0 %3212, %v1269
      %v3214 = vpop.permute.xlu0 %3213
      %3216 = vset.pattern.permute.xlu0 59
      %3217 = vperm.xlu0 %3216, %v1270
      %v3218 = vpop.permute.xlu0 %3217
      %v3220 = vmul.f32 %v2111, %v3210
      %v3221 = vmul.f32 %v2112, %v3210
      %v3222 = vmul.f32 %v3210, 0.0
      %v3223 = vmul.f32 %v2113, %v3214
      %v3224 = vmul.f32 %v2114, %v3214
      %v3225 = vmul.f32 %v3214, 0.0
      %v3226 = vmul.f32 %v2115, %v3218
      %v3227 = vmul.f32 %v2116, %v3218
      %v3228 = vmul.f32 %v3218, 0.0
      %3238 = vrot.lane.b32.xlu0 %v3220, 78
      %v3239 = vpop.permute.xlu0 %3238
      %3240 = vrot.lane.b32.xlu0 %v3221, 78
      %v3241 = vpop.permute.xlu0 %3240
      %3242 = vrot.lane.b32.xlu0 %v3222, 78
      %v3243 = vpop.permute.xlu0 %3242
      %3244 = vrot.lane.b32.xlu0 %v3223, 78
      %v3245 = vpop.permute.xlu0 %3244
      %3246 = vrot.lane.b32.xlu0 %v3224, 78
      %v3247 = vpop.permute.xlu0 %3246
      %3248 = vrot.lane.b32.xlu0 %v3225, 78
      %v3249 = vpop.permute.xlu0 %3248
      %3250 = vrot.lane.b32.xlu0 %v3226, 78
      %v3251 = vpop.permute.xlu0 %3250
      %3252 = vrot.lane.b32.xlu0 %v3227, 78
      %v3253 = vpop.permute.xlu0 %3252
      %3254 = vrot.lane.b32.xlu0 %v3228, 78
      %v3255 = vpop.permute.xlu0 %3254
      %vm3256 = vcmask 637952
      %v3257 = vsel %vm3256, %v3239, %v3241
      %v3258 = vsel %vm3256, %v3241, %v3243
      %v3259 = vsel %vm3256, %v3245, %v3247
      %v3260 = vsel %vm3256, %v3247, %v3249
      %v3261 = vsel %vm3256, %v3251, %v3253
      %v3262 = vsel %vm3256, %v3253, %v3255
      %v3269 = vadd.f32 %v3202, %v3257
      %v3270 = vadd.f32 %v3203, %v3258
      %v3271 = vadd.f32 %v3204, %v3259
      %v3272 = vadd.f32 %v3205, %v3260
      %v3273 = vadd.f32 %v3206, %v3261
      %v3274 = vadd.f32 %v3207, %v3262
      %3275 = vset.pattern.permute.xlu0 60
      %3276 = vperm.xlu0 %3275, %v1268
      %v3277 = vpop.permute.xlu0 %3276
      %3279 = vset.pattern.permute.xlu0 60
      %3280 = vperm.xlu0 %3279, %v1269
      %v3281 = vpop.permute.xlu0 %3280
      %3283 = vset.pattern.permute.xlu0 60
      %3284 = vperm.xlu0 %3283, %v1270
      %v3285 = vpop.permute.xlu0 %3284
      %v3287 = vmul.f32 %v2111, %v3277
      %v3288 = vmul.f32 %v2112, %v3277
      %v3289 = vmul.f32 %v3277, 0.0
      %v3290 = vmul.f32 %v2113, %v3281
      %v3291 = vmul.f32 %v2114, %v3281
      %v3292 = vmul.f32 %v3281, 0.0
      %v3293 = vmul.f32 %v2115, %v3285
      %v3294 = vmul.f32 %v2116, %v3285
      %v3295 = vmul.f32 %v3285, 0.0
      %3305 = vrot.lane.b32.xlu0 %v3287, 77
      %v3306 = vpop.permute.xlu0 %3305
      %3307 = vrot.lane.b32.xlu0 %v3288, 77
      %v3308 = vpop.permute.xlu0 %3307
      %3309 = vrot.lane.b32.xlu0 %v3289, 77
      %v3310 = vpop.permute.xlu0 %3309
      %3311 = vrot.lane.b32.xlu0 %v3290, 77
      %v3312 = vpop.permute.xlu0 %3311
      %3313 = vrot.lane.b32.xlu0 %v3291, 77
      %v3314 = vpop.permute.xlu0 %3313
      %3315 = vrot.lane.b32.xlu0 %v3292, 77
      %v3316 = vpop.permute.xlu0 %3315
      %3317 = vrot.lane.b32.xlu0 %v3293, 77
      %v3318 = vpop.permute.xlu0 %3317
      %3319 = vrot.lane.b32.xlu0 %v3294, 77
      %v3320 = vpop.permute.xlu0 %3319
      %3321 = vrot.lane.b32.xlu0 %v3295, 77
      %v3322 = vpop.permute.xlu0 %3321
      %vm3323 = vcmask 629760
      %v3324 = vsel %vm3323, %v3306, %v3308
      %v3325 = vsel %vm3323, %v3308, %v3310
      %v3326 = vsel %vm3323, %v3312, %v3314
      %v3327 = vsel %vm3323, %v3314, %v3316
      %v3328 = vsel %vm3323, %v3318, %v3320
      %v3329 = vsel %vm3323, %v3320, %v3322
      %v3336 = vadd.f32 %v3269, %v3324
      %v3337 = vadd.f32 %v3270, %v3325
      %v3338 = vadd.f32 %v3271, %v3326
      %v3339 = vadd.f32 %v3272, %v3327
      %v3340 = vadd.f32 %v3273, %v3328
      %v3341 = vadd.f32 %v3274, %v3329
      %3342 = vset.pattern.permute.xlu0 61
      %3343 = vperm.xlu0 %3342, %v1268
      %v3344 = vpop.permute.xlu0 %3343
      %3346 = vset.pattern.permute.xlu0 61
      %3347 = vperm.xlu0 %3346, %v1269
      %v3348 = vpop.permute.xlu0 %3347
      %3350 = vset.pattern.permute.xlu0 61
      %3351 = vperm.xlu0 %3350, %v1270
      %v3352 = vpop.permute.xlu0 %3351
      %v3354 = vmul.f32 %v2111, %v3344
      %v3355 = vmul.f32 %v2112, %v3344
      %v3356 = vmul.f32 %v3344, 0.0
      %v3357 = vmul.f32 %v2113, %v3348
      %v3358 = vmul.f32 %v2114, %v3348
      %v3359 = vmul.f32 %v3348, 0.0
      %v3360 = vmul.f32 %v2115, %v3352
      %v3361 = vmul.f32 %v2116, %v3352
      %v3362 = vmul.f32 %v3352, 0.0
      %3372 = vrot.lane.b32.xlu0 %v3354, 76
      %v3373 = vpop.permute.xlu0 %3372
      %3374 = vrot.lane.b32.xlu0 %v3355, 76
      %v3375 = vpop.permute.xlu0 %3374
      %3376 = vrot.lane.b32.xlu0 %v3356, 76
      %v3377 = vpop.permute.xlu0 %3376
      %3378 = vrot.lane.b32.xlu0 %v3357, 76
      %v3379 = vpop.permute.xlu0 %3378
      %3380 = vrot.lane.b32.xlu0 %v3358, 76
      %v3381 = vpop.permute.xlu0 %3380
      %3382 = vrot.lane.b32.xlu0 %v3359, 76
      %v3383 = vpop.permute.xlu0 %3382
      %3384 = vrot.lane.b32.xlu0 %v3360, 76
      %v3385 = vpop.permute.xlu0 %3384
      %3386 = vrot.lane.b32.xlu0 %v3361, 76
      %v3387 = vpop.permute.xlu0 %3386
      %3388 = vrot.lane.b32.xlu0 %v3362, 76
      %v3389 = vpop.permute.xlu0 %3388
      %vm3390 = vcmask 621568
      %v3391 = vsel %vm3390, %v3373, %v3375
      %v3392 = vsel %vm3390, %v3375, %v3377
      %v3393 = vsel %vm3390, %v3379, %v3381
      %v3394 = vsel %vm3390, %v3381, %v3383
      %v3395 = vsel %vm3390, %v3385, %v3387
      %v3396 = vsel %vm3390, %v3387, %v3389
      %v3403 = vadd.f32 %v3336, %v3391
      %v3404 = vadd.f32 %v3337, %v3392
      %v3405 = vadd.f32 %v3338, %v3393
      %v3406 = vadd.f32 %v3339, %v3394
      %v3407 = vadd.f32 %v3340, %v3395
      %v3408 = vadd.f32 %v3341, %v3396
      %3409 = vset.pattern.permute.xlu0 68
      %3410 = vperm.xlu0 %3409, %v1268
      %v3411 = vpop.permute.xlu0 %3410
      %3413 = vset.pattern.permute.xlu0 68
      %3414 = vperm.xlu0 %3413, %v1269
      %v3415 = vpop.permute.xlu0 %3414
      %3417 = vset.pattern.permute.xlu0 68
      %3418 = vperm.xlu0 %3417, %v1270
      %v3419 = vpop.permute.xlu0 %3418
      %v3421 = vmul.f32 %v2111, %v3411
      %v3422 = vmul.f32 %v2112, %v3411
      %v3423 = vmul.f32 %v3411, 0.0
      %v3424 = vmul.f32 %v2113, %v3415
      %v3425 = vmul.f32 %v2114, %v3415
      %v3426 = vmul.f32 %v3415, 0.0
      %v3427 = vmul.f32 %v2115, %v3419
      %v3428 = vmul.f32 %v2116, %v3419
      %v3429 = vmul.f32 %v3419, 0.0
      %3439 = vrot.lane.b32.xlu0 %v3421, 64
      %v3440 = vpop.permute.xlu0 %3439
      %3441 = vrot.lane.b32.xlu0 %v3422, 64
      %v3442 = vpop.permute.xlu0 %3441
      %3443 = vrot.lane.b32.xlu0 %v3423, 64
      %v3444 = vpop.permute.xlu0 %3443
      %3445 = vrot.lane.b32.xlu0 %v3424, 64
      %v3446 = vpop.permute.xlu0 %3445
      %3447 = vrot.lane.b32.xlu0 %v3425, 64
      %v3448 = vpop.permute.xlu0 %3447
      %3449 = vrot.lane.b32.xlu0 %v3426, 64
      %v3450 = vpop.permute.xlu0 %3449
      %3451 = vrot.lane.b32.xlu0 %v3427, 64
      %v3452 = vpop.permute.xlu0 %3451
      %3453 = vrot.lane.b32.xlu0 %v3428, 64
      %v3454 = vpop.permute.xlu0 %3453
      %3455 = vrot.lane.b32.xlu0 %v3429, 64
      %v3456 = vpop.permute.xlu0 %3455
      %vm3457 = vcmask 523264
      %v3458 = vsel %vm3457, %v3440, %v3442
      %v3459 = vsel %vm3457, %v3442, %v3444
      %v3460 = vsel %vm3457, %v3446, %v3448
      %v3461 = vsel %vm3457, %v3448, %v3450
      %v3462 = vsel %vm3457, %v3452, %v3454
      %v3463 = vsel %vm3457, %v3454, %v3456
      %v3470 = vadd.f32 %v3403, %v3458
      %v3471 = vadd.f32 %v3404, %v3459
      %v3472 = vadd.f32 %v3405, %v3460
      %v3473 = vadd.f32 %v3406, %v3461
      %v3474 = vadd.f32 %v3407, %v3462
      %v3475 = vadd.f32 %v3408, %v3463
      %3476 = vset.pattern.permute.xlu0 69
      %3477 = vperm.xlu0 %3476, %v1268
      %v3478 = vpop.permute.xlu0 %3477
      %3480 = vset.pattern.permute.xlu0 69
      %3481 = vperm.xlu0 %3480, %v1269
      %v3482 = vpop.permute.xlu0 %3481
      %3484 = vset.pattern.permute.xlu0 69
      %3485 = vperm.xlu0 %3484, %v1270
      %v3486 = vpop.permute.xlu0 %3485
      %v3488 = vmul.f32 %v2111, %v3478
      %v3489 = vmul.f32 %v2112, %v3478
      %v3490 = vmul.f32 %v3478, 0.0
      %v3491 = vmul.f32 %v2113, %v3482
      %v3492 = vmul.f32 %v2114, %v3482
      %v3493 = vmul.f32 %v3482, 0.0
      %v3494 = vmul.f32 %v2115, %v3486
      %v3495 = vmul.f32 %v2116, %v3486
      %v3496 = vmul.f32 %v3486, 0.0
      %3506 = vrot.lane.b32.xlu0 %v3488, 63
      %v3507 = vpop.permute.xlu0 %3506
      %3508 = vrot.lane.b32.xlu0 %v3489, 63
      %v3509 = vpop.permute.xlu0 %3508
      %3510 = vrot.lane.b32.xlu0 %v3490, 63
      %v3511 = vpop.permute.xlu0 %3510
      %3512 = vrot.lane.b32.xlu0 %v3491, 63
      %v3513 = vpop.permute.xlu0 %3512
      %3514 = vrot.lane.b32.xlu0 %v3492, 63
      %v3515 = vpop.permute.xlu0 %3514
      %3516 = vrot.lane.b32.xlu0 %v3493, 63
      %v3517 = vpop.permute.xlu0 %3516
      %3518 = vrot.lane.b32.xlu0 %v3494, 63
      %v3519 = vpop.permute.xlu0 %3518
      %3520 = vrot.lane.b32.xlu0 %v3495, 63
      %v3521 = vpop.permute.xlu0 %3520
      %3522 = vrot.lane.b32.xlu0 %v3496, 63
      %v3523 = vpop.permute.xlu0 %3522
      %vm3524 = vcmask 515072
      %v3525 = vsel %vm3524, %v3507, %v3509
      %v3526 = vsel %vm3524, %v3509, %v3511
      %v3527 = vsel %vm3524, %v3513, %v3515
      %v3528 = vsel %vm3524, %v3515, %v3517
      %v3529 = vsel %vm3524, %v3519, %v3521
      %v3530 = vsel %vm3524, %v3521, %v3523
      %v3537 = vadd.f32 %v3470, %v3525
      %v3538 = vadd.f32 %v3471, %v3526
      %v3539 = vadd.f32 %v3472, %v3527
      %v3540 = vadd.f32 %v3473, %v3528
      %v3541 = vadd.f32 %v3474, %v3529
      %v3542 = vadd.f32 %v3475, %v3530
      %3543 = vset.pattern.permute.xlu0 70
      %3544 = vperm.xlu0 %3543, %v1268
      %v3545 = vpop.permute.xlu0 %3544
      %3547 = vset.pattern.permute.xlu0 70
      %3548 = vperm.xlu0 %3547, %v1269
      %v3549 = vpop.permute.xlu0 %3548
      %3551 = vset.pattern.permute.xlu0 70
      %3552 = vperm.xlu0 %3551, %v1270
      %v3553 = vpop.permute.xlu0 %3552
      %v3555 = vmul.f32 %v2111, %v3545
      %v3556 = vmul.f32 %v2112, %v3545
      %v3557 = vmul.f32 %v3545, 0.0
      %v3558 = vmul.f32 %v2113, %v3549
      %v3559 = vmul.f32 %v2114, %v3549
      %v3560 = vmul.f32 %v3549, 0.0
      %v3561 = vmul.f32 %v2115, %v3553
      %v3562 = vmul.f32 %v2116, %v3553
      %v3563 = vmul.f32 %v3553, 0.0
      %3573 = vrot.lane.b32.xlu0 %v3555, 62
      %v3574 = vpop.permute.xlu0 %3573
      %3575 = vrot.lane.b32.xlu0 %v3556, 62
      %v3576 = vpop.permute.xlu0 %3575
      %3577 = vrot.lane.b32.xlu0 %v3557, 62
      %v3578 = vpop.permute.xlu0 %3577
      %3579 = vrot.lane.b32.xlu0 %v3558, 62
      %v3580 = vpop.permute.xlu0 %3579
      %3581 = vrot.lane.b32.xlu0 %v3559, 62
      %v3582 = vpop.permute.xlu0 %3581
      %3583 = vrot.lane.b32.xlu0 %v3560, 62
      %v3584 = vpop.permute.xlu0 %3583
      %3585 = vrot.lane.b32.xlu0 %v3561, 62
      %v3586 = vpop.permute.xlu0 %3585
      %3587 = vrot.lane.b32.xlu0 %v3562, 62
      %v3588 = vpop.permute.xlu0 %3587
      %3589 = vrot.lane.b32.xlu0 %v3563, 62
      %v3590 = vpop.permute.xlu0 %3589
      %vm3591 = vcmask 506880
      %v3592 = vsel %vm3591, %v3574, %v3576
      %v3593 = vsel %vm3591, %v3576, %v3578
      %v3594 = vsel %vm3591, %v3580, %v3582
      %v3595 = vsel %vm3591, %v3582, %v3584
      %v3596 = vsel %vm3591, %v3586, %v3588
      %v3597 = vsel %vm3591, %v3588, %v3590
      %v3604 = vadd.f32 %v3537, %v3592
      %v3605 = vadd.f32 %v3538, %v3593
      %v3606 = vadd.f32 %v3539, %v3594
      %v3607 = vadd.f32 %v3540, %v3595
      %v3608 = vadd.f32 %v3541, %v3596
      %v3609 = vadd.f32 %v3542, %v3597
      %3610 = vset.pattern.permute.xlu0 71
      %3611 = vperm.xlu0 %3610, %v1268
      %v3612 = vpop.permute.xlu0 %3611
      %3614 = vset.pattern.permute.xlu0 71
      %3615 = vperm.xlu0 %3614, %v1269
      %v3616 = vpop.permute.xlu0 %3615
      %3618 = vset.pattern.permute.xlu0 71
      %3619 = vperm.xlu0 %3618, %v1270
      %v3620 = vpop.permute.xlu0 %3619
      %v3622 = vmul.f32 %v2111, %v3612
      %v3623 = vmul.f32 %v2112, %v3612
      %v3624 = vmul.f32 %v3612, 0.0
      %v3625 = vmul.f32 %v2113, %v3616
      %v3626 = vmul.f32 %v2114, %v3616
      %v3627 = vmul.f32 %v3616, 0.0
      %v3628 = vmul.f32 %v2115, %v3620
      %v3629 = vmul.f32 %v2116, %v3620
      %v3630 = vmul.f32 %v3620, 0.0
      %3640 = vrot.lane.b32.xlu0 %v3622, 61
      %v3641 = vpop.permute.xlu0 %3640
      %3642 = vrot.lane.b32.xlu0 %v3623, 61
      %v3643 = vpop.permute.xlu0 %3642
      %3644 = vrot.lane.b32.xlu0 %v3624, 61
      %v3645 = vpop.permute.xlu0 %3644
      %3646 = vrot.lane.b32.xlu0 %v3625, 61
      %v3647 = vpop.permute.xlu0 %3646
      %3648 = vrot.lane.b32.xlu0 %v3626, 61
      %v3649 = vpop.permute.xlu0 %3648
      %3650 = vrot.lane.b32.xlu0 %v3627, 61
      %v3651 = vpop.permute.xlu0 %3650
      %3652 = vrot.lane.b32.xlu0 %v3628, 61
      %v3653 = vpop.permute.xlu0 %3652
      %3654 = vrot.lane.b32.xlu0 %v3629, 61
      %v3655 = vpop.permute.xlu0 %3654
      %3656 = vrot.lane.b32.xlu0 %v3630, 61
      %v3657 = vpop.permute.xlu0 %3656
      %vm3658 = vcmask 498688
      %v3659 = vsel %vm3658, %v3641, %v3643
      %v3660 = vsel %vm3658, %v3643, %v3645
      %v3661 = vsel %vm3658, %v3647, %v3649
      %v3662 = vsel %vm3658, %v3649, %v3651
      %v3663 = vsel %vm3658, %v3653, %v3655
      %v3664 = vsel %vm3658, %v3655, %v3657
      %v3671 = vadd.f32 %v3604, %v3659
      %v3672 = vadd.f32 %v3605, %v3660
      %v3673 = vadd.f32 %v3606, %v3661
      %v3674 = vadd.f32 %v3607, %v3662
      %v3675 = vadd.f32 %v3608, %v3663
      %v3676 = vadd.f32 %v3609, %v3664
      %3677 = vset.pattern.permute.xlu0 72
      %3678 = vperm.xlu0 %3677, %v1268
      %v3679 = vpop.permute.xlu0 %3678
      %3681 = vset.pattern.permute.xlu0 72
      %3682 = vperm.xlu0 %3681, %v1269
      %v3683 = vpop.permute.xlu0 %3682
      %3685 = vset.pattern.permute.xlu0 72
      %3686 = vperm.xlu0 %3685, %v1270
      %v3687 = vpop.permute.xlu0 %3686
      %v3689 = vmul.f32 %v2111, %v3679
      %v3690 = vmul.f32 %v2112, %v3679
      %v3691 = vmul.f32 %v3679, 0.0
      %v3692 = vmul.f32 %v2113, %v3683
      %v3693 = vmul.f32 %v2114, %v3683
      %v3694 = vmul.f32 %v3683, 0.0
      %v3695 = vmul.f32 %v2115, %v3687
      %v3696 = vmul.f32 %v2116, %v3687
      %v3697 = vmul.f32 %v3687, 0.0
      %3707 = vrot.lane.b32.xlu0 %v3689, 60
      %v3708 = vpop.permute.xlu0 %3707
      %3709 = vrot.lane.b32.xlu0 %v3690, 60
      %v3710 = vpop.permute.xlu0 %3709
      %3711 = vrot.lane.b32.xlu0 %v3691, 60
      %v3712 = vpop.permute.xlu0 %3711
      %3713 = vrot.lane.b32.xlu0 %v3692, 60
      %v3714 = vpop.permute.xlu0 %3713
      %3715 = vrot.lane.b32.xlu0 %v3693, 60
      %v3716 = vpop.permute.xlu0 %3715
      %3717 = vrot.lane.b32.xlu0 %v3694, 60
      %v3718 = vpop.permute.xlu0 %3717
      %3719 = vrot.lane.b32.xlu0 %v3695, 60
      %v3720 = vpop.permute.xlu0 %3719
      %3721 = vrot.lane.b32.xlu0 %v3696, 60
      %v3722 = vpop.permute.xlu0 %3721
      %3723 = vrot.lane.b32.xlu0 %v3697, 60
      %v3724 = vpop.permute.xlu0 %3723
      %vm3725 = vcmask 490496
      %v3726 = vsel %vm3725, %v3708, %v3710
      %v3727 = vsel %vm3725, %v3710, %v3712
      %v3728 = vsel %vm3725, %v3714, %v3716
      %v3729 = vsel %vm3725, %v3716, %v3718
      %v3730 = vsel %vm3725, %v3720, %v3722
      %v3731 = vsel %vm3725, %v3722, %v3724
      %v3738 = vadd.f32 %v3671, %v3726
      %v3739 = vadd.f32 %v3672, %v3727
      %v3740 = vadd.f32 %v3673, %v3728
      %v3741 = vadd.f32 %v3674, %v3729
      %v3742 = vadd.f32 %v3675, %v3730
      %v3743 = vadd.f32 %v3676, %v3731
      %v3744 = vld [vmem:[%s14] sm:$0xff]
      %v3745 = vld [vmem:[%s14 + $0x8] sm:$0xff]
      %v3746 = vld [vmem:[%s14 + $0x10] sm:$0xff]
      %v3747 = vld [vmem:[%s15] sm:$0xff]
      %v3748 = vld [vmem:[%s15 + $0x8] sm:$0xff]
      %v3749 = vld [vmem:[%s15 + $0x10] sm:$0xff]
      %v3750 = vld [vmem:[%s16] sm:$0xff]
      %v3751 = vld [vmem:[%s16 + $0x8] sm:$0xff]
      %v3752 = vld [vmem:[%s16 + $0x10] sm:$0xff]
      %3754 = vset.pattern.permute.xlu0 0
      %3755 = vperm.xlu0 %3754, %v3744
      %v3756 = vpop.permute.xlu0 %3755
      %v3758 = vlaneseq
      %v3759 = vshrl.u32 %v3758, 7
      %v3760 = vsub.s32 0, %v3759
      %v3761 = vrot.slane %v3738, %v3760
      %v3762 = vlaneseq
      %v3763 = vshrl.u32 %v3762, 7
      %v3764 = vsub.s32 0, %v3763
      %v3765 = vrot.slane %v3739, %v3764
      %v3766 = vmul.f32 %v3756, %v3761
      %v3767 = vmul.f32 %v3756, %v3765
      %3768 = vset.pattern.permute.xlu0 1
      %3769 = vperm.xlu0 %3768, %v3744
      %v3770 = vpop.permute.xlu0 %3769
      %v3772 = vlaneseq
      %v3773 = vshrl.u32 %v3772, 7
      %v3774 = vsub.s32 1, %v3773
      %v3775 = vrot.slane %v3738, %v3774
      %v3776 = vlaneseq
      %v3777 = vshrl.u32 %v3776, 7
      %v3778 = vsub.s32 1, %v3777
      %v3779 = vrot.slane %v3739, %v3778
      %v3780 = vmul.f32 %v3770, %v3775
      %v3781 = vmul.f32 %v3770, %v3779
      %v3782 = vadd.f32 %v3766, %v3780
      %v3783 = vadd.f32 %v3767, %v3781
      %3784 = vset.pattern.permute.xlu0 2
      %3785 = vperm.xlu0 %3784, %v3744
      %v3786 = vpop.permute.xlu0 %3785
      %v3788 = vlaneseq
      %v3789 = vshrl.u32 %v3788, 7
      %v3790 = vsub.s32 2, %v3789
      %v3791 = vrot.slane %v3738, %v3790
      %v3792 = vlaneseq
      %v3793 = vshrl.u32 %v3792, 7
      %v3794 = vsub.s32 2, %v3793
      %v3795 = vrot.slane %v3739, %v3794
      %v3796 = vmul.f32 %v3786, %v3791
      %v3797 = vmul.f32 %v3786, %v3795
      %v3798 = vadd.f32 %v3782, %v3796
      %v3799 = vadd.f32 %v3783, %v3797
      %3800 = vset.pattern.permute.xlu0 3
      %3801 = vperm.xlu0 %3800, %v3744
      %v3802 = vpop.permute.xlu0 %3801
      %v3804 = vlaneseq
      %v3805 = vshrl.u32 %v3804, 7
      %v3806 = vsub.s32 3, %v3805
      %v3807 = vrot.slane %v3738, %v3806
      %v3808 = vlaneseq
      %v3809 = vshrl.u32 %v3808, 7
      %v3810 = vsub.s32 3, %v3809
      %v3811 = vrot.slane %v3739, %v3810
      %v3812 = vmul.f32 %v3802, %v3807
      %v3813 = vmul.f32 %v3802, %v3811
      %v3814 = vadd.f32 %v3798, %v3812
      %v3815 = vadd.f32 %v3799, %v3813
      %3816 = vset.pattern.permute.xlu0 4
      %3817 = vperm.xlu0 %3816, %v3744
      %v3818 = vpop.permute.xlu0 %3817
      %v3820 = vlaneseq
      %v3821 = vshrl.u32 %v3820, 7
      %v3822 = vsub.s32 4, %v3821
      %v3823 = vrot.slane %v3738, %v3822
      %v3824 = vlaneseq
      %v3825 = vshrl.u32 %v3824, 7
      %v3826 = vsub.s32 4, %v3825
      %v3827 = vrot.slane %v3739, %v3826
      %v3828 = vmul.f32 %v3818, %v3823
      %v3829 = vmul.f32 %v3818, %v3827
      %v3830 = vadd.f32 %v3814, %v3828
      %v3831 = vadd.f32 %v3815, %v3829
      %3832 = vset.pattern.permute.xlu0 5
      %3833 = vperm.xlu0 %3832, %v3744
      %v3834 = vpop.permute.xlu0 %3833
      %v3836 = vlaneseq
      %v3837 = vshrl.u32 %v3836, 7
      %v3838 = vsub.s32 5, %v3837
      %v3839 = vrot.slane %v3738, %v3838
      %v3840 = vlaneseq
      %v3841 = vshrl.u32 %v3840, 7
      %v3842 = vsub.s32 5, %v3841
      %v3843 = vrot.slane %v3739, %v3842
      %v3844 = vmul.f32 %v3834, %v3839
      %v3845 = vmul.f32 %v3834, %v3843
      %v3846 = vadd.f32 %v3830, %v3844
      %v3847 = vadd.f32 %v3831, %v3845
      %3848 = vset.pattern.permute.xlu0 6
      %3849 = vperm.xlu0 %3848, %v3744
      %v3850 = vpop.permute.xlu0 %3849
      %v3852 = vlaneseq
      %v3853 = vshrl.u32 %v3852, 7
      %v3854 = vsub.s32 6, %v3853
      %v3855 = vrot.slane %v3738, %v3854
      %v3856 = vlaneseq
      %v3857 = vshrl.u32 %v3856, 7
      %v3858 = vsub.s32 6, %v3857
      %v3859 = vrot.slane %v3739, %v3858
      %v3860 = vmul.f32 %v3850, %v3855
      %v3861 = vmul.f32 %v3850, %v3859
      %v3862 = vadd.f32 %v3846, %v3860
      %v3863 = vadd.f32 %v3847, %v3861
      %3864 = vset.pattern.permute.xlu0 7
      %3865 = vperm.xlu0 %3864, %v3744
      %v3866 = vpop.permute.xlu0 %3865
      %v3868 = vlaneseq
      %v3869 = vshrl.u32 %v3868, 7
      %v3870 = vsub.s32 7, %v3869
      %v3871 = vrot.slane %v3738, %v3870
      %v3872 = vlaneseq
      %v3873 = vshrl.u32 %v3872, 7
      %v3874 = vsub.s32 7, %v3873
      %v3875 = vrot.slane %v3739, %v3874
      %v3876 = vmul.f32 %v3866, %v3871
      %v3877 = vmul.f32 %v3866, %v3875
      %v3878 = vadd.f32 %v3862, %v3876
      %v3879 = vadd.f32 %v3863, %v3877
      %3881 = vset.pattern.permute.xlu0 0
      %3882 = vperm.xlu0 %3881, %v3747
      %v3883 = vpop.permute.xlu0 %3882
      %v3885 = vmul.f32 %v3878, %v3883
      %v3886 = vmul.f32 %v3879, %v3883
      %3888 = vset.pattern.permute.xlu0 0
      %3889 = vperm.xlu0 %3888, %v3750
      %v3890 = vpop.permute.xlu0 %3889
      %v3892 = vadd.f32 %v3885, %v3890
      %v3893 = vadd.f32 %v3886, %v3890
      %v3894 = vmax.f32 %v3892, 0.0
      %v3895 = vmax.f32 %v3893, 0.0
      %v3896 = vld [vmem:[%s17] sm:$0x3]
      %3898 = vset.pattern.permute.xlu0 0
      %3899 = vperm.xlu0 %3898, %v3896
      %v3900 = vpop.permute.xlu0 %3899
      %v3902 = vlaneseq
      %v3903 = vshrl.u32 %v3902, 7
      %v3904 = vsub.s32 0, %v3903
      %v3905 = vrot.slane %v3894, %v3904
      %v3906 = vlaneseq
      %v3907 = vshrl.u32 %v3906, 7
      %v3908 = vsub.s32 0, %v3907
      %v3909 = vrot.slane %v3895, %v3908
      %v3910 = vmul.f32 %v3900, %v3905
      %v3911 = vmul.f32 %v3900, %v3909
      %3912 = vset.pattern.permute.xlu0 1
      %3913 = vperm.xlu0 %3912, %v3896
      %v3914 = vpop.permute.xlu0 %3913
      %v3916 = vlaneseq
      %v3917 = vshrl.u32 %v3916, 7
      %v3918 = vsub.s32 1, %v3917
      %v3919 = vrot.slane %v3894, %v3918
      %v3920 = vlaneseq
      %v3921 = vshrl.u32 %v3920, 7
      %v3922 = vsub.s32 1, %v3921
      %v3923 = vrot.slane %v3895, %v3922
      %v3924 = vmul.f32 %v3914, %v3919
      %v3925 = vmul.f32 %v3914, %v3923
      %v3926 = vadd.f32 %v3910, %v3924
      %v3927 = vadd.f32 %v3911, %v3925
      %3928 = vset.pattern.permute.xlu0 2
      %3929 = vperm.xlu0 %3928, %v3896
      %v3930 = vpop.permute.xlu0 %3929
      %v3932 = vlaneseq
      %v3933 = vshrl.u32 %v3932, 7
      %v3934 = vsub.s32 2, %v3933
      %v3935 = vrot.slane %v3894, %v3934
      %v3936 = vlaneseq
      %v3937 = vshrl.u32 %v3936, 7
      %v3938 = vsub.s32 2, %v3937
      %v3939 = vrot.slane %v3895, %v3938
      %v3940 = vmul.f32 %v3930, %v3935
      %v3941 = vmul.f32 %v3930, %v3939
      %v3942 = vadd.f32 %v3926, %v3940
      %v3943 = vadd.f32 %v3927, %v3941
      %3944 = vset.pattern.permute.xlu0 3
      %3945 = vperm.xlu0 %3944, %v3896
      %v3946 = vpop.permute.xlu0 %3945
      %v3948 = vlaneseq
      %v3949 = vshrl.u32 %v3948, 7
      %v3950 = vsub.s32 3, %v3949
      %v3951 = vrot.slane %v3894, %v3950
      %v3952 = vlaneseq
      %v3953 = vshrl.u32 %v3952, 7
      %v3954 = vsub.s32 3, %v3953
      %v3955 = vrot.slane %v3895, %v3954
      %v3956 = vmul.f32 %v3946, %v3951
      %v3957 = vmul.f32 %v3946, %v3955
      %v3958 = vadd.f32 %v3942, %v3956
      %v3959 = vadd.f32 %v3943, %v3957
      %3960 = vset.pattern.permute.xlu0 4
      %3961 = vperm.xlu0 %3960, %v3896
      %v3962 = vpop.permute.xlu0 %3961
      %v3964 = vlaneseq
      %v3965 = vshrl.u32 %v3964, 7
      %v3966 = vsub.s32 4, %v3965
      %v3967 = vrot.slane %v3894, %v3966
      %v3968 = vlaneseq
      %v3969 = vshrl.u32 %v3968, 7
      %v3970 = vsub.s32 4, %v3969
      %v3971 = vrot.slane %v3895, %v3970
      %v3972 = vmul.f32 %v3962, %v3967
      %v3973 = vmul.f32 %v3962, %v3971
      %v3974 = vadd.f32 %v3958, %v3972
      %v3975 = vadd.f32 %v3959, %v3973
      %3976 = vset.pattern.permute.xlu0 5
      %3977 = vperm.xlu0 %3976, %v3896
      %v3978 = vpop.permute.xlu0 %3977
      %v3980 = vlaneseq
      %v3981 = vshrl.u32 %v3980, 7
      %v3982 = vsub.s32 5, %v3981
      %v3983 = vrot.slane %v3894, %v3982
      %v3984 = vlaneseq
      %v3985 = vshrl.u32 %v3984, 7
      %v3986 = vsub.s32 5, %v3985
      %v3987 = vrot.slane %v3895, %v3986
      %v3988 = vmul.f32 %v3978, %v3983
      %v3989 = vmul.f32 %v3978, %v3987
      %v3990 = vadd.f32 %v3974, %v3988
      %v3991 = vadd.f32 %v3975, %v3989
      %3992 = vset.pattern.permute.xlu0 6
      %3993 = vperm.xlu0 %3992, %v3896
      %v3994 = vpop.permute.xlu0 %3993
      %v3996 = vlaneseq
      %v3997 = vshrl.u32 %v3996, 7
      %v3998 = vsub.s32 6, %v3997
      %v3999 = vrot.slane %v3894, %v3998
      %v4000 = vlaneseq
      %v4001 = vshrl.u32 %v4000, 7
      %v4002 = vsub.s32 6, %v4001
      %v4003 = vrot.slane %v3895, %v4002
      %v4004 = vmul.f32 %v3994, %v3999
      %v4005 = vmul.f32 %v3994, %v4003
      %v4006 = vadd.f32 %v3990, %v4004
      %v4007 = vadd.f32 %v3991, %v4005
      %4008 = vset.pattern.permute.xlu0 7
      %4009 = vperm.xlu0 %4008, %v3896
      %v4010 = vpop.permute.xlu0 %4009
      %v4012 = vlaneseq
      %v4013 = vshrl.u32 %v4012, 7
      %v4014 = vsub.s32 7, %v4013
      %v4015 = vrot.slane %v3894, %v4014
      %v4016 = vlaneseq
      %v4017 = vshrl.u32 %v4016, 7
      %v4018 = vsub.s32 7, %v4017
      %v4019 = vrot.slane %v3895, %v4018
      %v4020 = vmul.f32 %v4010, %v4015
      %v4021 = vmul.f32 %v4010, %v4019
      %v4022 = vadd.f32 %v4006, %v4020
      %v4023 = vadd.f32 %v4007, %v4021
      %v4024 = vld [vmem:[%s18] sm:$0x3]
      %4026 = vset.pattern.permute.xlu0 0
      %4027 = vperm.xlu0 %4026, %v4024
      %v4028 = vpop.permute.xlu0 %4027
      %v4030 = vadd.f32 %v4022, %v4028
      %v4031 = vadd.f32 %v4023, %v4028
      %v4034 = vcombine.low %v4030, %v4031
      %v4036 = vunpack.c.l.s4 1966171168
      %v4037 = vunpack.c.0.s8 %v4036
      %v4038 = vlaneseq
      %v4039 = vshrl.u32 %v4038, 7
      %v4040 = vsub.s32 %v4037, %v4039
      %v4041 = vrot.slane %v4034, %v4040
      %v4043 = vunpack.c.l.s4 1966171168
      %v4044 = vunpack.c.0.s8 %v4043
      %v4045 = vlaneseq
      %v4046 = vshrl.u32 %v4045, 7
      %v4047 = vsub.s32 %v4044, %v4046
      %v4048 = vrot.slane %v4041, %v4047
      %v4050 = vlaneseq
      %vm4051 = vcmp.ge.s32.totalorder %v4050, 0
      %vm4052 = vcmp.lt.s32.totalorder %v4050, 256
      %vm4053 = vmand %vm4051, %vm4052
      %4054 = vst.msk [vmem:[%s686] sm:$0x3] %vm4053, %v4048
      %4056 = vset.pattern.permute.xlu0 0
      %4057 = vperm.xlu0 %4056, %v3745
      %v4058 = vpop.permute.xlu0 %4057
      %v4060 = vlaneseq
      %v4061 = vshrl.u32 %v4060, 7
      %v4062 = vsub.s32 0, %v4061
      %v4063 = vrot.slane %v3740, %v4062
      %v4064 = vlaneseq
      %v4065 = vshrl.u32 %v4064, 7
      %v4066 = vsub.s32 0, %v4065
      %v4067 = vrot.slane %v3741, %v4066
      %v4068 = vmul.f32 %v4058, %v4063
      %v4069 = vmul.f32 %v4058, %v4067
      %4070 = vset.pattern.permute.xlu0 1
      %4071 = vperm.xlu0 %4070, %v3745
      %v4072 = vpop.permute.xlu0 %4071
      %v4074 = vlaneseq
      %v4075 = vshrl.u32 %v4074, 7
      %v4076 = vsub.s32 1, %v4075
      %v4077 = vrot.slane %v3740, %v4076
      %v4078 = vlaneseq
      %v4079 = vshrl.u32 %v4078, 7
      %v4080 = vsub.s32 1, %v4079
      %v4081 = vrot.slane %v3741, %v4080
      %v4082 = vmul.f32 %v4072, %v4077
      %v4083 = vmul.f32 %v4072, %v4081
      %v4084 = vadd.f32 %v4068, %v4082
      %v4085 = vadd.f32 %v4069, %v4083
      %4086 = vset.pattern.permute.xlu0 2
      %4087 = vperm.xlu0 %4086, %v3745
      %v4088 = vpop.permute.xlu0 %4087
      %v4090 = vlaneseq
      %v4091 = vshrl.u32 %v4090, 7
      %v4092 = vsub.s32 2, %v4091
      %v4093 = vrot.slane %v3740, %v4092
      %v4094 = vlaneseq
      %v4095 = vshrl.u32 %v4094, 7
      %v4096 = vsub.s32 2, %v4095
      %v4097 = vrot.slane %v3741, %v4096
      %v4098 = vmul.f32 %v4088, %v4093
      %v4099 = vmul.f32 %v4088, %v4097
      %v4100 = vadd.f32 %v4084, %v4098
      %v4101 = vadd.f32 %v4085, %v4099
      %4102 = vset.pattern.permute.xlu0 3
      %4103 = vperm.xlu0 %4102, %v3745
      %v4104 = vpop.permute.xlu0 %4103
      %v4106 = vlaneseq
      %v4107 = vshrl.u32 %v4106, 7
      %v4108 = vsub.s32 3, %v4107
      %v4109 = vrot.slane %v3740, %v4108
      %v4110 = vlaneseq
      %v4111 = vshrl.u32 %v4110, 7
      %v4112 = vsub.s32 3, %v4111
      %v4113 = vrot.slane %v3741, %v4112
      %v4114 = vmul.f32 %v4104, %v4109
      %v4115 = vmul.f32 %v4104, %v4113
      %v4116 = vadd.f32 %v4100, %v4114
      %v4117 = vadd.f32 %v4101, %v4115
      %4118 = vset.pattern.permute.xlu0 4
      %4119 = vperm.xlu0 %4118, %v3745
      %v4120 = vpop.permute.xlu0 %4119
      %v4122 = vlaneseq
      %v4123 = vshrl.u32 %v4122, 7
      %v4124 = vsub.s32 4, %v4123
      %v4125 = vrot.slane %v3740, %v4124
      %v4126 = vlaneseq
      %v4127 = vshrl.u32 %v4126, 7
      %v4128 = vsub.s32 4, %v4127
      %v4129 = vrot.slane %v3741, %v4128
      %v4130 = vmul.f32 %v4120, %v4125
      %v4131 = vmul.f32 %v4120, %v4129
      %v4132 = vadd.f32 %v4116, %v4130
      %v4133 = vadd.f32 %v4117, %v4131
      %4134 = vset.pattern.permute.xlu0 5
      %4135 = vperm.xlu0 %4134, %v3745
      %v4136 = vpop.permute.xlu0 %4135
      %v4138 = vlaneseq
      %v4139 = vshrl.u32 %v4138, 7
      %v4140 = vsub.s32 5, %v4139
      %v4141 = vrot.slane %v3740, %v4140
      %v4142 = vlaneseq
      %v4143 = vshrl.u32 %v4142, 7
      %v4144 = vsub.s32 5, %v4143
      %v4145 = vrot.slane %v3741, %v4144
      %v4146 = vmul.f32 %v4136, %v4141
      %v4147 = vmul.f32 %v4136, %v4145
      %v4148 = vadd.f32 %v4132, %v4146
      %v4149 = vadd.f32 %v4133, %v4147
      %4150 = vset.pattern.permute.xlu0 6
      %4151 = vperm.xlu0 %4150, %v3745
      %v4152 = vpop.permute.xlu0 %4151
      %v4154 = vlaneseq
      %v4155 = vshrl.u32 %v4154, 7
      %v4156 = vsub.s32 6, %v4155
      %v4157 = vrot.slane %v3740, %v4156
      %v4158 = vlaneseq
      %v4159 = vshrl.u32 %v4158, 7
      %v4160 = vsub.s32 6, %v4159
      %v4161 = vrot.slane %v3741, %v4160
      %v4162 = vmul.f32 %v4152, %v4157
      %v4163 = vmul.f32 %v4152, %v4161
      %v4164 = vadd.f32 %v4148, %v4162
      %v4165 = vadd.f32 %v4149, %v4163
      %4166 = vset.pattern.permute.xlu0 7
      %4167 = vperm.xlu0 %4166, %v3745
      %v4168 = vpop.permute.xlu0 %4167
      %v4170 = vlaneseq
      %v4171 = vshrl.u32 %v4170, 7
      %v4172 = vsub.s32 7, %v4171
      %v4173 = vrot.slane %v3740, %v4172
      %v4174 = vlaneseq
      %v4175 = vshrl.u32 %v4174, 7
      %v4176 = vsub.s32 7, %v4175
      %v4177 = vrot.slane %v3741, %v4176
      %v4178 = vmul.f32 %v4168, %v4173
      %v4179 = vmul.f32 %v4168, %v4177
      %v4180 = vadd.f32 %v4164, %v4178
      %v4181 = vadd.f32 %v4165, %v4179
      %4183 = vset.pattern.permute.xlu0 0
      %4184 = vperm.xlu0 %4183, %v3748
      %v4185 = vpop.permute.xlu0 %4184
      %v4187 = vmul.f32 %v4180, %v4185
      %v4188 = vmul.f32 %v4181, %v4185
      %4190 = vset.pattern.permute.xlu0 0
      %4191 = vperm.xlu0 %4190, %v3751
      %v4192 = vpop.permute.xlu0 %4191
      %v4194 = vadd.f32 %v4187, %v4192
      %v4195 = vadd.f32 %v4188, %v4192
      %v4196 = vmax.f32 %v4194, 0.0
      %v4197 = vmax.f32 %v4195, 0.0
      %s4198 = scalar_lea.vmem %s17, 2
      %v4199 = vld [vmem:[%s4198] sm:$0x3]
      %4201 = vset.pattern.permute.xlu0 0
      %4202 = vperm.xlu0 %4201, %v4199
      %v4203 = vpop.permute.xlu0 %4202
      %v4205 = vlaneseq
      %v4206 = vshrl.u32 %v4205, 7
      %v4207 = vsub.s32 0, %v4206
      %v4208 = vrot.slane %v4196, %v4207
      %v4209 = vlaneseq
      %v4210 = vshrl.u32 %v4209, 7
      %v4211 = vsub.s32 0, %v4210
      %v4212 = vrot.slane %v4197, %v4211
      %v4213 = vmul.f32 %v4203, %v4208
      %v4214 = vmul.f32 %v4203, %v4212
      %4215 = vset.pattern.permute.xlu0 1
      %4216 = vperm.xlu0 %4215, %v4199
      %v4217 = vpop.permute.xlu0 %4216
      %v4219 = vlaneseq
      %v4220 = vshrl.u32 %v4219, 7
      %v4221 = vsub.s32 1, %v4220
      %v4222 = vrot.slane %v4196, %v4221
      %v4223 = vlaneseq
      %v4224 = vshrl.u32 %v4223, 7
      %v4225 = vsub.s32 1, %v4224
      %v4226 = vrot.slane %v4197, %v4225
      %v4227 = vmul.f32 %v4217, %v4222
      %v4228 = vmul.f32 %v4217, %v4226
      %v4229 = vadd.f32 %v4213, %v4227
      %v4230 = vadd.f32 %v4214, %v4228
      %4231 = vset.pattern.permute.xlu0 2
      %4232 = vperm.xlu0 %4231, %v4199
      %v4233 = vpop.permute.xlu0 %4232
      %v4235 = vlaneseq
      %v4236 = vshrl.u32 %v4235, 7
      %v4237 = vsub.s32 2, %v4236
      %v4238 = vrot.slane %v4196, %v4237
      %v4239 = vlaneseq
      %v4240 = vshrl.u32 %v4239, 7
      %v4241 = vsub.s32 2, %v4240
      %v4242 = vrot.slane %v4197, %v4241
      %v4243 = vmul.f32 %v4233, %v4238
      %v4244 = vmul.f32 %v4233, %v4242
      %v4245 = vadd.f32 %v4229, %v4243
      %v4246 = vadd.f32 %v4230, %v4244
      %4247 = vset.pattern.permute.xlu0 3
      %4248 = vperm.xlu0 %4247, %v4199
      %v4249 = vpop.permute.xlu0 %4248
      %v4251 = vlaneseq
      %v4252 = vshrl.u32 %v4251, 7
      %v4253 = vsub.s32 3, %v4252
      %v4254 = vrot.slane %v4196, %v4253
      %v4255 = vlaneseq
      %v4256 = vshrl.u32 %v4255, 7
      %v4257 = vsub.s32 3, %v4256
      %v4258 = vrot.slane %v4197, %v4257
      %v4259 = vmul.f32 %v4249, %v4254
      %v4260 = vmul.f32 %v4249, %v4258
      %v4261 = vadd.f32 %v4245, %v4259
      %v4262 = vadd.f32 %v4246, %v4260
      %4263 = vset.pattern.permute.xlu0 4
      %4264 = vperm.xlu0 %4263, %v4199
      %v4265 = vpop.permute.xlu0 %4264
      %v4267 = vlaneseq
      %v4268 = vshrl.u32 %v4267, 7
      %v4269 = vsub.s32 4, %v4268
      %v4270 = vrot.slane %v4196, %v4269
      %v4271 = vlaneseq
      %v4272 = vshrl.u32 %v4271, 7
      %v4273 = vsub.s32 4, %v4272
      %v4274 = vrot.slane %v4197, %v4273
      %v4275 = vmul.f32 %v4265, %v4270
      %v4276 = vmul.f32 %v4265, %v4274
      %v4277 = vadd.f32 %v4261, %v4275
      %v4278 = vadd.f32 %v4262, %v4276
      %4279 = vset.pattern.permute.xlu0 5
      %4280 = vperm.xlu0 %4279, %v4199
      %v4281 = vpop.permute.xlu0 %4280
      %v4283 = vlaneseq
      %v4284 = vshrl.u32 %v4283, 7
      %v4285 = vsub.s32 5, %v4284
      %v4286 = vrot.slane %v4196, %v4285
      %v4287 = vlaneseq
      %v4288 = vshrl.u32 %v4287, 7
      %v4289 = vsub.s32 5, %v4288
      %v4290 = vrot.slane %v4197, %v4289
      %v4291 = vmul.f32 %v4281, %v4286
      %v4292 = vmul.f32 %v4281, %v4290
      %v4293 = vadd.f32 %v4277, %v4291
      %v4294 = vadd.f32 %v4278, %v4292
      %4295 = vset.pattern.permute.xlu0 6
      %4296 = vperm.xlu0 %4295, %v4199
      %v4297 = vpop.permute.xlu0 %4296
      %v4299 = vlaneseq
      %v4300 = vshrl.u32 %v4299, 7
      %v4301 = vsub.s32 6, %v4300
      %v4302 = vrot.slane %v4196, %v4301
      %v4303 = vlaneseq
      %v4304 = vshrl.u32 %v4303, 7
      %v4305 = vsub.s32 6, %v4304
      %v4306 = vrot.slane %v4197, %v4305
      %v4307 = vmul.f32 %v4297, %v4302
      %v4308 = vmul.f32 %v4297, %v4306
      %v4309 = vadd.f32 %v4293, %v4307
      %v4310 = vadd.f32 %v4294, %v4308
      %4311 = vset.pattern.permute.xlu0 7
      %4312 = vperm.xlu0 %4311, %v4199
      %v4313 = vpop.permute.xlu0 %4312
      %v4315 = vlaneseq
      %v4316 = vshrl.u32 %v4315, 7
      %v4317 = vsub.s32 7, %v4316
      %v4318 = vrot.slane %v4196, %v4317
      %v4319 = vlaneseq
      %v4320 = vshrl.u32 %v4319, 7
      %v4321 = vsub.s32 7, %v4320
      %v4322 = vrot.slane %v4197, %v4321
      %v4323 = vmul.f32 %v4313, %v4318
      %v4324 = vmul.f32 %v4313, %v4322
      %v4325 = vadd.f32 %v4309, %v4323
      %v4326 = vadd.f32 %v4310, %v4324
      %s4327 = scalar_lea.vmem %s18, 2
      %v4328 = vld [vmem:[%s4327] sm:$0x3]
      %4330 = vset.pattern.permute.xlu0 0
      %4331 = vperm.xlu0 %4330, %v4328
      %v4332 = vpop.permute.xlu0 %4331
      %v4334 = vadd.f32 %v4325, %v4332
      %v4335 = vadd.f32 %v4326, %v4332
      %v4338 = vcombine.low %v4334, %v4335
      %v4340 = vunpack.c.l.s4 1983009808
      %v4341 = vunpack.c.0.s8 %v4340
      %v4342 = vlaneseq
      %v4343 = vshrl.u32 %v4342, 7
      %v4344 = vsub.s32 %v4341, %v4343
      %v4345 = vrot.slane %v4338, %v4344
      %4347 = vst [vmem:[%s691] sm:$0xf] %v4345
      %4349 = vset.pattern.permute.xlu0 0
      %4350 = vperm.xlu0 %4349, %v3746
      %v4351 = vpop.permute.xlu0 %4350
      %v4353 = vlaneseq
      %v4354 = vshrl.u32 %v4353, 7
      %v4355 = vsub.s32 0, %v4354
      %v4356 = vrot.slane %v3742, %v4355
      %v4357 = vlaneseq
      %v4358 = vshrl.u32 %v4357, 7
      %v4359 = vsub.s32 0, %v4358
      %v4360 = vrot.slane %v3743, %v4359
      %v4361 = vmul.f32 %v4351, %v4356
      %v4362 = vmul.f32 %v4351, %v4360
      %4363 = vset.pattern.permute.xlu0 1
      %4364 = vperm.xlu0 %4363, %v3746
      %v4365 = vpop.permute.xlu0 %4364
      %v4367 = vlaneseq
      %v4368 = vshrl.u32 %v4367, 7
      %v4369 = vsub.s32 1, %v4368
      %v4370 = vrot.slane %v3742, %v4369
      %v4371 = vlaneseq
      %v4372 = vshrl.u32 %v4371, 7
      %v4373 = vsub.s32 1, %v4372
      %v4374 = vrot.slane %v3743, %v4373
      %v4375 = vmul.f32 %v4365, %v4370
      %v4376 = vmul.f32 %v4365, %v4374
      %v4377 = vadd.f32 %v4361, %v4375
      %v4378 = vadd.f32 %v4362, %v4376
      %4379 = vset.pattern.permute.xlu0 2
      %4380 = vperm.xlu0 %4379, %v3746
      %v4381 = vpop.permute.xlu0 %4380
      %v4383 = vlaneseq
      %v4384 = vshrl.u32 %v4383, 7
      %v4385 = vsub.s32 2, %v4384
      %v4386 = vrot.slane %v3742, %v4385
      %v4387 = vlaneseq
      %v4388 = vshrl.u32 %v4387, 7
      %v4389 = vsub.s32 2, %v4388
      %v4390 = vrot.slane %v3743, %v4389
      %v4391 = vmul.f32 %v4381, %v4386
      %v4392 = vmul.f32 %v4381, %v4390
      %v4393 = vadd.f32 %v4377, %v4391
      %v4394 = vadd.f32 %v4378, %v4392
      %4395 = vset.pattern.permute.xlu0 3
      %4396 = vperm.xlu0 %4395, %v3746
      %v4397 = vpop.permute.xlu0 %4396
      %v4399 = vlaneseq
      %v4400 = vshrl.u32 %v4399, 7
      %v4401 = vsub.s32 3, %v4400
      %v4402 = vrot.slane %v3742, %v4401
      %v4403 = vlaneseq
      %v4404 = vshrl.u32 %v4403, 7
      %v4405 = vsub.s32 3, %v4404
      %v4406 = vrot.slane %v3743, %v4405
      %v4407 = vmul.f32 %v4397, %v4402
      %v4408 = vmul.f32 %v4397, %v4406
      %v4409 = vadd.f32 %v4393, %v4407
      %v4410 = vadd.f32 %v4394, %v4408
      %4411 = vset.pattern.permute.xlu0 4
      %4412 = vperm.xlu0 %4411, %v3746
      %v4413 = vpop.permute.xlu0 %4412
      %v4415 = vlaneseq
      %v4416 = vshrl.u32 %v4415, 7
      %v4417 = vsub.s32 4, %v4416
      %v4418 = vrot.slane %v3742, %v4417
      %v4419 = vlaneseq
      %v4420 = vshrl.u32 %v4419, 7
      %v4421 = vsub.s32 4, %v4420
      %v4422 = vrot.slane %v3743, %v4421
      %v4423 = vmul.f32 %v4413, %v4418
      %v4424 = vmul.f32 %v4413, %v4422
      %v4425 = vadd.f32 %v4409, %v4423
      %v4426 = vadd.f32 %v4410, %v4424
      %4427 = vset.pattern.permute.xlu0 5
      %4428 = vperm.xlu0 %4427, %v3746
      %v4429 = vpop.permute.xlu0 %4428
      %v4431 = vlaneseq
      %v4432 = vshrl.u32 %v4431, 7
      %v4433 = vsub.s32 5, %v4432
      %v4434 = vrot.slane %v3742, %v4433
      %v4435 = vlaneseq
      %v4436 = vshrl.u32 %v4435, 7
      %v4437 = vsub.s32 5, %v4436
      %v4438 = vrot.slane %v3743, %v4437
      %v4439 = vmul.f32 %v4429, %v4434
      %v4440 = vmul.f32 %v4429, %v4438
      %v4441 = vadd.f32 %v4425, %v4439
      %v4442 = vadd.f32 %v4426, %v4440
      %4443 = vset.pattern.permute.xlu0 6
      %4444 = vperm.xlu0 %4443, %v3746
      %v4445 = vpop.permute.xlu0 %4444
      %v4447 = vlaneseq
      %v4448 = vshrl.u32 %v4447, 7
      %v4449 = vsub.s32 6, %v4448
      %v4450 = vrot.slane %v3742, %v4449
      %v4451 = vlaneseq
      %v4452 = vshrl.u32 %v4451, 7
      %v4453 = vsub.s32 6, %v4452
      %v4454 = vrot.slane %v3743, %v4453
      %v4455 = vmul.f32 %v4445, %v4450
      %v4456 = vmul.f32 %v4445, %v4454
      %v4457 = vadd.f32 %v4441, %v4455
      %v4458 = vadd.f32 %v4442, %v4456
      %4459 = vset.pattern.permute.xlu0 7
      %4460 = vperm.xlu0 %4459, %v3746
      %v4461 = vpop.permute.xlu0 %4460
      %v4463 = vlaneseq
      %v4464 = vshrl.u32 %v4463, 7
      %v4465 = vsub.s32 7, %v4464
      %v4466 = vrot.slane %v3742, %v4465
      %v4467 = vlaneseq
      %v4468 = vshrl.u32 %v4467, 7
      %v4469 = vsub.s32 7, %v4468
      %v4470 = vrot.slane %v3743, %v4469
      %v4471 = vmul.f32 %v4461, %v4466
      %v4472 = vmul.f32 %v4461, %v4470
      %v4473 = vadd.f32 %v4457, %v4471
      %v4474 = vadd.f32 %v4458, %v4472
      %4476 = vset.pattern.permute.xlu0 0
      %4477 = vperm.xlu0 %4476, %v3749
      %v4478 = vpop.permute.xlu0 %4477
      %v4480 = vmul.f32 %v4473, %v4478
      %v4481 = vmul.f32 %v4474, %v4478
      %4483 = vset.pattern.permute.xlu0 0
      %4484 = vperm.xlu0 %4483, %v3752
      %v4485 = vpop.permute.xlu0 %4484
      %v4487 = vadd.f32 %v4480, %v4485
      %v4488 = vadd.f32 %v4481, %v4485
      %v4489 = vmax.f32 %v4487, 0.0
      %v4490 = vmax.f32 %v4488, 0.0
      %s4491 = scalar_lea.vmem %s17, 4
      %v4492 = vld [vmem:[%s4491] sm:$0x3]
      %4494 = vset.pattern.permute.xlu0 0
      %4495 = vperm.xlu0 %4494, %v4492
      %v4496 = vpop.permute.xlu0 %4495
      %v4498 = vlaneseq
      %v4499 = vshrl.u32 %v4498, 7
      %v4500 = vsub.s32 0, %v4499
      %v4501 = vrot.slane %v4489, %v4500
      %v4502 = vlaneseq
      %v4503 = vshrl.u32 %v4502, 7
      %v4504 = vsub.s32 0, %v4503
      %v4505 = vrot.slane %v4490, %v4504
      %v4506 = vmul.f32 %v4496, %v4501
      %v4507 = vmul.f32 %v4496, %v4505
      %4508 = vset.pattern.permute.xlu0 1
      %4509 = vperm.xlu0 %4508, %v4492
      %v4510 = vpop.permute.xlu0 %4509
      %v4512 = vlaneseq
      %v4513 = vshrl.u32 %v4512, 7
      %v4514 = vsub.s32 1, %v4513
      %v4515 = vrot.slane %v4489, %v4514
      %v4516 = vlaneseq
      %v4517 = vshrl.u32 %v4516, 7
      %v4518 = vsub.s32 1, %v4517
      %v4519 = vrot.slane %v4490, %v4518
      %v4520 = vmul.f32 %v4510, %v4515
      %v4521 = vmul.f32 %v4510, %v4519
      %v4522 = vadd.f32 %v4506, %v4520
      %v4523 = vadd.f32 %v4507, %v4521
      %4524 = vset.pattern.permute.xlu0 2
      %4525 = vperm.xlu0 %4524, %v4492
      %v4526 = vpop.permute.xlu0 %4525
      %v4528 = vlaneseq
      %v4529 = vshrl.u32 %v4528, 7
      %v4530 = vsub.s32 2, %v4529
      %v4531 = vrot.slane %v4489, %v4530
      %v4532 = vlaneseq
      %v4533 = vshrl.u32 %v4532, 7
      %v4534 = vsub.s32 2, %v4533
      %v4535 = vrot.slane %v4490, %v4534
      %v4536 = vmul.f32 %v4526, %v4531
      %v4537 = vmul.f32 %v4526, %v4535
      %v4538 = vadd.f32 %v4522, %v4536
      %v4539 = vadd.f32 %v4523, %v4537
      %4540 = vset.pattern.permute.xlu0 3
      %4541 = vperm.xlu0 %4540, %v4492
      %v4542 = vpop.permute.xlu0 %4541
      %v4544 = vlaneseq
      %v4545 = vshrl.u32 %v4544, 7
      %v4546 = vsub.s32 3, %v4545
      %v4547 = vrot.slane %v4489, %v4546
      %v4548 = vlaneseq
      %v4549 = vshrl.u32 %v4548, 7
      %v4550 = vsub.s32 3, %v4549
      %v4551 = vrot.slane %v4490, %v4550
      %v4552 = vmul.f32 %v4542, %v4547
      %v4553 = vmul.f32 %v4542, %v4551
      %v4554 = vadd.f32 %v4538, %v4552
      %v4555 = vadd.f32 %v4539, %v4553
      %4556 = vset.pattern.permute.xlu0 4
      %4557 = vperm.xlu0 %4556, %v4492
      %v4558 = vpop.permute.xlu0 %4557
      %v4560 = vlaneseq
      %v4561 = vshrl.u32 %v4560, 7
      %v4562 = vsub.s32 4, %v4561
      %v4563 = vrot.slane %v4489, %v4562
      %v4564 = vlaneseq
      %v4565 = vshrl.u32 %v4564, 7
      %v4566 = vsub.s32 4, %v4565
      %v4567 = vrot.slane %v4490, %v4566
      %v4568 = vmul.f32 %v4558, %v4563
      %v4569 = vmul.f32 %v4558, %v4567
      %v4570 = vadd.f32 %v4554, %v4568
      %v4571 = vadd.f32 %v4555, %v4569
      %4572 = vset.pattern.permute.xlu0 5
      %4573 = vperm.xlu0 %4572, %v4492
      %v4574 = vpop.permute.xlu0 %4573
      %v4576 = vlaneseq
      %v4577 = vshrl.u32 %v4576, 7
      %v4578 = vsub.s32 5, %v4577
      %v4579 = vrot.slane %v4489, %v4578
      %v4580 = vlaneseq
      %v4581 = vshrl.u32 %v4580, 7
      %v4582 = vsub.s32 5, %v4581
      %v4583 = vrot.slane %v4490, %v4582
      %v4584 = vmul.f32 %v4574, %v4579
      %v4585 = vmul.f32 %v4574, %v4583
      %v4586 = vadd.f32 %v4570, %v4584
      %v4587 = vadd.f32 %v4571, %v4585
      %4588 = vset.pattern.permute.xlu0 6
      %4589 = vperm.xlu0 %4588, %v4492
      %v4590 = vpop.permute.xlu0 %4589
      %v4592 = vlaneseq
      %v4593 = vshrl.u32 %v4592, 7
      %v4594 = vsub.s32 6, %v4593
      %v4595 = vrot.slane %v4489, %v4594
      %v4596 = vlaneseq
      %v4597 = vshrl.u32 %v4596, 7
      %v4598 = vsub.s32 6, %v4597
      %v4599 = vrot.slane %v4490, %v4598
      %v4600 = vmul.f32 %v4590, %v4595
      %v4601 = vmul.f32 %v4590, %v4599
      %v4602 = vadd.f32 %v4586, %v4600
      %v4603 = vadd.f32 %v4587, %v4601
      %4604 = vset.pattern.permute.xlu0 7
      %4605 = vperm.xlu0 %4604, %v4492
      %v4606 = vpop.permute.xlu0 %4605
      %v4608 = vlaneseq
      %v4609 = vshrl.u32 %v4608, 7
      %v4610 = vsub.s32 7, %v4609
      %v4611 = vrot.slane %v4489, %v4610
      %v4612 = vlaneseq
      %v4613 = vshrl.u32 %v4612, 7
      %v4614 = vsub.s32 7, %v4613
      %v4615 = vrot.slane %v4490, %v4614
      %v4616 = vmul.f32 %v4606, %v4611
      %v4617 = vmul.f32 %v4606, %v4615
      %v4618 = vadd.f32 %v4602, %v4616
      %v4619 = vadd.f32 %v4603, %v4617
      %s4620 = scalar_lea.vmem %s18, 4
      %v4621 = vld [vmem:[%s4620] sm:$0x3]
      %4623 = vset.pattern.permute.xlu0 0
      %4624 = vperm.xlu0 %4623, %v4621
      %v4625 = vpop.permute.xlu0 %4624
      %v4627 = vadd.f32 %v4618, %v4625
      %v4628 = vadd.f32 %v4619, %v4625
      %v4631 = vcombine.low %v4627, %v4628
      %v4633 = vunpack.c.l.s4 1983009808
      %v4634 = vunpack.c.0.s8 %v4633
      %v4635 = vlaneseq
      %v4636 = vshrl.u32 %v4635, 7
      %v4637 = vsub.s32 %v4634, %v4636
      %v4638 = vrot.slane %v4631, %v4637
      %4640 = vst [vmem:[%s696] sm:$0xf] %v4638
      %p4641 = scmp.lt.s32.totalorder %s33, 1
      %s4642 = scalar_select %p4641, %s33, 1
      %s4643 = smul.addr %s4642, 2
      %s4644 = scalar_lea.vmem %s19, %s4643
      %p4645 = scmp.lt.s32.totalorder %s33, 1
      %s4646 = scalar_select %p4645, %s33, 1
      %s4647 = smul.addr %s4646, 2
      %s4648 = smul.addr %s4647, 2
      %s4649 = scalar_lea.vmem %s20, %s4648
      %p4650 = scmp.lt.s32.totalorder %s33, 1
      %s4651 = scalar_select %p4650, %s33, 1
      %s4652 = smul.addr %s4651, 2
      %s4653 = smul.addr %s4652, 2
      %s4654 = scalar_lea.vmem %s21, %s4653
      // Predicated region
      $region97: #{depthwise_afpn_forward.1} parent=95 // pred_check
        %p4655 = pneg %p460
      $region98: #{depthwise_afpn_forward.1} parent=95 // pred_check_branch
        %4657 = sbr.rel (%p4655) target = $region100
      $region99: #{depthwise_afpn_forward.1} parent=95 // pred_region
        _
      $region100: #{depthwise_afpn_forward.1} parent=95 // pred_fallthru
        _
      // Predicated region
      $region101: #{depthwise_afpn_forward.1} parent=95 // pred_check
        %p4658 = pneg %p486
      $region102: #{depthwise_afpn_forward.1} parent=95 // pred_check_branch
        %4660 = sbr.rel (%p4658) target = $region104
      $region103: #{depthwise_afpn_forward.1} parent=95 // pred_region
        _
      $region104: #{depthwise_afpn_forward.1} parent=95 // pred_fallthru
        _
      // Predicated region
      $region105: #{depthwise_afpn_forward.1} parent=95 // pred_check
        %p4661 = pneg %p512
      $region106: #{depthwise_afpn_forward.1} parent=95 // pred_check_branch
        %4663 = sbr.rel (%p4661) target = $region108
      $region107: #{depthwise_afpn_forward.1} parent=95 // pred_region
        _
      $region108: #{depthwise_afpn_forward.1} parent=95 // pred_fallthru
        _
    $region96: #{depthwise_afpn_forward.1} parent=5 // pred_fallthru
      _
    %p4664 = scmp.le.s32.totalorder 2, %s28
    // Predicated region
    $region109: #{depthwise_afpn_forward.1} parent=5 // pred_check
      %p4665 = pneg %p4664
    $region110: #{depthwise_afpn_forward.1} parent=5 // pred_check_branch
      %4667 = sbr.rel (%p4665) target = $region112
    $region111: #{depthwise_afpn_forward.1} parent=5 // pred_region
      %s4668 = ssub.s32 %s28, 2
      // Predicated region
      $region113: #{depthwise_afpn_forward.1} parent=111 // pred_check
        %p4669 = pneg %p466
      $region114: #{depthwise_afpn_forward.1} parent=111 // pred_check_branch
        %4671 = sbr.rel (%p4669) target = $region116
      $region115: #{depthwise_afpn_forward.1} parent=111 // pred_region
        %p4672 = scmp.lt.s32.totalorder %s34, 1
        %s4673 = scalar_select %p4672, %s34, 1
        %s4674 = smul.addr %s4673, 2
        %s4675 = scalar_lea.vmem %s19, %s4674
      $region116: #{depthwise_afpn_forward.1} parent=111 // pred_fallthru
        _
      // Predicated region
      $region117: #{depthwise_afpn_forward.1} parent=111 // pred_check
        %p4676 = pneg %p492
      $region118: #{depthwise_afpn_forward.1} parent=111 // pred_check_branch
        %4678 = sbr.rel (%p4676) target = $region120
      $region119: #{depthwise_afpn_forward.1} parent=111 // pred_region
        %p4679 = scmp.lt.s32.totalorder %s34, 1
        %s4680 = scalar_select %p4679, %s34, 1
        %s4681 = smul.addr %s4680, 2
        %s4682 = smul.addr %s4681, 2
        %s4683 = scalar_lea.vmem %s20, %s4682
      $region120: #{depthwise_afpn_forward.1} parent=111 // pred_fallthru
        _
      // Predicated region
      $region121: #{depthwise_afpn_forward.1} parent=111 // pred_check
        %p4684 = pneg %p518
      $region122: #{depthwise_afpn_forward.1} parent=111 // pred_check_branch
        %4686 = sbr.rel (%p4684) target = $region124
      $region123: #{depthwise_afpn_forward.1} parent=111 // pred_region
        %p4687 = scmp.lt.s32.totalorder %s34, 1
        %s4688 = scalar_select %p4687, %s34, 1
        %s4689 = smul.addr %s4688, 2
        %s4690 = smul.addr %s4689, 2
        %s4691 = scalar_lea.vmem %s21, %s4690
      $region124: #{depthwise_afpn_forward.1} parent=111 // pred_fallthru
        _
    $region112: #{depthwise_afpn_forward.1} parent=5 // pred_fallthru
      _
  $region6: #{depthwise_afpn_forward.1} parent=0 // loop_footer
    %s32 = sadd.s32 1, %s28
  $region7: #{depthwise_afpn_forward.1} parent=0 // loop_footer_branch
    %27 = sbr.rel target = $region3
  $region8: #{depthwise_afpn_forward.1} parent=0 // loop_exit
    _

</llo_original>
